<compile_context>
chip_gen: v7x
topology: tpu7x:2x2x1
jax: 0.10.0
libtpu: 0.0.40
codegen_flags: <defaults>
</compile_context>

<pallas_src>
import jax
import jax.numpy as jnp
import numpy as np
from jax.experimental import pallas as pl
from jax.experimental.pallas import tpu as pltpu


def _round_up(x, m):
    return (x + m - 1) // m * m


def _choose_tile(n, tile_n):
    """Pick a lane-dense row tile; prefer an even number of >=2 grid steps so a
    v7x megacore (parallel grid axis) keeps both TensorCores busy."""
    align = 256
    n_pad = _round_up(max(int(n), 1), align)
    tile = min(_round_up(int(tile_n), align), n_pad)
    steps = -(-n_pad // tile)
    if steps == 1 and n_pad >= 2 * align:
        steps = 2
    elif steps > 1 and steps % 2 == 1:
        steps += 1
    tile = _round_up(-(-n_pad // steps), align)
    return tile, steps * tile


# ----------------------------- Pallas kernel --------------------------------


def _make_kernel(*, d_in, H, Hf, Hh, F, L_fused, L_tail, tail_is_ic,
                 tail_has_bias, full_mode, off_tm, off_fused, off_tail,
                 off_last, out_dtype):
    """Fused feature-major SIREN kernel.

    Ref order: coords block, wx, [wh_fused], [wh_tail], wl, b_all, out block.
    omega_0 is already folded into all weights/biases (layer == sin(W'x + b')).
    """
    prec = jax.lax.Precision.HIGHEST  # fp32 contraction; bf16-1x fails 2e-3 tol.

    def dot(a, b):
        return jnp.dot(a, b, preferred_element_type=jnp.float32, precision=prec)

    def kernel(c_ref, *refs):
        out_ref = refs[-1]
        it = iter(refs[:-1])
        wx = next(it)[...]                                   # (Hf, d_in)
        whf_ref = next(it) if L_fused > 0 else None          # (L_fused, Hh, Hh)
        wht_ref = next(it) if L_tail > 0 else None           # (L_tail, H, H)
        wl = next(it)[...]                                   # (F, Hh)
        b_ref = next(it)                                     # (nb, 1) column

        # ---- first SineLayer(s): K = d_in contraction as VPU broadcast FMAs --
        pre = wx[:, 0:1] * c_ref[0:1, :]                     # (Hf, tile)
        for j in range(1, d_in):
            pre = pre + wx[:, j:j + 1] * c_ref[j:j + 1, :]
        z = jnp.sin(pre + b_ref[0:Hf, :])                    # (Hf, tile)

        if full_mode:
            # temporal head (K=1) -> VPU broadcast multiply; gate the spatial half.
            xt = c_ref[d_in:d_in + 1, :]                     # (1, tile)
            ht = jnp.sin(b_ref[off_tm:off_tm + H, :] * xt)   # (H, tile)
            z = jnp.concatenate([z[:H, :], z[H:, :] * ht], axis=0)   # (2H, tile)

        # ---- fused hidden stack (block-diagonal ic/op layers in full mode) ---
        for li in range(L_fused):
            bb = b_ref[off_fused + li * Hh:off_fused + (li + 1) * Hh, :]
            z = jnp.sin(dot(whf_ref[li], z) + bb)

        # ---- extra layers when one branch is deeper than the other -----------
        if L_tail > 0:
            top, bot = z[:H, :], z[H:, :]
            t = top if tail_is_ic else bot
            keep = bot if tail_is_ic else top
            for li in range(L_tail):
                p = dot(wht_ref[li], t)
                if tail_has_bias:
                    p = p + b_ref[off_tail + li * H:off_tail + (li + 1) * H, :]
                t = jnp.sin(p)
            # branch sum on the VPU; wl[:, :H] == last_w (first copy)
            out = dot(wl[:, :H], t + keep)
        else:
            # full mode: wl = [last_w | last_w] absorbs the branch sum
            out = dot(wl, z)

        out_ref[...] = (out + b_ref[off_last:off_last + F, :]).astype(out_dtype)

    return kernel


# ----------------------------- wrapper ---------------------------------------


def res_op_hidden_forward(coords, params, *, train_init=True,
                          first_omega=30.0, hidden_omega=30.0, tile_n=4096):
    """Pallas implementation of ResOpHidden.forward. Returns (output, coords)."""
    in_features = coords.shape[-1]
    d_in = in_features - 1
    lead = coords.shape[:-1]

    x = coords.reshape(-1, in_features).astype(jnp.float32)
    n = x.shape[0]
    xT = x.T                                    # feature-major: rows on lanes

    tile, n_pad = _choose_tile(n, tile_n)
    if n_pad != n:
        xT = jnp.pad(xT, ((0, 0), (0, n_pad - n)))

    full_mode = not train_init
    fo = jnp.float32(first_omega)
    ho = jnp.float32(hidden_omega)

    ic_w = list(params["ic_w"])                 # [(H, d_in)] + [(H, H)] * (Lic-1)
    ic_b = list(params["ic_b"])
    H = ic_w[0].shape[0]
    F = params["last_w"].shape[0]
    Lic_h = len(ic_w) - 1
    op_w = list(params["op_w"])
    Lop_h = len(op_w)

    # ---- fold omega into weights / biases (wrapper-side, effectively free) ---
    ic_w0, ic_b0 = fo * ic_w[0], fo * ic_b[0]
    ic_wh = [ho * w for w in ic_w[1:]]
    ic_bh = [ho * b for b in ic_b[1:]]

    if full_mode:
        Hf = Hh = 2 * H
        L_fused = min(Lic_h, Lop_h)
        L_tail = max(Lic_h, Lop_h) - L_fused
        tail_is_ic = Lic_h > Lop_h
        sp_w, sp_b = fo * params["sp_w"], fo * params["sp_b"]
        tm_w = (fo * params["tm_w"]).reshape(H)
        op_wh = [ho * w for w in op_w]
        wx = jnp.concatenate([ic_w0, sp_w], axis=0)              # (2H, d_in)
        b_first = jnp.concatenate([ic_b0, sp_b], axis=0)         # (2H,)
        wl = jnp.concatenate([params["last_w"]] * 2, axis=1)     # (F, 2H)
    else:
        Hf = Hh = H
        L_fused, L_tail, tail_is_ic = Lic_h, 0, False
        wx, b_first, wl = ic_w0, ic_b0, params["last_w"]
    tail_has_bias = full_mode and L_tail > 0 and tail_is_ic

    # ---- stacked hidden weights (block-diagonal ic/op fusion in full mode) ---
    zHH = jnp.zeros((H, H), jnp.float32)
    wh_fused, bh_fused = None, []
    if L_fused:
        blks = []
        for li in range(L_fused):
            if full_mode:
                blks.append(jnp.concatenate(
                    [jnp.concatenate([ic_wh[li], zHH], axis=1),
                     jnp.concatenate([zHH, op_wh[li]], axis=1)], axis=0))
                bh_fused.append(jnp.concatenate(
                    [ic_bh[li], jnp.zeros((H,), jnp.float32)]))  # op half: no bias
            else:
                blks.append(ic_wh[li])
                bh_fused.append(ic_bh[li])
        wh_fused = jnp.stack(blks)                               # (L_fused, Hh, Hh)
    wh_tail, bh_tail = None, []
    if L_tail:
        if tail_is_ic:
            wh_tail = jnp.stack(ic_wh[L_fused:])                 # (L_tail, H, H)
            bh_tail = ic_bh[L_fused:]
        else:
            wh_tail = jnp.stack(op_wh[L_fused:])                 # bias-free

    # ---- single bias / temporal-weight column stream -------------------------
    pieces = [b_first]
    off_tm = Hf
    if full_mode:
        pieces.append(tm_w)
    off_fused = sum(int(p.shape[0]) for p in pieces)
    pieces += bh_fused
    off_tail = off_fused + L_fused * Hh
    pieces += bh_tail
    off_last = off_tail + len(bh_tail) * H
    pieces.append(params["last_b"].reshape(F))
    b_all = jnp.concatenate(pieces).reshape(-1, 1)

    flat = [wx]
    if L_fused:
        flat.append(wh_fused)
    if L_tail:
        flat.append(wh_tail)
    flat += [wl, b_all]

    def const_spec(p):
        nd = p.ndim
        return pl.BlockSpec(p.shape, lambda i, _nd=nd: (0,) * _nd)

    in_specs = [pl.BlockSpec((in_features, tile), lambda i: (0, i))]
    in_specs += [const_spec(p) for p in flat]
    out_spec = pl.BlockSpec((F, tile), lambda i: (0, i))   # lane-dense output

    kernel = _make_kernel(
        d_in=d_in, H=H, Hf=Hf, Hh=Hh, F=F, L_fused=L_fused, L_tail=L_tail,
        tail_is_ic=tail_is_ic, tail_has_bias=tail_has_bias, full_mode=full_mode,
        off_tm=off_tm, off_fused=off_fused, off_tail=off_tail,
        off_last=off_last, out_dtype=jnp.float32)

    # advisory cost estimate (scheduling hint for the surrounding XLA ops)
    mm_flops = (2 * Hf * d_in + 2 * Hh * Hh * L_fused
                + 2 * H * H * L_tail + 2 * F * Hh)
    sins = Hf + (H if full_mode else 0) + Hh * L_fused + H * L_tail
    param_bytes = 4 * sum(int(np.prod(p.shape)) for p in flat)
    cost = pl.CostEstimate(
        flops=int(n_pad * mm_flops),
        transcendentals=int(n_pad * sins),
        bytes_accessed=int(4 * n_pad * (in_features + F) + param_bytes))

    out = pl.pallas_call(
        kernel,
        out_shape=jax.ShapeDtypeStruct((F, n_pad), jnp.float32),
        grid_spec=pltpu.PrefetchScalarGridSpec(
            num_scalar_prefetch=0,
            grid=(n_pad // tile,),
            in_specs=in_specs,
            out_specs=out_spec,
        ),
        compiler_params=pltpu.CompilerParams(
            dimension_semantics=("parallel",)),
        cost_estimate=cost,
    )(xT, *flat)

    out = out[:, :n].T.reshape(*lead, F)
    # TODO(synk): the .requires_grad_(True)/autograd plumbing in forward() has no
    # inference-time effect and is not represented in the kernel.
    return out, coords


# ----------------------------- parameter init --------------------------------


def init_params(key, in_features, hidden_features, ic_layers, op_layers,
                out_features, first_omega=30.0, hidden_omega=30.0):
    """Re-implementation of the module's __init__ weight init (torch layout)."""
    def uni(k, shape, lo, hi):
        return jax.random.uniform(k, shape, jnp.float32, lo, hi)

    keys = iter(jax.random.split(key, 64))
    d_in = in_features - 1
    H = hidden_features
    w_rng = float(np.sqrt(6.0 / H) / hidden_omega)

    ic_w, ic_b = [], []
    ic_w.append(uni(next(keys), (H, d_in), -1.0 / d_in, 1.0 / d_in))
    ic_b.append(uni(next(keys), (H,), -1.0 / np.sqrt(d_in), 1.0 / np.sqrt(d_in)))
    for _ in range(ic_layers - 1):
        ic_w.append(uni(next(keys), (H, H), -w_rng, w_rng))
        ic_b.append(uni(next(keys), (H,), -1.0 / np.sqrt(H), 1.0 / np.sqrt(H)))

    sp_w = uni(next(keys), (H, d_in), -1.0 / d_in, 1.0 / d_in)
    sp_b = uni(next(keys), (H,), -1.0 / np.sqrt(d_in), 1.0 / np.sqrt(d_in))
    tm_w = uni(next(keys), (H, 1), -1.0, 1.0)     # is_first, in=1, bias=False

    op_w = [uni(next(keys), (H, H), -w_rng, w_rng) for _ in range(op_layers - 1)]

    last_w = uni(next(keys), (out_features, H), -w_rng, w_rng)
    last_b = uni(next(keys), (out_features,), -1.0 / np.sqrt(H), 1.0 / np.sqrt(H))

    return dict(ic_w=ic_w, ic_b=ic_b, sp_w=sp_w, sp_b=sp_b, tm_w=tm_w,
                op_w=op_w, last_w=last_w, last_b=last_b)


# ----------------------------- pure-JAX reference -----------------------------


def ref_forward(coords, p, *, train_init=True, first_omega=30.0, hidden_omega=30.0):
    x = coords.reshape(-1, coords.shape[-1]).astype(jnp.float32)
    xs, xt = x[:, :-1], x[:, -1:]
    prec = jax.lax.Precision.HIGHEST
    h = jnp.sin(first_omega * (jnp.dot(xs, p["ic_w"][0].T, precision=prec)
                               + p["ic_b"][0]))
    for w, b in zip(p["ic_w"][1:], p["ic_b"][1:]):
        h = jnp.sin(hidden_omega * (jnp.dot(h, w.T, precision=prec) + b))
    if not train_init:
        hs = jnp.sin(first_omega * (jnp.dot(xs, p["sp_w"].T, precision=prec)
                                    + p["sp_b"]))
        ht = jnp.sin(first_omega * jnp.dot(xt, p["tm_w"].T, precision=prec))
        h2 = hs * ht
        for w in p["op_w"]:
            h2 = jnp.sin(hidden_omega * jnp.dot(h2, w.T, precision=prec))
        h = h + h2
    out = jnp.dot(h, p["last_w"].T, precision=prec) + p["last_b"]
    return out.reshape(*coords.shape[:-1], -1)


# ----------------------------- main -------------------------------------------


if __name__ == "__main__":
    IN_FEATURES = 3          # (x, y, t)
    HIDDEN = 32
    OUT_FEATURES = 1
    FIRST_OMEGA = 30.0
    HIDDEN_OMEGA = 30.0

    key = jax.random.PRNGKey(0)
    k0, k1, k2, kc = jax.random.split(key, 4)

    # coords in [-1, 1], shape (batch=2, points=200, 3) -> N=400 rows
    # (not a tile multiple: exercises padding and a 2-step parallel grid).
    coords = jax.random.uniform(kc, (2, 200, IN_FEATURES), jnp.float32, -1.0, 1.0)

    def check(params, train_init, tag):
        out, coords_out = res_op_hidden_forward(
            coords, params, train_init=train_init,
            first_omega=FIRST_OMEGA, hidden_omega=HIDDEN_OMEGA)
        out = jax.block_until_ready(out)
        ref = ref_forward(coords, params, train_init=train_init,
                          first_omega=FIRST_OMEGA, hidden_omega=HIDDEN_OMEGA)
        np.testing.assert_allclose(np.asarray(out), np.asarray(ref),
                                   rtol=2e-3, atol=2e-3, err_msg=tag)
        assert coords_out.shape == coords.shape
        assert out.shape == (*coords.shape[:-1], OUT_FEATURES)

    # equal ic/op depth (common case): fully fused block-diagonal path
    p_eq = init_params(k0, IN_FEATURES, HIDDEN, 3, 3, OUT_FEATURES,
                       FIRST_OMEGA, HIDDEN_OMEGA)
    check(p_eq, True, "train_init (ic branch only)")
    check(p_eq, False, "full_train, equal branch depth")

    # unequal branch depths: exercise the per-branch tail path
    p_ic_deep = init_params(k1, IN_FEATURES, HIDDEN, 4, 2, OUT_FEATURES,
                            FIRST_OMEGA, HIDDEN_OMEGA)
    check(p_ic_deep, False, "full_train, ic branch deeper")

    p_op_deep = init_params(k2, IN_FEATURES, HIDDEN, 2, 4, OUT_FEATURES,
                            FIRST_OMEGA, HIDDEN_OMEGA)
    check(p_op_deep, False, "full_train, op branch deeper")

    print("KERNEL_OK")
</pallas_src>

<mosaic_0001>
module attributes {stable_mosaic.version = 11 : i64} {
  func.func @kernel(%arg0: i32, %arg1: memref<3x256xf32, #tpu.memory_space<vmem>>, %arg2: memref<32x2xf32, #tpu.memory_space<vmem>>, %arg3: memref<2x32x32xf32, #tpu.memory_space<vmem>>, %arg4: memref<1x32xf32, #tpu.memory_space<vmem>>, %arg5: memref<97x1xf32, #tpu.memory_space<vmem>>, %arg6: memref<1x256xf32, #tpu.memory_space<vmem>>) attributes {dimension_semantics = [#tpu.dimension_semantics<parallel>], iteration_bounds = array<i64: 2>, scalar_prefetch = 0 : i64, scratch_operands = 0 : i64, tpu.core_type = #tpu.core_type<tc>, window_params = [{transform_indices = @transform_0, window_bounds = array<i64: 3, 256>}, {pipeline_mode = #tpu.pipeline_mode<synchronous>, transform_indices = @transform_1, window_bounds = array<i64: 32, 2>}, {pipeline_mode = #tpu.pipeline_mode<synchronous>, transform_indices = @transform_2, window_bounds = array<i64: 2, 32, 32>}, {pipeline_mode = #tpu.pipeline_mode<synchronous>, transform_indices = @transform_3, window_bounds = array<i64: 1, 32>}, {pipeline_mode = #tpu.pipeline_mode<synchronous>, transform_indices = @transform_4, window_bounds = array<i64: 97, 1>}, {transform_indices = @transform_5, window_bounds = array<i64: 1, 256>}]} {
    %c0 = arith.constant 0 : index
    %c0_0 = arith.constant 0 : index
    %0 = vector.load %arg2[%c0, %c0_0] : memref<32x2xf32, #tpu.memory_space<vmem>>, vector<32x2xf32>
    %c0_1 = arith.constant 0 : index
    %c0_2 = arith.constant 0 : index
    %1 = vector.load %arg4[%c0_1, %c0_2] : memref<1x32xf32, #tpu.memory_space<vmem>>, vector<1x32xf32>
    %2 = vector.extract_strided_slice %0 {offsets = [0, 0], sizes = [32, 1], strides = [1, 1]} : vector<32x2xf32> to vector<32x1xf32>
    %c0_3 = arith.constant 0 : index
    %c0_4 = arith.constant 0 : index
    %3 = vector.load %arg1[%c0_3, %c0_4] : memref<3x256xf32, #tpu.memory_space<vmem>>, vector<1x256xf32>
    %4 = vector.broadcast %2 : vector<32x1xf32> to vector<32x256xf32>
    %5 = vector.broadcast %3 : vector<1x256xf32> to vector<32x256xf32>
    %6 = arith.mulf %4, %5 : vector<32x256xf32>
    %7 = vector.extract_strided_slice %0 {offsets = [0, 1], sizes = [32, 1], strides = [1, 1]} : vector<32x2xf32> to vector<32x1xf32>
    %c1 = arith.constant 1 : index
    %c0_5 = arith.constant 0 : index
    %8 = vector.load %arg1[%c1, %c0_5] : memref<3x256xf32, #tpu.memory_space<vmem>>, vector<1x256xf32>
    %9 = vector.broadcast %7 : vector<32x1xf32> to vector<32x256xf32>
    %10 = vector.broadcast %8 : vector<1x256xf32> to vector<32x256xf32>
    %11 = arith.mulf %9, %10 : vector<32x256xf32>
    %12 = arith.addf %6, %11 : vector<32x256xf32>
    %c0_6 = arith.constant 0 : index
    %c0_7 = arith.constant 0 : index
    %13 = vector.load %arg5[%c0_6, %c0_7] : memref<97x1xf32, #tpu.memory_space<vmem>>, vector<32x1xf32>
    %14 = vector.broadcast %13 : vector<32x1xf32> to vector<32x256xf32>
    %15 = arith.addf %12, %14 : vector<32x256xf32>
    %16 = math.sin %15 : vector<32x256xf32>
    %c32 = arith.constant 32 : index
    %c0_8 = arith.constant 0 : index
    %17 = vector.load %arg5[%c32, %c0_8] : memref<97x1xf32, #tpu.memory_space<vmem>>, vector<32x1xf32>
    %c0_9 = arith.constant 0 : index
    %c0_10 = arith.constant 0 : index
    %c0_11 = arith.constant 0 : index
    %18 = vector.load %arg3[%c0_9, %c0_10, %c0_11] : memref<2x32x32xf32, #tpu.memory_space<vmem>>, vector<1x32x32xf32>
    %19 = vector.shape_cast %18 : vector<1x32x32xf32> to vector<32x32xf32>
    %cst = arith.constant dense<0.000000e+00> : vector<32x256xf32>
    %20 = tpu.matmul %19, %16, %cst {dimension_numbers = #tpu.dot_dimension_numbers<[1], [0], [0], [1], [0, 0, 1, 1], [], []>, precision = #tpu.contract_precision<fp32>} : vector<32x32xf32>, vector<32x256xf32>, vector<32x256xf32> -> vector<32x256xf32>
    %21 = vector.broadcast %17 : vector<32x1xf32> to vector<32x256xf32>
    %22 = arith.addf %20, %21 : vector<32x256xf32>
    %23 = math.sin %22 : vector<32x256xf32>
    %c64 = arith.constant 64 : index
    %c0_12 = arith.constant 0 : index
    %24 = vector.load %arg5[%c64, %c0_12] : memref<97x1xf32, #tpu.memory_space<vmem>>, vector<32x1xf32>
    %c1_13 = arith.constant 1 : index
    %c0_14 = arith.constant 0 : index
    %c0_15 = arith.constant 0 : index
    %25 = vector.load %arg3[%c1_13, %c0_14, %c0_15] : memref<2x32x32xf32, #tpu.memory_space<vmem>>, vector<1x32x32xf32>
    %26 = vector.shape_cast %25 : vector<1x32x32xf32> to vector<32x32xf32>
    %cst_16 = arith.constant dense<0.000000e+00> : vector<32x256xf32>
    %27 = tpu.matmul %26, %23, %cst_16 {dimension_numbers = #tpu.dot_dimension_numbers<[1], [0], [0], [1], [0, 0, 1, 1], [], []>, precision = #tpu.contract_precision<fp32>} : vector<32x32xf32>, vector<32x256xf32>, vector<32x256xf32> -> vector<32x256xf32>
    %28 = vector.broadcast %24 : vector<32x1xf32> to vector<32x256xf32>
    %29 = arith.addf %27, %28 : vector<32x256xf32>
    %30 = math.sin %29 : vector<32x256xf32>
    %cst_17 = arith.constant dense<0.000000e+00> : vector<1x256xf32>
    %31 = tpu.matmul %1, %30, %cst_17 {dimension_numbers = #tpu.dot_dimension_numbers<[1], [0], [0], [1], [0, 0, 1, 1], [], []>, precision = #tpu.contract_precision<fp32>} : vector<1x32xf32>, vector<32x256xf32>, vector<1x256xf32> -> vector<1x256xf32>
    %c96 = arith.constant 96 : index
    %c0_18 = arith.constant 0 : index
    %32 = vector.load %arg5[%c96, %c0_18] : memref<97x1xf32, #tpu.memory_space<vmem>>, vector<1x1xf32>
    %33 = vector.broadcast %32 : vector<1x1xf32> to vector<1x256xf32>
    %34 = arith.addf %31, %33 : vector<1x256xf32>
    %c0_19 = arith.constant 0 : index
    %c0_20 = arith.constant 0 : index
    %35 = vector.load %arg6[%c0_19, %c0_20] : memref<1x256xf32, #tpu.memory_space<vmem>>, vector<1x256xf32>
    tpu.vector_store %arg6[%c0_19, %c0_20], %34 {strides = array<i32>} : memref<1x256xf32, #tpu.memory_space<vmem>>, vector<1x256xf32>,
    return
  }
  func.func @transform_0(%arg0: i32) -> (i32, i32) {
    %c0_i32 = arith.constant 0 : i32
    %c0_i32_0 = arith.constant 0 : i32
    return %c0_i32, %arg0 : i32, i32
  }
  func.func @transform_1(%arg0: i32) -> (i32, i32) {
    %c0_i32 = arith.constant 0 : i32
    %c0_i32_0 = arith.constant 0 : i32
    %c0_i32_1 = arith.constant 0 : i32
    return %c0_i32, %c0_i32_0 : i32, i32
  }
  func.func @transform_2(%arg0: i32) -> (i32, i32, i32) {
    %c0_i32 = arith.constant 0 : i32
    %c0_i32_0 = arith.constant 0 : i32
    %c0_i32_1 = arith.constant 0 : i32
    %c0_i32_2 = arith.constant 0 : i32
    return %c0_i32, %c0_i32_0, %c0_i32_1 : i32, i32, i32
  }
  func.func @transform_3(%arg0: i32) -> (i32, i32) {
    %c0_i32 = arith.constant 0 : i32
    %c0_i32_0 = arith.constant 0 : i32
    %c0_i32_1 = arith.constant 0 : i32
    return %c0_i32, %c0_i32_0 : i32, i32
  }
  func.func @transform_4(%arg0: i32) -> (i32, i32) {
    %c0_i32 = arith.constant 0 : i32
    %c0_i32_0 = arith.constant 0 : i32
    %c0_i32_1 = arith.constant 0 : i32
    return %c0_i32, %c0_i32_0 : i32, i32
  }
  func.func @transform_5(%arg0: i32) -> (i32, i32) {
    %c0_i32 = arith.constant 0 : i32
    %c0_i32_0 = arith.constant 0 : i32
    return %c0_i32, %arg0 : i32, i32
  }
}

</mosaic_0001>

<llo_original>
// kernel: tpu_custom_call.1
$region0: #{tpu_custom_call.1}
  #allocation0 [shape = 'u32[]', space=smem, size = 0x4, offset = 0x4, fixed_abs, tag = 'smem constant byte address 0x4 - core index']
  #allocation1 [shape = 'u32[144,128]{1,0:T(1,128)}', space=vmem, size = 0x12000, scoped, tag = 'internal scratch']
  %s0 = inlined_call_operand.vmem [shape: f32[3,512], index: 0, kind: input, shape index: {}]
  %s1 = inlined_call_operand.vmem [shape: f32[32,2], index: 1, kind: input, shape index: {}]
  %s2 = inlined_call_operand.vmem [shape: f32[2,32,32], index: 2, kind: input, shape index: {}]
  %s3 = inlined_call_operand.vmem [shape: f32[1,32], index: 3, kind: input, shape index: {}]
  %s4 = inlined_call_operand.vmem [shape: f32[97,1], index: 4, kind: input, shape index: {}]
  %s5 = inlined_call_operand.hbm [shape: f32[1,512], index: 5, kind: output, shape index: {}]
  %s6 = sld [smem:[#allocation0]]
  $region53: #{tpu_custom_call.1} parent=0
    _
  %s8 = ssub.s32 1, %s6
  %s9 = scalar_select 0, %s8, %s6
  $region1: #{tpu_custom_call.1} parent=0
    #allocation2 [shape = 'u8[2048]{0}', space=vmem, size = 0x800, scoped, tag = 'output window, operand 0']
    #allocation3 [shape = 's32[2]{0}', space=sflag, size = 0x8, scoped, tag = 'scoped memory for tpu_custom_call.1']
    %10 = vsyncpa [#allocation3], 0
    %s11 = scalar_lea.sflag [#allocation3], 1
    %12 = vsyncpa %s11, 0
    loop: start=0, step=1, limit=4
    $region2: #{tpu_custom_call.1} parent=1 // loop_pre_header
      _
    $region3: #{tpu_custom_call.1} parent=1 // loop_header
      %s14 = sphi 0, %s18
      %p15 = scmp.ge.s32.totalorder %s14, 4
      %s24 = sphi 0, %s26
      %s27 = sphi 0, %s24
      %s28 = sphi 0, %s27
      %s44 = sphi 0, %s28
      %s48 = sphi 0, %s48
      %s50 = sphi 0, %s48
      %s51 = sphi 0, %s50
      %s65 = sphi 0, %s51
      %s69 = sphi 0, %s69
      %s71 = sphi 0, %s69
      %s72 = sphi 0, %s71
      %s86 = sphi 0, %s72
      %s90 = sphi 0, %s90
      %s92 = sphi 0, %s90
      %s93 = sphi 0, %s92
      %s107 = sphi 0, %s93
      %s111 = sphi 0, %s111
      %s113 = sphi 0, %s111
      %s114 = sphi 0, %s113
      %s128 = sphi 0, %s114
      %s134 = sphi 0, %s136
      %s137 = sphi 0, %s134
      %s138 = sphi 0, %s137
      %s154 = sphi 0, %s138
    $region4: #{tpu_custom_call.1} parent=1 // loop_header_branch
      %17 = sbr.rel (%p15) target = $region8
    $region5: #{tpu_custom_call.1} parent=1 // loop_body
      %s19 = ssub.s32 %s14, 1
      %s20 = ssub.s32 %s14, 2
      %s21 = sadd.s32 %s14, 1
      %s22 = ssub.s32 %s14, %s21
      %p23 = scmp.eq.s32.totalorder %s22, 0
      %s25 = sadd.s32 %s24, 1
      %s26 = scalar_select %p23, %s24, %s25
      %p29 = pneg %p23
      %p30 = scmp.eq.s32.totalorder %s14, 1
      %p31 = por %p29, %p30
      %p32 = scmp.ne.s32.totalorder %s24, %s27
      %p33 = scmp.eq.s32.totalorder %s14, 0
      %p34 = por %p32, %p33
      %p35 = scmp.ne.s32.totalorder %s24, %s27
      %p36 = scmp.eq.s32.totalorder %s19, 1
      %p37 = por %p35, %p36
      %p38 = scmp.ne.s32.totalorder %s27, %s28
      %p39 = scmp.eq.s32.totalorder %s19, 0
      %p40 = por %p38, %p39
      %p41 = scmp.ne.s32.totalorder %s27, %s28
      %p42 = scmp.eq.s32.totalorder %s20, 1
      %p43 = por %p41, %p42
      %p45 = scmp.ne.s32.totalorder %s28, %s44
      %p46 = scmp.eq.s32.totalorder %s20, 0
      %p47 = por %p45, %p46
      %s49 = sadd.s32 %s48, 1
      %p52 = scmp.eq.s32.totalorder %s14, 1
      %p53 = scmp.ne.s32.totalorder %s48, %s50
      %p54 = scmp.eq.s32.totalorder %s14, 0
      %p55 = por %p53, %p54
      %p56 = scmp.ne.s32.totalorder %s48, %s50
      %p57 = scmp.eq.s32.totalorder %s19, 1
      %p58 = por %p56, %p57
      %p59 = scmp.ne.s32.totalorder %s50, %s51
      %p60 = scmp.eq.s32.totalorder %s19, 0
      %p61 = por %p59, %p60
      %p62 = scmp.ne.s32.totalorder %s50, %s51
      %p63 = scmp.eq.s32.totalorder %s20, 1
      %p64 = por %p62, %p63
      %p66 = scmp.ne.s32.totalorder %s51, %s65
      %p67 = scmp.eq.s32.totalorder %s20, 0
      %p68 = por %p66, %p67
      %s70 = sadd.s32 %s69, 1
      %p73 = scmp.eq.s32.totalorder %s14, 1
      %p74 = scmp.ne.s32.totalorder %s69, %s71
      %p75 = scmp.eq.s32.totalorder %s14, 0
      %p76 = por %p74, %p75
      %p77 = scmp.ne.s32.totalorder %s69, %s71
      %p78 = scmp.eq.s32.totalorder %s19, 1
      %p79 = por %p77, %p78
      %p80 = scmp.ne.s32.totalorder %s71, %s72
      %p81 = scmp.eq.s32.totalorder %s19, 0
      %p82 = por %p80, %p81
      %p83 = scmp.ne.s32.totalorder %s71, %s72
      %p84 = scmp.eq.s32.totalorder %s20, 1
      %p85 = por %p83, %p84
      %p87 = scmp.ne.s32.totalorder %s72, %s86
      %p88 = scmp.eq.s32.totalorder %s20, 0
      %p89 = por %p87, %p88
      %s91 = sadd.s32 %s90, 1
      %p94 = scmp.eq.s32.totalorder %s14, 1
      %p95 = scmp.ne.s32.totalorder %s90, %s92
      %p96 = scmp.eq.s32.totalorder %s14, 0
      %p97 = por %p95, %p96
      %p98 = scmp.ne.s32.totalorder %s90, %s92
      %p99 = scmp.eq.s32.totalorder %s19, 1
      %p100 = por %p98, %p99
      %p101 = scmp.ne.s32.totalorder %s92, %s93
      %p102 = scmp.eq.s32.totalorder %s19, 0
      %p103 = por %p101, %p102
      %p104 = scmp.ne.s32.totalorder %s92, %s93
      %p105 = scmp.eq.s32.totalorder %s20, 1
      %p106 = por %p104, %p105
      %p108 = scmp.ne.s32.totalorder %s93, %s107
      %p109 = scmp.eq.s32.totalorder %s20, 0
      %p110 = por %p108, %p109
      %s112 = sadd.s32 %s111, 1
      %p115 = scmp.eq.s32.totalorder %s14, 1
      %p116 = scmp.ne.s32.totalorder %s111, %s113
      %p117 = scmp.eq.s32.totalorder %s14, 0
      %p118 = por %p116, %p117
      %p119 = scmp.ne.s32.totalorder %s111, %s113
      %p120 = scmp.eq.s32.totalorder %s19, 1
      %p121 = por %p119, %p120
      %p122 = scmp.ne.s32.totalorder %s113, %s114
      %p123 = scmp.eq.s32.totalorder %s19, 0
      %p124 = por %p122, %p123
      %p125 = scmp.ne.s32.totalorder %s113, %s114
      %p126 = scmp.eq.s32.totalorder %s20, 1
      %p127 = por %p125, %p126
      %p129 = scmp.ne.s32.totalorder %s114, %s128
      %p130 = scmp.eq.s32.totalorder %s20, 0
      %p131 = por %p129, %p130
      %s132 = ssub.s32 %s14, %s21
      %p133 = scmp.eq.s32.totalorder %s132, 0
      %s135 = sadd.s32 %s134, 1
      %s136 = scalar_select %p133, %s134, %s135
      %p139 = pneg %p133
      %p140 = scmp.eq.s32.totalorder %s14, 1
      %p141 = por %p139, %p140
      %p142 = scmp.ne.s32.totalorder %s134, %s137
      %p143 = scmp.eq.s32.totalorder %s14, 0
      %p144 = por %p142, %p143
      %p145 = scmp.ne.s32.totalorder %s134, %s137
      %p146 = scmp.eq.s32.totalorder %s19, 1
      %p147 = por %p145, %p146
      %p148 = scmp.ne.s32.totalorder %s137, %s138
      %p149 = scmp.eq.s32.totalorder %s19, 0
      %p150 = por %p148, %p149
      %p151 = scmp.ne.s32.totalorder %s137, %s138
      %p152 = scmp.eq.s32.totalorder %s20, 1
      %p153 = por %p151, %p152
      %p155 = scmp.ne.s32.totalorder %s138, %s154
      %p156 = scmp.eq.s32.totalorder %s20, 0
      %p157 = por %p155, %p156
      %p158 = scmp.le.s32.totalorder 1, %s14
      %p159 = scmp.lt.s32.totalorder %s14, 3
      %p160 = pnand %p158, %p159
      %p161 = pneg %p160
      // Predicated region
      $region9: #{tpu_custom_call.1} parent=5 // pred_check
        _
      $region10: #{tpu_custom_call.1} parent=5 // pred_check_branch
        %163 = sbr.rel (%p160) target = $region12
      $region11: #{tpu_custom_call.1} parent=5 // pred_region
        %s164 = ssub.s32 %s14, 1
        // Predicated region
        $region13: #{tpu_custom_call.1} parent=11 // pred_check
          %p165 = pneg %p61
        $region14: #{tpu_custom_call.1} parent=11 // pred_check_branch
          %167 = sbr.rel (%p165) target = $region16
        $region15: #{tpu_custom_call.1} parent=11 // pred_region
          _
        $region16: #{tpu_custom_call.1} parent=11 // pred_fallthru
          _
        // Predicated region
        $region17: #{tpu_custom_call.1} parent=11 // pred_check
          %p168 = pneg %p82
        $region18: #{tpu_custom_call.1} parent=11 // pred_check_branch
          %170 = sbr.rel (%p168) target = $region20
        $region19: #{tpu_custom_call.1} parent=11 // pred_region
          _
        $region20: #{tpu_custom_call.1} parent=11 // pred_fallthru
          _
        // Predicated region
        $region21: #{tpu_custom_call.1} parent=11 // pred_check
          %p171 = pneg %p103
        $region22: #{tpu_custom_call.1} parent=11 // pred_check_branch
          %173 = sbr.rel (%p171) target = $region24
        $region23: #{tpu_custom_call.1} parent=11 // pred_region
          _
        $region24: #{tpu_custom_call.1} parent=11 // pred_fallthru
          _
        // Predicated region
        $region25: #{tpu_custom_call.1} parent=11 // pred_check
          %p174 = pneg %p124
        $region26: #{tpu_custom_call.1} parent=11 // pred_check_branch
          %176 = sbr.rel (%p174) target = $region28
        $region27: #{tpu_custom_call.1} parent=11 // pred_region
          _
        $region28: #{tpu_custom_call.1} parent=11 // pred_fallthru
          _
      $region12: #{tpu_custom_call.1} parent=5 // pred_fallthru
        _
      %p177 = scmp.lt.s32.totalorder %s14, 2
      // Predicated region
      $region29: #{tpu_custom_call.1} parent=5 // pred_check
        %p178 = pneg %p177
      $region30: #{tpu_custom_call.1} parent=5 // pred_check_branch
        %180 = sbr.rel (%p178) target = $region32
      $region31: #{tpu_custom_call.1} parent=5 // pred_region
        // Predicated region
        $region33: #{tpu_custom_call.1} parent=31 // pred_check
          %p181 = pneg %p34
        $region34: #{tpu_custom_call.1} parent=31 // pred_check_branch
          %183 = sbr.rel (%p181) target = $region36
        $region35: #{tpu_custom_call.1} parent=31 // pred_region
          %s184 = smul.u32 2, %s14
          %p185 = scmp.lt.s32.totalorder %s184, 3
          %s186 = scalar_select %p185, %s184, 3
          %s187 = smul.addr %s186, 4
          %s188 = scalar_lea.vmem %s0, %s187
          %s189 = smul.u32 2, %s14
        $region36: #{tpu_custom_call.1} parent=31 // pred_fallthru
          _
      $region32: #{tpu_custom_call.1} parent=5 // pred_fallthru
        _
      %p190 = scmp.le.s32.totalorder 1, %s14
      %p191 = scmp.lt.s32.totalorder %s14, 3
      %p192 = pnand %p190, %p191
      %p193 = pneg %p192
      // Predicated region
      $region37: #{tpu_custom_call.1} parent=5 // pred_check
        _
      $region38: #{tpu_custom_call.1} parent=5 // pred_check_branch
        %195 = sbr.rel (%p192) target = $region40
      $region39: #{tpu_custom_call.1} parent=5 // pred_region
        %s196 = ssub.s32 %s14, 1
        %s197 = smul.u32 2, %s19
        %p198 = scmp.lt.s32.totalorder %s197, 3
        %s199 = scalar_select %p198, %s197, 3
        %s200 = smul.addr %s199, 4
        %s201 = scalar_lea.vmem %s0, %s200
        %p202 = pneg %p40
        %p203 = pneg %p37
        %p204 = pneg %p61
        %p205 = pneg %p58
        %p206 = pneg %p82
        %p207 = pneg %p79
        %p208 = pneg %p103
        %p209 = pneg %p100
        %p210 = pneg %p124
        %p211 = pneg %p121
        %p212 = pneg %p150
        %p213 = pneg %p147
        %s214 = sand.u32 %s137, 1
        %s215 = scalar_lea.sflag [#allocation3], %s214
        %s216 = sand.u32 %s137, 1
        %s217 = smul.addr %s216, 2
        %s218 = scalar_lea.vmem [#allocation2], %s217
        %s219 = smul.u32 2, %s19
        %p220 = scmp.lt.s32.totalorder %s219, 3
        %s221 = scalar_select %p220, %s219, 3
        %s222 = smul.addr %s221, 4
        %s223 = scalar_lea.vmem %s0, %s222
        %s224 = smul.u32 2, %s19
        %s225 = smul.u32 2, %s19
        %v226 = vld [vmem:[%s1] sm:$0xff]
        %v227 = vld [vmem:[%s1 + $0x8] sm:$0xff]
        %v228 = vld [vmem:[%s1 + $0x10] sm:$0xff]
        %v229 = vld [vmem:[%s1 + $0x18] sm:$0xff]
        %v230 = vld [vmem:[%s3] sm:$0x1]
        %v231 = vld [vmem:[%s223] ss:$4 sm:$0x3]
        %233 = vset.pattern.permute.xlu0 0
        %234 = vperm.xlu0 %233, %v226
        %v235 = vpop.permute.xlu0 %234
        %238 = vset.pattern.permute.xlu0 0
        %239 = vperm.xlu0 %238, %v227
        %v240 = vpop.permute.xlu0 %239
        %243 = vset.pattern.permute.xlu0 0
        %244 = vperm.xlu0 %243, %v228
        %v245 = vpop.permute.xlu0 %244
        %248 = vset.pattern.permute.xlu0 0
        %249 = vperm.xlu0 %248, %v229
        %v250 = vpop.permute.xlu0 %249
        %v253 = vlaneseq
        %v254 = vshrl.u32 %v253, 7
        %v255 = vsub.s32 0, %v254
        %v256 = vrot.slane %v231, %v255
        %v257 = vlaneseq
        %v258 = vshrl.u32 %v257, 7
        %v259 = vsub.s32 1, %v258
        %v260 = vrot.slane %v231, %v259
        %v263 = vmul.f32 %v235, %v256
        %v264 = vmul.f32 %v235, %v260
        %v265 = vmul.f32 %v240, %v256
        %v266 = vmul.f32 %v240, %v260
        %v267 = vmul.f32 %v245, %v256
        %v268 = vmul.f32 %v245, %v260
        %v269 = vmul.f32 %v250, %v256
        %v270 = vmul.f32 %v250, %v260
        %s271 = scalar_lea.vmem %s223, 1
        %v272 = vld [vmem:[%s271] ss:$4 sm:$0x3]
        %273 = vset.pattern.permute.xlu0 1
        %274 = vperm.xlu0 %273, %v226
        %v275 = vpop.permute.xlu0 %274
        %277 = vset.pattern.permute.xlu0 1
        %278 = vperm.xlu0 %277, %v227
        %v279 = vpop.permute.xlu0 %278
        %281 = vset.pattern.permute.xlu0 1
        %282 = vperm.xlu0 %281, %v228
        %v283 = vpop.permute.xlu0 %282
        %285 = vset.pattern.permute.xlu0 1
        %286 = vperm.xlu0 %285, %v229
        %v287 = vpop.permute.xlu0 %286
        %v290 = vlaneseq
        %v291 = vshrl.u32 %v290, 7
        %v292 = vsub.s32 0, %v291
        %v293 = vrot.slane %v272, %v292
        %v294 = vlaneseq
        %v295 = vshrl.u32 %v294, 7
        %v296 = vsub.s32 1, %v295
        %v297 = vrot.slane %v272, %v296
        %v300 = vmul.f32 %v275, %v293
        %v301 = vmul.f32 %v275, %v297
        %v302 = vmul.f32 %v279, %v293
        %v303 = vmul.f32 %v279, %v297
        %v304 = vmul.f32 %v283, %v293
        %v305 = vmul.f32 %v283, %v297
        %v306 = vmul.f32 %v287, %v293
        %v307 = vmul.f32 %v287, %v297
        %v308 = vadd.f32 %v263, %v300
        %v309 = vadd.f32 %v264, %v301
        %v310 = vadd.f32 %v265, %v302
        %v311 = vadd.f32 %v266, %v303
        %v312 = vadd.f32 %v267, %v304
        %v313 = vadd.f32 %v268, %v305
        %v314 = vadd.f32 %v269, %v306
        %v315 = vadd.f32 %v270, %v307
        %v316 = vld [vmem:[%s4] sm:$0xff]
        %v317 = vld [vmem:[%s4 + $0x8] sm:$0xff]
        %v318 = vld [vmem:[%s4 + $0x10] sm:$0xff]
        %v319 = vld [vmem:[%s4 + $0x18] sm:$0xff]
        %321 = vset.pattern.permute.xlu0 0
        %322 = vperm.xlu0 %321, %v316
        %v323 = vpop.permute.xlu0 %322
        %326 = vset.pattern.permute.xlu0 0
        %327 = vperm.xlu0 %326, %v317
        %v328 = vpop.permute.xlu0 %327
        %331 = vset.pattern.permute.xlu0 0
        %332 = vperm.xlu0 %331, %v318
        %v333 = vpop.permute.xlu0 %332
        %336 = vset.pattern.permute.xlu0 0
        %337 = vperm.xlu0 %336, %v319
        %v338 = vpop.permute.xlu0 %337
        %v340 = vadd.f32 %v308, %v323
        %v341 = vadd.f32 %v309, %v323
        %v342 = vadd.f32 %v310, %v328
        %v343 = vadd.f32 %v311, %v328
        %v344 = vadd.f32 %v312, %v333
        %v345 = vadd.f32 %v313, %v333
        %v346 = vadd.f32 %v314, %v338
        %v347 = vadd.f32 %v315, %v338
        %v348 = vand.u32 2147483647, %v340
        %vm349 = vcmp.le.f32.partialorder %v348, 0.7853982
        %vm350 = vcmp.lt.s32.totalorder %v340, 0
        %v351 = vand.u32 %v340, 2139095040
        %v352 = vshrl.u32 %v351, 23
        %v353 = vsub.s32 %v352, 127
        %v354 = vand.u32 2147483647, %v340
        %v355 = vand.u32 %v354, 8388607
        %v356 = vor.u32 %v355, 8388608
        %v357 = vsub.s32 0, %v356
        %v358 = vadd.s32 %v353, 1
        %vm359 = vcmp.gt.s32.totalorder %v358, 0
        %v360 = vsel %vm359, %v358, 0
        %v361 = vshrl.u32 %v360, 5
        %v362 = vand.u32 %v360, 31
        %v363 = vsub.s32 32, %v362
        %v364 = vshrl.u32 683565275, %v363
        %v365 = vshll.u32 683565275, %v362
        %v366 = vshrl.u32 2475754826, %v363
        %v367 = vor.u32 %v365, %v366
        %v368 = vshll.u32 2475754826, %v362
        %v369 = vshrl.u32 2131351028, %v363
        %v370 = vor.u32 %v368, %v369
        %v371 = vshll.u32 2131351028, %v362
        %v372 = vshrl.u32 2102212464, %v363
        %v373 = vor.u32 %v371, %v372
        %v374 = vshll.u32 2102212464, %v362
        %v375 = vshrl.u32 920167782, %v363
        %v376 = vor.u32 %v374, %v375
        %v377 = vshll.u32 920167782, %v362
        %v378 = vshrl.u32 1326507024, %v363
        %v379 = vor.u32 %v377, %v378
        %vm380 = vcmp.lt.s32.totalorder %v361, 1
        %vm381 = vcmp.lt.s32.totalorder %v361, 2
        %vm382 = vcmp.lt.s32.totalorder %v361, 3
        %vm383 = vcmp.lt.s32.totalorder %v361, 4
        %v384 = vsel %vm380, %v364, %v367
        %v385 = vsel %vm383, %v373, 2102212464
        %v386 = vsel %vm382, %v370, %v385
        %v387 = vsel %vm381, %v384, %v386
        %v388 = vsel %vm380, %v367, %v370
        %v389 = vsel %vm383, %v376, 920167782
        %v390 = vsel %vm382, %v373, %v389
        %v391 = vsel %vm381, %v388, %v390
        %v392 = vsel %vm380, %v370, %v373
        %v393 = vsel %vm383, %v379, 1326507024
        %v394 = vsel %vm382, %v376, %v393
        %v395 = vsel %vm381, %v392, %v394
        %v396 = vshll.u32 %v356, 8
        %v397 = vmul.u32.u64.compose %v396, %v395
        %v398 = vextract.low.u32 %v397
        %v399 = vextract.high.u32 %v397
        %v400 = vmul.u32.u64.compose %v396, %v391
        %v401 = vextract.low.u32 %v400
        %v402 = vextract.high.u32 %v400
        %v403 = vmul.u32 %v396, %v387
        %v404 = vadd.s32 %v399, %v401
        %vm405 = vc.u32 %v399, %v401
        %v406 = vadd.s32 %v402, 1
        %v407 = vsel %vm405, %v406, %v402
        %v408 = vadd.s32 %v403, %v407
        %v409 = vadd.s32 %v408, 536870912
        %v410 = vshrl.u32 %v409, 30
        %v411 = vshll.u32 %v410, 30
        %v412 = vsub.s32 %v408, %v411
        %vm413 = vcmp.lt.s32.totalorder %v412, 0
        %v414 = vsub.s32 0, %v412
        %v415 = vsel %vm413, %v414, %v412
        %v416 = vclz %v415
        %v417 = vsub.s32 %v416, 2
        %vm418 = vcmp.gt.s32.totalorder 0, %v417
        %v419 = vsel %vm418, 0, %v417
        %v420 = vsub.s32 32, %v419
        %v421 = vshll.u32 %v412, %v419
        %v422 = vshrl.u32 %v404, %v420
        %v423 = vor.u32 %v421, %v422
        %v424 = vsub.s32 4294967266, %v419
        %v425 = vadd.s32 %v424, 127
        %v426 = vshll.u32 %v425, 23
        %v427 = vor.u32 4788187, %v426
        %v428 = vand.u32 2147483647, %v427
        %v430 = vcvt.s32.f32 %v423
        %v431 = vmul.f32 %v430, %v428
        %v432 = vxor.u32 %v431, 2147483648
        %v433 = vsel %vm350, %v432, %v431
        %v434 = vsub.s32 4, %v410
        %v435 = vsel %vm350, %v434, %v410
        %v436 = vsel %vm349, %v340, %v433
        %v437 = vsel %vm349, 0, %v435
        %v438 = vcosq.f32.pop %v436
        %v439 = vsinq.f32.pop %v436
        %vm440 = vweird.f32 %v340
        %v441 = vadd.s32 %v437, 3
        %v442 = vand.u32 %v441, 3
        %vm443 = vcmp.lt.s32.totalorder %v442, 2
        %vm444 = vcmp.eq.s32.totalorder %v442, 0
        %v445 = vxor.u32 %v439, 2147483648
        %v446 = vsel %vm444, %v438, %v445
        %vm447 = vcmp.eq.s32.totalorder %v442, 2
        %v448 = vxor.u32 %v438, 2147483648
        %v449 = vsel %vm447, %v448, %v439
        %v450 = vsel %vm443, %v446, %v449
        %v451 = vsel %vm440, nan, %v450
        %v452 = vand.u32 2147483647, %v341
        %vm453 = vcmp.le.f32.partialorder %v452, 0.7853982
        %vm454 = vcmp.lt.s32.totalorder %v341, 0
        %v455 = vand.u32 %v341, 2139095040
        %v456 = vshrl.u32 %v455, 23
        %v457 = vsub.s32 %v456, 127
        %v458 = vand.u32 2147483647, %v341
        %v459 = vand.u32 %v458, 8388607
        %v460 = vor.u32 %v459, 8388608
        %v461 = vsub.s32 0, %v460
        %v462 = vadd.s32 %v457, 1
        %vm463 = vcmp.gt.s32.totalorder %v462, 0
        %v464 = vsel %vm463, %v462, 0
        %v465 = vshrl.u32 %v464, 5
        %v466 = vand.u32 %v464, 31
        %v467 = vsub.s32 32, %v466
        %v468 = vshrl.u32 683565275, %v467
        %v469 = vshll.u32 683565275, %v466
        %v470 = vshrl.u32 2475754826, %v467
        %v471 = vor.u32 %v469, %v470
        %v472 = vshll.u32 2475754826, %v466
        %v473 = vshrl.u32 2131351028, %v467
        %v474 = vor.u32 %v472, %v473
        %v475 = vshll.u32 2131351028, %v466
        %v476 = vshrl.u32 2102212464, %v467
        %v477 = vor.u32 %v475, %v476
        %v478 = vshll.u32 2102212464, %v466
        %v479 = vshrl.u32 920167782, %v467
        %v480 = vor.u32 %v478, %v479
        %v481 = vshll.u32 920167782, %v466
        %v482 = vshrl.u32 1326507024, %v467
        %v483 = vor.u32 %v481, %v482
        %vm484 = vcmp.lt.s32.totalorder %v465, 1
        %vm485 = vcmp.lt.s32.totalorder %v465, 2
        %vm486 = vcmp.lt.s32.totalorder %v465, 3
        %vm487 = vcmp.lt.s32.totalorder %v465, 4
        %v488 = vsel %vm484, %v468, %v471
        %v489 = vsel %vm487, %v477, 2102212464
        %v490 = vsel %vm486, %v474, %v489
        %v491 = vsel %vm485, %v488, %v490
        %v492 = vsel %vm484, %v471, %v474
        %v493 = vsel %vm487, %v480, 920167782
        %v494 = vsel %vm486, %v477, %v493
        %v495 = vsel %vm485, %v492, %v494
        %v496 = vsel %vm484, %v474, %v477
        %v497 = vsel %vm487, %v483, 1326507024
        %v498 = vsel %vm486, %v480, %v497
        %v499 = vsel %vm485, %v496, %v498
        %v500 = vshll.u32 %v460, 8
        %v501 = vmul.u32.u64.compose %v500, %v499
        %v502 = vextract.low.u32 %v501
        %v503 = vextract.high.u32 %v501
        %v504 = vmul.u32.u64.compose %v500, %v495
        %v505 = vextract.low.u32 %v504
        %v506 = vextract.high.u32 %v504
        %v507 = vmul.u32 %v500, %v491
        %v508 = vadd.s32 %v503, %v505
        %vm509 = vc.u32 %v503, %v505
        %v510 = vadd.s32 %v506, 1
        %v511 = vsel %vm509, %v510, %v506
        %v512 = vadd.s32 %v507, %v511
        %v513 = vadd.s32 %v512, 536870912
        %v514 = vshrl.u32 %v513, 30
        %v515 = vshll.u32 %v514, 30
        %v516 = vsub.s32 %v512, %v515
        %vm517 = vcmp.lt.s32.totalorder %v516, 0
        %v518 = vsub.s32 0, %v516
        %v519 = vsel %vm517, %v518, %v516
        %v520 = vclz %v519
        %v521 = vsub.s32 %v520, 2
        %vm522 = vcmp.gt.s32.totalorder 0, %v521
        %v523 = vsel %vm522, 0, %v521
        %v524 = vsub.s32 32, %v523
        %v525 = vshll.u32 %v516, %v523
        %v526 = vshrl.u32 %v508, %v524
        %v527 = vor.u32 %v525, %v526
        %v528 = vsub.s32 4294967266, %v523
        %v529 = vadd.s32 %v528, 127
        %v530 = vshll.u32 %v529, 23
        %v531 = vor.u32 4788187, %v530
        %v532 = vand.u32 2147483647, %v531
        %v534 = vcvt.s32.f32 %v527
        %v535 = vmul.f32 %v534, %v532
        %v536 = vxor.u32 %v535, 2147483648
        %v537 = vsel %vm454, %v536, %v535
        %v538 = vsub.s32 4, %v514
        %v539 = vsel %vm454, %v538, %v514
        %v540 = vsel %vm453, %v341, %v537
        %v541 = vsel %vm453, 0, %v539
        %v542 = vcosq.f32.pop %v540
        %v543 = vsinq.f32.pop %v540
        %vm544 = vweird.f32 %v341
        %v545 = vadd.s32 %v541, 3
        %v546 = vand.u32 %v545, 3
        %vm547 = vcmp.lt.s32.totalorder %v546, 2
        %vm548 = vcmp.eq.s32.totalorder %v546, 0
        %v549 = vxor.u32 %v543, 2147483648
        %v550 = vsel %vm548, %v542, %v549
        %vm551 = vcmp.eq.s32.totalorder %v546, 2
        %v552 = vxor.u32 %v542, 2147483648
        %v553 = vsel %vm551, %v552, %v543
        %v554 = vsel %vm547, %v550, %v553
        %v555 = vsel %vm544, nan, %v554
        %v556 = vand.u32 2147483647, %v342
        %vm557 = vcmp.le.f32.partialorder %v556, 0.7853982
        %vm558 = vcmp.lt.s32.totalorder %v342, 0
        %v559 = vand.u32 %v342, 2139095040
        %v560 = vshrl.u32 %v559, 23
        %v561 = vsub.s32 %v560, 127
        %v562 = vand.u32 2147483647, %v342
        %v563 = vand.u32 %v562, 8388607
        %v564 = vor.u32 %v563, 8388608
        %v565 = vsub.s32 0, %v564
        %v566 = vadd.s32 %v561, 1
        %vm567 = vcmp.gt.s32.totalorder %v566, 0
        %v568 = vsel %vm567, %v566, 0
        %v569 = vshrl.u32 %v568, 5
        %v570 = vand.u32 %v568, 31
        %v571 = vsub.s32 32, %v570
        %v572 = vshrl.u32 683565275, %v571
        %v573 = vshll.u32 683565275, %v570
        %v574 = vshrl.u32 2475754826, %v571
        %v575 = vor.u32 %v573, %v574
        %v576 = vshll.u32 2475754826, %v570
        %v577 = vshrl.u32 2131351028, %v571
        %v578 = vor.u32 %v576, %v577
        %v579 = vshll.u32 2131351028, %v570
        %v580 = vshrl.u32 2102212464, %v571
        %v581 = vor.u32 %v579, %v580
        %v582 = vshll.u32 2102212464, %v570
        %v583 = vshrl.u32 920167782, %v571
        %v584 = vor.u32 %v582, %v583
        %v585 = vshll.u32 920167782, %v570
        %v586 = vshrl.u32 1326507024, %v571
        %v587 = vor.u32 %v585, %v586
        %vm588 = vcmp.lt.s32.totalorder %v569, 1
        %vm589 = vcmp.lt.s32.totalorder %v569, 2
        %vm590 = vcmp.lt.s32.totalorder %v569, 3
        %vm591 = vcmp.lt.s32.totalorder %v569, 4
        %v592 = vsel %vm588, %v572, %v575
        %v593 = vsel %vm591, %v581, 2102212464
        %v594 = vsel %vm590, %v578, %v593
        %v595 = vsel %vm589, %v592, %v594
        %v596 = vsel %vm588, %v575, %v578
        %v597 = vsel %vm591, %v584, 920167782
        %v598 = vsel %vm590, %v581, %v597
        %v599 = vsel %vm589, %v596, %v598
        %v600 = vsel %vm588, %v578, %v581
        %v601 = vsel %vm591, %v587, 1326507024
        %v602 = vsel %vm590, %v584, %v601
        %v603 = vsel %vm589, %v600, %v602
        %v604 = vshll.u32 %v564, 8
        %v605 = vmul.u32.u64.compose %v604, %v603
        %v606 = vextract.low.u32 %v605
        %v607 = vextract.high.u32 %v605
        %v608 = vmul.u32.u64.compose %v604, %v599
        %v609 = vextract.low.u32 %v608
        %v610 = vextract.high.u32 %v608
        %v611 = vmul.u32 %v604, %v595
        %v612 = vadd.s32 %v607, %v609
        %vm613 = vc.u32 %v607, %v609
        %v614 = vadd.s32 %v610, 1
        %v615 = vsel %vm613, %v614, %v610
        %v616 = vadd.s32 %v611, %v615
        %v617 = vadd.s32 %v616, 536870912
        %v618 = vshrl.u32 %v617, 30
        %v619 = vshll.u32 %v618, 30
        %v620 = vsub.s32 %v616, %v619
        %vm621 = vcmp.lt.s32.totalorder %v620, 0
        %v622 = vsub.s32 0, %v620
        %v623 = vsel %vm621, %v622, %v620
        %v624 = vclz %v623
        %v625 = vsub.s32 %v624, 2
        %vm626 = vcmp.gt.s32.totalorder 0, %v625
        %v627 = vsel %vm626, 0, %v625
        %v628 = vsub.s32 32, %v627
        %v629 = vshll.u32 %v620, %v627
        %v630 = vshrl.u32 %v612, %v628
        %v631 = vor.u32 %v629, %v630
        %v632 = vsub.s32 4294967266, %v627
        %v633 = vadd.s32 %v632, 127
        %v634 = vshll.u32 %v633, 23
        %v635 = vor.u32 4788187, %v634
        %v636 = vand.u32 2147483647, %v635
        %v638 = vcvt.s32.f32 %v631
        %v639 = vmul.f32 %v638, %v636
        %v640 = vxor.u32 %v639, 2147483648
        %v641 = vsel %vm558, %v640, %v639
        %v642 = vsub.s32 4, %v618
        %v643 = vsel %vm558, %v642, %v618
        %v644 = vsel %vm557, %v342, %v641
        %v645 = vsel %vm557, 0, %v643
        %v646 = vcosq.f32.pop %v644
        %v647 = vsinq.f32.pop %v644
        %vm648 = vweird.f32 %v342
        %v649 = vadd.s32 %v645, 3
        %v650 = vand.u32 %v649, 3
        %vm651 = vcmp.lt.s32.totalorder %v650, 2
        %vm652 = vcmp.eq.s32.totalorder %v650, 0
        %v653 = vxor.u32 %v647, 2147483648
        %v654 = vsel %vm652, %v646, %v653
        %vm655 = vcmp.eq.s32.totalorder %v650, 2
        %v656 = vxor.u32 %v646, 2147483648
        %v657 = vsel %vm655, %v656, %v647
        %v658 = vsel %vm651, %v654, %v657
        %v659 = vsel %vm648, nan, %v658
        %v660 = vand.u32 2147483647, %v343
        %vm661 = vcmp.le.f32.partialorder %v660, 0.7853982
        %vm662 = vcmp.lt.s32.totalorder %v343, 0
        %v663 = vand.u32 %v343, 2139095040
        %v664 = vshrl.u32 %v663, 23
        %v665 = vsub.s32 %v664, 127
        %v666 = vand.u32 2147483647, %v343
        %v667 = vand.u32 %v666, 8388607
        %v668 = vor.u32 %v667, 8388608
        %v669 = vsub.s32 0, %v668
        %v670 = vadd.s32 %v665, 1
        %vm671 = vcmp.gt.s32.totalorder %v670, 0
        %v672 = vsel %vm671, %v670, 0
        %v673 = vshrl.u32 %v672, 5
        %v674 = vand.u32 %v672, 31
        %v675 = vsub.s32 32, %v674
        %v676 = vshrl.u32 683565275, %v675
        %v677 = vshll.u32 683565275, %v674
        %v678 = vshrl.u32 2475754826, %v675
        %v679 = vor.u32 %v677, %v678
        %v680 = vshll.u32 2475754826, %v674
        %v681 = vshrl.u32 2131351028, %v675
        %v682 = vor.u32 %v680, %v681
        %v683 = vshll.u32 2131351028, %v674
        %v684 = vshrl.u32 2102212464, %v675
        %v685 = vor.u32 %v683, %v684
        %v686 = vshll.u32 2102212464, %v674
        %v687 = vshrl.u32 920167782, %v675
        %v688 = vor.u32 %v686, %v687
        %v689 = vshll.u32 920167782, %v674
        %v690 = vshrl.u32 1326507024, %v675
        %v691 = vor.u32 %v689, %v690
        %vm692 = vcmp.lt.s32.totalorder %v673, 1
        %vm693 = vcmp.lt.s32.totalorder %v673, 2
        %vm694 = vcmp.lt.s32.totalorder %v673, 3
        %vm695 = vcmp.lt.s32.totalorder %v673, 4
        %v696 = vsel %vm692, %v676, %v679
        %v697 = vsel %vm695, %v685, 2102212464
        %v698 = vsel %vm694, %v682, %v697
        %v699 = vsel %vm693, %v696, %v698
        %v700 = vsel %vm692, %v679, %v682
        %v701 = vsel %vm695, %v688, 920167782
        %v702 = vsel %vm694, %v685, %v701
        %v703 = vsel %vm693, %v700, %v702
        %v704 = vsel %vm692, %v682, %v685
        %v705 = vsel %vm695, %v691, 1326507024
        %v706 = vsel %vm694, %v688, %v705
        %v707 = vsel %vm693, %v704, %v706
        %v708 = vshll.u32 %v668, 8
        %v709 = vmul.u32.u64.compose %v708, %v707
        %v710 = vextract.low.u32 %v709
        %v711 = vextract.high.u32 %v709
        %v712 = vmul.u32.u64.compose %v708, %v703
        %v713 = vextract.low.u32 %v712
        %v714 = vextract.high.u32 %v712
        %v715 = vmul.u32 %v708, %v699
        %v716 = vadd.s32 %v711, %v713
        %vm717 = vc.u32 %v711, %v713
        %v718 = vadd.s32 %v714, 1
        %v719 = vsel %vm717, %v718, %v714
        %v720 = vadd.s32 %v715, %v719
        %v721 = vadd.s32 %v720, 536870912
        %v722 = vshrl.u32 %v721, 30
        %v723 = vshll.u32 %v722, 30
        %v724 = vsub.s32 %v720, %v723
        %vm725 = vcmp.lt.s32.totalorder %v724, 0
        %v726 = vsub.s32 0, %v724
        %v727 = vsel %vm725, %v726, %v724
        %v728 = vclz %v727
        %v729 = vsub.s32 %v728, 2
        %vm730 = vcmp.gt.s32.totalorder 0, %v729
        %v731 = vsel %vm730, 0, %v729
        %v732 = vsub.s32 32, %v731
        %v733 = vshll.u32 %v724, %v731
        %v734 = vshrl.u32 %v716, %v732
        %v735 = vor.u32 %v733, %v734
        %v736 = vsub.s32 4294967266, %v731
        %v737 = vadd.s32 %v736, 127
        %v738 = vshll.u32 %v737, 23
        %v739 = vor.u32 4788187, %v738
        %v740 = vand.u32 2147483647, %v739
        %v742 = vcvt.s32.f32 %v735
        %v743 = vmul.f32 %v742, %v740
        %v744 = vxor.u32 %v743, 2147483648
        %v745 = vsel %vm662, %v744, %v743
        %v746 = vsub.s32 4, %v722
        %v747 = vsel %vm662, %v746, %v722
        %v748 = vsel %vm661, %v343, %v745
        %v749 = vsel %vm661, 0, %v747
        %v750 = vcosq.f32.pop %v748
        %v751 = vsinq.f32.pop %v748
        %vm752 = vweird.f32 %v343
        %v753 = vadd.s32 %v749, 3
        %v754 = vand.u32 %v753, 3
        %vm755 = vcmp.lt.s32.totalorder %v754, 2
        %vm756 = vcmp.eq.s32.totalorder %v754, 0
        %v757 = vxor.u32 %v751, 2147483648
        %v758 = vsel %vm756, %v750, %v757
        %vm759 = vcmp.eq.s32.totalorder %v754, 2
        %v760 = vxor.u32 %v750, 2147483648
        %v761 = vsel %vm759, %v760, %v751
        %v762 = vsel %vm755, %v758, %v761
        %v763 = vsel %vm752, nan, %v762
        %v764 = vand.u32 2147483647, %v344
        %vm765 = vcmp.le.f32.partialorder %v764, 0.7853982
        %vm766 = vcmp.lt.s32.totalorder %v344, 0
        %v767 = vand.u32 %v344, 2139095040
        %v768 = vshrl.u32 %v767, 23
        %v769 = vsub.s32 %v768, 127
        %v770 = vand.u32 2147483647, %v344
        %v771 = vand.u32 %v770, 8388607
        %v772 = vor.u32 %v771, 8388608
        %v773 = vsub.s32 0, %v772
        %v774 = vadd.s32 %v769, 1
        %vm775 = vcmp.gt.s32.totalorder %v774, 0
        %v776 = vsel %vm775, %v774, 0
        %v777 = vshrl.u32 %v776, 5
        %v778 = vand.u32 %v776, 31
        %v779 = vsub.s32 32, %v778
        %v780 = vshrl.u32 683565275, %v779
        %v781 = vshll.u32 683565275, %v778
        %v782 = vshrl.u32 2475754826, %v779
        %v783 = vor.u32 %v781, %v782
        %v784 = vshll.u32 2475754826, %v778
        %v785 = vshrl.u32 2131351028, %v779
        %v786 = vor.u32 %v784, %v785
        %v787 = vshll.u32 2131351028, %v778
        %v788 = vshrl.u32 2102212464, %v779
        %v789 = vor.u32 %v787, %v788
        %v790 = vshll.u32 2102212464, %v778
        %v791 = vshrl.u32 920167782, %v779
        %v792 = vor.u32 %v790, %v791
        %v793 = vshll.u32 920167782, %v778
        %v794 = vshrl.u32 1326507024, %v779
        %v795 = vor.u32 %v793, %v794
        %vm796 = vcmp.lt.s32.totalorder %v777, 1
        %vm797 = vcmp.lt.s32.totalorder %v777, 2
        %vm798 = vcmp.lt.s32.totalorder %v777, 3
        %vm799 = vcmp.lt.s32.totalorder %v777, 4
        %v800 = vsel %vm796, %v780, %v783
        %v801 = vsel %vm799, %v789, 2102212464
        %v802 = vsel %vm798, %v786, %v801
        %v803 = vsel %vm797, %v800, %v802
        %v804 = vsel %vm796, %v783, %v786
        %v805 = vsel %vm799, %v792, 920167782
        %v806 = vsel %vm798, %v789, %v805
        %v807 = vsel %vm797, %v804, %v806
        %v808 = vsel %vm796, %v786, %v789
        %v809 = vsel %vm799, %v795, 1326507024
        %v810 = vsel %vm798, %v792, %v809
        %v811 = vsel %vm797, %v808, %v810
        %v812 = vshll.u32 %v772, 8
        %v813 = vmul.u32.u64.compose %v812, %v811
        %v814 = vextract.low.u32 %v813
        %v815 = vextract.high.u32 %v813
        %v816 = vmul.u32.u64.compose %v812, %v807
        %v817 = vextract.low.u32 %v816
        %v818 = vextract.high.u32 %v816
        %v819 = vmul.u32 %v812, %v803
        %v820 = vadd.s32 %v815, %v817
        %vm821 = vc.u32 %v815, %v817
        %v822 = vadd.s32 %v818, 1
        %v823 = vsel %vm821, %v822, %v818
        %v824 = vadd.s32 %v819, %v823
        %v825 = vadd.s32 %v824, 536870912
        %v826 = vshrl.u32 %v825, 30
        %v827 = vshll.u32 %v826, 30
        %v828 = vsub.s32 %v824, %v827
        %vm829 = vcmp.lt.s32.totalorder %v828, 0
        %v830 = vsub.s32 0, %v828
        %v831 = vsel %vm829, %v830, %v828
        %v832 = vclz %v831
        %v833 = vsub.s32 %v832, 2
        %vm834 = vcmp.gt.s32.totalorder 0, %v833
        %v835 = vsel %vm834, 0, %v833
        %v836 = vsub.s32 32, %v835
        %v837 = vshll.u32 %v828, %v835
        %v838 = vshrl.u32 %v820, %v836
        %v839 = vor.u32 %v837, %v838
        %v840 = vsub.s32 4294967266, %v835
        %v841 = vadd.s32 %v840, 127
        %v842 = vshll.u32 %v841, 23
        %v843 = vor.u32 4788187, %v842
        %v844 = vand.u32 2147483647, %v843
        %v846 = vcvt.s32.f32 %v839
        %v847 = vmul.f32 %v846, %v844
        %v848 = vxor.u32 %v847, 2147483648
        %v849 = vsel %vm766, %v848, %v847
        %v850 = vsub.s32 4, %v826
        %v851 = vsel %vm766, %v850, %v826
        %v852 = vsel %vm765, %v344, %v849
        %v853 = vsel %vm765, 0, %v851
        %v854 = vcosq.f32.pop %v852
        %v855 = vsinq.f32.pop %v852
        %vm856 = vweird.f32 %v344
        %v857 = vadd.s32 %v853, 3
        %v858 = vand.u32 %v857, 3
        %vm859 = vcmp.lt.s32.totalorder %v858, 2
        %vm860 = vcmp.eq.s32.totalorder %v858, 0
        %v861 = vxor.u32 %v855, 2147483648
        %v862 = vsel %vm860, %v854, %v861
        %vm863 = vcmp.eq.s32.totalorder %v858, 2
        %v864 = vxor.u32 %v854, 2147483648
        %v865 = vsel %vm863, %v864, %v855
        %v866 = vsel %vm859, %v862, %v865
        %v867 = vsel %vm856, nan, %v866
        %v868 = vand.u32 2147483647, %v345
        %vm869 = vcmp.le.f32.partialorder %v868, 0.7853982
        %vm870 = vcmp.lt.s32.totalorder %v345, 0
        %v871 = vand.u32 %v345, 2139095040
        %v872 = vshrl.u32 %v871, 23
        %v873 = vsub.s32 %v872, 127
        %v874 = vand.u32 2147483647, %v345
        %v875 = vand.u32 %v874, 8388607
        %v876 = vor.u32 %v875, 8388608
        %v877 = vsub.s32 0, %v876
        %v878 = vadd.s32 %v873, 1
        %vm879 = vcmp.gt.s32.totalorder %v878, 0
        %v880 = vsel %vm879, %v878, 0
        %v881 = vshrl.u32 %v880, 5
        %v882 = vand.u32 %v880, 31
        %v883 = vsub.s32 32, %v882
        %v884 = vshrl.u32 683565275, %v883
        %v885 = vshll.u32 683565275, %v882
        %v886 = vshrl.u32 2475754826, %v883
        %v887 = vor.u32 %v885, %v886
        %v888 = vshll.u32 2475754826, %v882
        %v889 = vshrl.u32 2131351028, %v883
        %v890 = vor.u32 %v888, %v889
        %v891 = vshll.u32 2131351028, %v882
        %v892 = vshrl.u32 2102212464, %v883
        %v893 = vor.u32 %v891, %v892
        %v894 = vshll.u32 2102212464, %v882
        %v895 = vshrl.u32 920167782, %v883
        %v896 = vor.u32 %v894, %v895
        %v897 = vshll.u32 920167782, %v882
        %v898 = vshrl.u32 1326507024, %v883
        %v899 = vor.u32 %v897, %v898
        %vm900 = vcmp.lt.s32.totalorder %v881, 1
        %vm901 = vcmp.lt.s32.totalorder %v881, 2
        %vm902 = vcmp.lt.s32.totalorder %v881, 3
        %vm903 = vcmp.lt.s32.totalorder %v881, 4
        %v904 = vsel %vm900, %v884, %v887
        %v905 = vsel %vm903, %v893, 2102212464
        %v906 = vsel %vm902, %v890, %v905
        %v907 = vsel %vm901, %v904, %v906
        %v908 = vsel %vm900, %v887, %v890
        %v909 = vsel %vm903, %v896, 920167782
        %v910 = vsel %vm902, %v893, %v909
        %v911 = vsel %vm901, %v908, %v910
        %v912 = vsel %vm900, %v890, %v893
        %v913 = vsel %vm903, %v899, 1326507024
        %v914 = vsel %vm902, %v896, %v913
        %v915 = vsel %vm901, %v912, %v914
        %v916 = vshll.u32 %v876, 8
        %v917 = vmul.u32.u64.compose %v916, %v915
        %v918 = vextract.low.u32 %v917
        %v919 = vextract.high.u32 %v917
        %v920 = vmul.u32.u64.compose %v916, %v911
        %v921 = vextract.low.u32 %v920
        %v922 = vextract.high.u32 %v920
        %v923 = vmul.u32 %v916, %v907
        %v924 = vadd.s32 %v919, %v921
        %vm925 = vc.u32 %v919, %v921
        %v926 = vadd.s32 %v922, 1
        %v927 = vsel %vm925, %v926, %v922
        %v928 = vadd.s32 %v923, %v927
        %v929 = vadd.s32 %v928, 536870912
        %v930 = vshrl.u32 %v929, 30
        %v931 = vshll.u32 %v930, 30
        %v932 = vsub.s32 %v928, %v931
        %vm933 = vcmp.lt.s32.totalorder %v932, 0
        %v934 = vsub.s32 0, %v932
        %v935 = vsel %vm933, %v934, %v932
        %v936 = vclz %v935
        %v937 = vsub.s32 %v936, 2
        %vm938 = vcmp.gt.s32.totalorder 0, %v937
        %v939 = vsel %vm938, 0, %v937
        %v940 = vsub.s32 32, %v939
        %v941 = vshll.u32 %v932, %v939
        %v942 = vshrl.u32 %v924, %v940
        %v943 = vor.u32 %v941, %v942
        %v944 = vsub.s32 4294967266, %v939
        %v945 = vadd.s32 %v944, 127
        %v946 = vshll.u32 %v945, 23
        %v947 = vor.u32 4788187, %v946
        %v948 = vand.u32 2147483647, %v947
        %v950 = vcvt.s32.f32 %v943
        %v951 = vmul.f32 %v950, %v948
        %v952 = vxor.u32 %v951, 2147483648
        %v953 = vsel %vm870, %v952, %v951
        %v954 = vsub.s32 4, %v930
        %v955 = vsel %vm870, %v954, %v930
        %v956 = vsel %vm869, %v345, %v953
        %v957 = vsel %vm869, 0, %v955
        %v958 = vcosq.f32.pop %v956
        %v959 = vsinq.f32.pop %v956
        %vm960 = vweird.f32 %v345
        %v961 = vadd.s32 %v957, 3
        %v962 = vand.u32 %v961, 3
        %vm963 = vcmp.lt.s32.totalorder %v962, 2
        %vm964 = vcmp.eq.s32.totalorder %v962, 0
        %v965 = vxor.u32 %v959, 2147483648
        %v966 = vsel %vm964, %v958, %v965
        %vm967 = vcmp.eq.s32.totalorder %v962, 2
        %v968 = vxor.u32 %v958, 2147483648
        %v969 = vsel %vm967, %v968, %v959
        %v970 = vsel %vm963, %v966, %v969
        %v971 = vsel %vm960, nan, %v970
        %v972 = vand.u32 2147483647, %v346
        %vm973 = vcmp.le.f32.partialorder %v972, 0.7853982
        %vm974 = vcmp.lt.s32.totalorder %v346, 0
        %v975 = vand.u32 %v346, 2139095040
        %v976 = vshrl.u32 %v975, 23
        %v977 = vsub.s32 %v976, 127
        %v978 = vand.u32 2147483647, %v346
        %v979 = vand.u32 %v978, 8388607
        %v980 = vor.u32 %v979, 8388608
        %v981 = vsub.s32 0, %v980
        %v982 = vadd.s32 %v977, 1
        %vm983 = vcmp.gt.s32.totalorder %v982, 0
        %v984 = vsel %vm983, %v982, 0
        %v985 = vshrl.u32 %v984, 5
        %v986 = vand.u32 %v984, 31
        %v987 = vsub.s32 32, %v986
        %v988 = vshrl.u32 683565275, %v987
        %v989 = vshll.u32 683565275, %v986
        %v990 = vshrl.u32 2475754826, %v987
        %v991 = vor.u32 %v989, %v990
        %v992 = vshll.u32 2475754826, %v986
        %v993 = vshrl.u32 2131351028, %v987
        %v994 = vor.u32 %v992, %v993
        %v995 = vshll.u32 2131351028, %v986
        %v996 = vshrl.u32 2102212464, %v987
        %v997 = vor.u32 %v995, %v996
        %v998 = vshll.u32 2102212464, %v986
        %v999 = vshrl.u32 920167782, %v987
        %v1000 = vor.u32 %v998, %v999
        %v1001 = vshll.u32 920167782, %v986
        %v1002 = vshrl.u32 1326507024, %v987
        %v1003 = vor.u32 %v1001, %v1002
        %vm1004 = vcmp.lt.s32.totalorder %v985, 1
        %vm1005 = vcmp.lt.s32.totalorder %v985, 2
        %vm1006 = vcmp.lt.s32.totalorder %v985, 3
        %vm1007 = vcmp.lt.s32.totalorder %v985, 4
        %v1008 = vsel %vm1004, %v988, %v991
        %v1009 = vsel %vm1007, %v997, 2102212464
        %v1010 = vsel %vm1006, %v994, %v1009
        %v1011 = vsel %vm1005, %v1008, %v1010
        %v1012 = vsel %vm1004, %v991, %v994
        %v1013 = vsel %vm1007, %v1000, 920167782
        %v1014 = vsel %vm1006, %v997, %v1013
        %v1015 = vsel %vm1005, %v1012, %v1014
        %v1016 = vsel %vm1004, %v994, %v997
        %v1017 = vsel %vm1007, %v1003, 1326507024
        %v1018 = vsel %vm1006, %v1000, %v1017
        %v1019 = vsel %vm1005, %v1016, %v1018
        %v1020 = vshll.u32 %v980, 8
        %v1021 = vmul.u32.u64.compose %v1020, %v1019
        %v1022 = vextract.low.u32 %v1021
        %v1023 = vextract.high.u32 %v1021
        %v1024 = vmul.u32.u64.compose %v1020, %v1015
        %v1025 = vextract.low.u32 %v1024
        %v1026 = vextract.high.u32 %v1024
        %v1027 = vmul.u32 %v1020, %v1011
        %v1028 = vadd.s32 %v1023, %v1025
        %vm1029 = vc.u32 %v1023, %v1025
        %v1030 = vadd.s32 %v1026, 1
        %v1031 = vsel %vm1029, %v1030, %v1026
        %v1032 = vadd.s32 %v1027, %v1031
        %v1033 = vadd.s32 %v1032, 536870912
        %v1034 = vshrl.u32 %v1033, 30
        %v1035 = vshll.u32 %v1034, 30
        %v1036 = vsub.s32 %v1032, %v1035
        %vm1037 = vcmp.lt.s32.totalorder %v1036, 0
        %v1038 = vsub.s32 0, %v1036
        %v1039 = vsel %vm1037, %v1038, %v1036
        %v1040 = vclz %v1039
        %v1041 = vsub.s32 %v1040, 2
        %vm1042 = vcmp.gt.s32.totalorder 0, %v1041
        %v1043 = vsel %vm1042, 0, %v1041
        %v1044 = vsub.s32 32, %v1043
        %v1045 = vshll.u32 %v1036, %v1043
        %v1046 = vshrl.u32 %v1028, %v1044
        %v1047 = vor.u32 %v1045, %v1046
        %v1048 = vsub.s32 4294967266, %v1043
        %v1049 = vadd.s32 %v1048, 127
        %v1050 = vshll.u32 %v1049, 23
        %v1051 = vor.u32 4788187, %v1050
        %v1052 = vand.u32 2147483647, %v1051
        %v1054 = vcvt.s32.f32 %v1047
        %v1055 = vmul.f32 %v1054, %v1052
        %v1056 = vxor.u32 %v1055, 2147483648
        %v1057 = vsel %vm974, %v1056, %v1055
        %v1058 = vsub.s32 4, %v1034
        %v1059 = vsel %vm974, %v1058, %v1034
        %v1060 = vsel %vm973, %v346, %v1057
        %v1061 = vsel %vm973, 0, %v1059
        %v1062 = vcosq.f32.pop %v1060
        %v1063 = vsinq.f32.pop %v1060
        %vm1064 = vweird.f32 %v346
        %v1065 = vadd.s32 %v1061, 3
        %v1066 = vand.u32 %v1065, 3
        %vm1067 = vcmp.lt.s32.totalorder %v1066, 2
        %vm1068 = vcmp.eq.s32.totalorder %v1066, 0
        %v1069 = vxor.u32 %v1063, 2147483648
        %v1070 = vsel %vm1068, %v1062, %v1069
        %vm1071 = vcmp.eq.s32.totalorder %v1066, 2
        %v1072 = vxor.u32 %v1062, 2147483648
        %v1073 = vsel %vm1071, %v1072, %v1063
        %v1074 = vsel %vm1067, %v1070, %v1073
        %v1075 = vsel %vm1064, nan, %v1074
        %v1076 = vand.u32 2147483647, %v347
        %vm1077 = vcmp.le.f32.partialorder %v1076, 0.7853982
        %vm1078 = vcmp.lt.s32.totalorder %v347, 0
        %v1079 = vand.u32 %v347, 2139095040
        %v1080 = vshrl.u32 %v1079, 23
        %v1081 = vsub.s32 %v1080, 127
        %v1082 = vand.u32 2147483647, %v347
        %v1083 = vand.u32 %v1082, 8388607
        %v1084 = vor.u32 %v1083, 8388608
        %v1085 = vsub.s32 0, %v1084
        %v1086 = vadd.s32 %v1081, 1
        %vm1087 = vcmp.gt.s32.totalorder %v1086, 0
        %v1088 = vsel %vm1087, %v1086, 0
        %v1089 = vshrl.u32 %v1088, 5
        %v1090 = vand.u32 %v1088, 31
        %v1091 = vsub.s32 32, %v1090
        %v1092 = vshrl.u32 683565275, %v1091
        %v1093 = vshll.u32 683565275, %v1090
        %v1094 = vshrl.u32 2475754826, %v1091
        %v1095 = vor.u32 %v1093, %v1094
        %v1096 = vshll.u32 2475754826, %v1090
        %v1097 = vshrl.u32 2131351028, %v1091
        %v1098 = vor.u32 %v1096, %v1097
        %v1099 = vshll.u32 2131351028, %v1090
        %v1100 = vshrl.u32 2102212464, %v1091
        %v1101 = vor.u32 %v1099, %v1100
        %v1102 = vshll.u32 2102212464, %v1090
        %v1103 = vshrl.u32 920167782, %v1091
        %v1104 = vor.u32 %v1102, %v1103
        %v1105 = vshll.u32 920167782, %v1090
        %v1106 = vshrl.u32 1326507024, %v1091
        %v1107 = vor.u32 %v1105, %v1106
        %vm1108 = vcmp.lt.s32.totalorder %v1089, 1
        %vm1109 = vcmp.lt.s32.totalorder %v1089, 2
        %vm1110 = vcmp.lt.s32.totalorder %v1089, 3
        %vm1111 = vcmp.lt.s32.totalorder %v1089, 4
        %v1112 = vsel %vm1108, %v1092, %v1095
        %v1113 = vsel %vm1111, %v1101, 2102212464
        %v1114 = vsel %vm1110, %v1098, %v1113
        %v1115 = vsel %vm1109, %v1112, %v1114
        %v1116 = vsel %vm1108, %v1095, %v1098
        %v1117 = vsel %vm1111, %v1104, 920167782
        %v1118 = vsel %vm1110, %v1101, %v1117
        %v1119 = vsel %vm1109, %v1116, %v1118
        %v1120 = vsel %vm1108, %v1098, %v1101
        %v1121 = vsel %vm1111, %v1107, 1326507024
        %v1122 = vsel %vm1110, %v1104, %v1121
        %v1123 = vsel %vm1109, %v1120, %v1122
        %v1124 = vshll.u32 %v1084, 8
        %v1125 = vmul.u32.u64.compose %v1124, %v1123
        %v1126 = vextract.low.u32 %v1125
        %v1127 = vextract.high.u32 %v1125
        %v1128 = vmul.u32.u64.compose %v1124, %v1119
        %v1129 = vextract.low.u32 %v1128
        %v1130 = vextract.high.u32 %v1128
        %v1131 = vmul.u32 %v1124, %v1115
        %v1132 = vadd.s32 %v1127, %v1129
        %vm1133 = vc.u32 %v1127, %v1129
        %v1134 = vadd.s32 %v1130, 1
        %v1135 = vsel %vm1133, %v1134, %v1130
        %v1136 = vadd.s32 %v1131, %v1135
        %v1137 = vadd.s32 %v1136, 536870912
        %v1138 = vshrl.u32 %v1137, 30
        %v1139 = vshll.u32 %v1138, 30
        %v1140 = vsub.s32 %v1136, %v1139
        %vm1141 = vcmp.lt.s32.totalorder %v1140, 0
        %v1142 = vsub.s32 0, %v1140
        %v1143 = vsel %vm1141, %v1142, %v1140
        %v1144 = vclz %v1143
        %v1145 = vsub.s32 %v1144, 2
        %vm1146 = vcmp.gt.s32.totalorder 0, %v1145
        %v1147 = vsel %vm1146, 0, %v1145
        %v1148 = vsub.s32 32, %v1147
        %v1149 = vshll.u32 %v1140, %v1147
        %v1150 = vshrl.u32 %v1132, %v1148
        %v1151 = vor.u32 %v1149, %v1150
        %v1152 = vsub.s32 4294967266, %v1147
        %v1153 = vadd.s32 %v1152, 127
        %v1154 = vshll.u32 %v1153, 23
        %v1155 = vor.u32 4788187, %v1154
        %v1156 = vand.u32 2147483647, %v1155
        %v1158 = vcvt.s32.f32 %v1151
        %v1159 = vmul.f32 %v1158, %v1156
        %v1160 = vxor.u32 %v1159, 2147483648
        %v1161 = vsel %vm1078, %v1160, %v1159
        %v1162 = vsub.s32 4, %v1138
        %v1163 = vsel %vm1078, %v1162, %v1138
        %v1164 = vsel %vm1077, %v347, %v1161
        %v1165 = vsel %vm1077, 0, %v1163
        %v1166 = vcosq.f32.pop %v1164
        %v1167 = vsinq.f32.pop %v1164
        %vm1168 = vweird.f32 %v347
        %v1169 = vadd.s32 %v1165, 3
        %v1170 = vand.u32 %v1169, 3
        %vm1171 = vcmp.lt.s32.totalorder %v1170, 2
        %vm1172 = vcmp.eq.s32.totalorder %v1170, 0
        %v1173 = vxor.u32 %v1167, 2147483648
        %v1174 = vsel %vm1172, %v1166, %v1173
        %vm1175 = vcmp.eq.s32.totalorder %v1170, 2
        %v1176 = vxor.u32 %v1166, 2147483648
        %v1177 = vsel %vm1175, %v1176, %v1167
        %v1178 = vsel %vm1171, %v1174, %v1177
        %v1179 = vsel %vm1168, nan, %v1178
        %v1180 = vld [vmem:[%s4 + $0x20] sm:$0xff]
        %v1181 = vld [vmem:[%s4 + $0x28] sm:$0xff]
        %v1182 = vld [vmem:[%s4 + $0x30] sm:$0xff]
        %v1183 = vld [vmem:[%s4 + $0x38] sm:$0xff]
        %v1184 = vld [vmem:[%s2] sm:$0xff]
        %v1185 = vld [vmem:[%s2 + $0x8] sm:$0xff]
        %v1186 = vld [vmem:[%s2 + $0x10] sm:$0xff]
        %v1187 = vld [vmem:[%s2 + $0x18] sm:$0xff]
        %1189 = vset.pattern.permute.xlu0 0
        %1190 = vperm.xlu0 %1189, %v1180
        %v1191 = vpop.permute.xlu0 %1190
        %1194 = vset.pattern.permute.xlu0 0
        %1195 = vperm.xlu0 %1194, %v1181
        %v1196 = vpop.permute.xlu0 %1195
        %1199 = vset.pattern.permute.xlu0 0
        %1200 = vperm.xlu0 %1199, %v1182
        %v1201 = vpop.permute.xlu0 %1200
        %1204 = vset.pattern.permute.xlu0 0
        %1205 = vperm.xlu0 %1204, %v1183
        %v1206 = vpop.permute.xlu0 %1205
        %vm1208 = vcmask 261120
        %v1210 = vsel %vm1208, %v1184, 0
        %v1213 = vsel %vm1208, %v1185, 0
        %v1216 = vsel %vm1208, %v1186, 0
        %v1219 = vsel %vm1208, %v1187, 0
        %v1221 = vand.u32 %v555, 4294901760
        %1222 = vmatprep.subr.mxu0 %v1221
        %v1223 = vand.u32 %v451, 4294901760
        %1224 = vmatpush1.msra.mxu0 %v1223
        %v1225 = vand.u32 %v763, 4294901760
        %1226 = vmatprep.subr.mxu0 %v1225
        %v1227 = vand.u32 %v659, 4294901760
        %1228 = vmatpush1.msra.mxu0 %v1227
        %v1229 = vand.u32 %v971, 4294901760
        %1230 = vmatprep.subr.mxu0 %v1229
        %v1231 = vand.u32 %v867, 4294901760
        %1232 = vmatpush1.msra.mxu0 %v1231
        %v1233 = vand.u32 %v1179, 4294901760
        %1234 = vmatprep.subr.mxu0 %v1233
        %v1235 = vand.u32 %v1075, 4294901760
        %1236 = vmatpush1.msra.mxu0 %v1235
        %1237 = vmatprep.subr.mxu0 0.0
        %1238 = vmatpush1.msra.mxu0 0.0
        %1239 = vmatprep.subr.mxu0 0.0
        %1240 = vmatpush1.msra.mxu0 0.0
        %1241 = vmatprep.subr.mxu0 0.0
        %1242 = vmatpush1.msra.mxu0 0.0
        %1243 = vmatprep.subr.mxu0 0.0
        %1244 = vmatpush1.msra.mxu0 0.0
        %1245 = vmatprep.subr.mxu0 0.0
        %1246 = vmatpush1.msra.mxu0 0.0
        %1247 = vmatprep.subr.mxu0 0.0
        %1248 = vmatpush1.msra.mxu0 0.0
        %1249 = vmatprep.subr.mxu0 0.0
        %1250 = vmatpush1.msra.mxu0 0.0
        %1251 = vmatprep.subr.mxu0 0.0
        %1252 = vmatpush1.msra.mxu0 0.0
        %1253 = vmatprep.subr.mxu0 0.0
        %1254 = vmatpush1.msra.mxu0 0.0
        %1255 = vmatprep.subr.mxu0 0.0
        %1256 = vmatpush1.msra.mxu0 0.0
        %1257 = vmatprep.subr.mxu0 0.0
        %1258 = vmatpush1.msra.mxu0 0.0
        %1259 = vmatprep.subr.mxu0 0.0
        %1260 = vmatpush1.msra.mxu0 0.0
        %1261 = vmatprep.subr.mxu0 0.0
        %1262 = vmatpush1.msra.mxu0 0.0
        %1263 = vmatprep.subr.mxu0 0.0
        %1264 = vmatpush1.msra.mxu0 0.0
        %1265 = vmatprep.subr.mxu0 0.0
        %1266 = vmatpush1.msra.mxu0 0.0
        %1267 = vmatprep.subr.mxu0 0.0
        %1268 = vmatpush1.msra.mxu0 0.0
        %1269 = vmatprep.subr.mxu0 0.0
        %1270 = vmatpush1.msra.mxu0 0.0
        %1271 = vmatprep.subr.mxu0 0.0
        %1272 = vmatpush1.msra.mxu0 0.0
        %1273 = vmatprep.subr.mxu0 0.0
        %1274 = vmatpush1.msra.mxu0 0.0
        %1275 = vmatprep.subr.mxu0 0.0
        %1276 = vmatpush1.msra.mxu0 0.0
        %1277 = vmatprep.subr.mxu0 0.0
        %1278 = vmatpush1.msra.mxu0 0.0
        %1279 = vmatprep.subr.mxu0 0.0
        %1280 = vmatpush1.msra.mxu0 0.0
        %1281 = vmatprep.subr.mxu0 0.0
        %1282 = vmatpush1.msra.mxu0 0.0
        %1283 = vmatprep.subr.mxu0 0.0
        %1284 = vmatpush1.msra.mxu0 0.0
        %1285 = vmatprep.subr.mxu0 0.0
        %1286 = vmatpush1.msra.mxu0 0.0
        %1287 = vmatprep.subr.mxu0 0.0
        %1288 = vmatpush1.msra.mxu0 0.0
        %1289 = vmatprep.subr.mxu0 0.0
        %1290 = vmatpush1.msra.mxu0 0.0
        %1291 = vmatprep.subr.mxu0 0.0
        %1292 = vmatpush1.msra.mxu0 0.0
        %1293 = vmatprep.mubr.f32.mxu0 0.0
        %v1294 = vand.u32 %v1210, 4294901760
        %v1295 = vsub.f32 %v1210, %v1294
        %v1296 = vand.u32 %v1295, 4294901760
        %v1297 = vsub.f32 %v1295, %v1296
        %v1298 = vand.u32 %v1297, 4294901760
        %1299 = vmatmul.mubr.f32.gmra.mrb[0].mxu0 %v1298
        %v1300 = vpop.f32.mrb[0].mxu0
        %v1301 = vadd.f32 %v1191, %v1300
        %v1302 = vpop.f32.mrb[0].mxu0
        %v1303 = vadd.f32 %v1191, %v1302
        %1304 = vmatprep.mubr.f32.mxu0 0.0
        %v1305 = vand.u32 %v1213, 4294901760
        %v1306 = vsub.f32 %v1213, %v1305
        %v1307 = vand.u32 %v1306, 4294901760
        %v1308 = vsub.f32 %v1306, %v1307
        %v1309 = vand.u32 %v1308, 4294901760
        %1310 = vmatmul.mubr.f32.gmra.mrb[0].mxu0 %v1309
        %v1311 = vpop.f32.mrb[0].mxu0
        %v1312 = vadd.f32 %v1196, %v1311
        %v1313 = vpop.f32.mrb[0].mxu0
        %v1314 = vadd.f32 %v1196, %v1313
        %1315 = vmatprep.mubr.f32.mxu0 0.0
        %v1316 = vand.u32 %v1216, 4294901760
        %v1317 = vsub.f32 %v1216, %v1316
        %v1318 = vand.u32 %v1317, 4294901760
        %v1319 = vsub.f32 %v1317, %v1318
        %v1320 = vand.u32 %v1319, 4294901760
        %1321 = vmatmul.mubr.f32.gmra.mrb[0].mxu0 %v1320
        %v1322 = vpop.f32.mrb[0].mxu0
        %v1323 = vadd.f32 %v1201, %v1322
        %v1324 = vpop.f32.mrb[0].mxu0
        %v1325 = vadd.f32 %v1201, %v1324
        %1326 = vmatprep.mubr.f32.mxu0 0.0
        %v1327 = vand.u32 %v1219, 4294901760
        %v1328 = vsub.f32 %v1219, %v1327
        %v1329 = vand.u32 %v1328, 4294901760
        %v1330 = vsub.f32 %v1328, %v1329
        %v1331 = vand.u32 %v1330, 4294901760
        %1332 = vmatmul.mubr.f32.gmra.mrb[0].mxu0 %v1331
        %v1333 = vpop.f32.mrb[0].mxu0
        %v1334 = vadd.f32 %v1206, %v1333
        %v1335 = vpop.f32.mrb[0].mxu0
        %v1336 = vadd.f32 %v1206, %v1335
        %1337 = vdwg.mxu0
        %v1338 = vand.u32 %v555, 4294901760
        %v1339 = vsub.f32 %v555, %v1338
        %v1340 = vand.u32 %v1339, 4294901760
        %v1341 = vsub.f32 %v1339, %v1340
        %v1342 = vand.u32 %v1341, 4294901760
        %1343 = vmatprep.subr.mxu0 %v1342
        %v1344 = vand.u32 %v451, 4294901760
        %v1345 = vsub.f32 %v451, %v1344
        %v1346 = vand.u32 %v1345, 4294901760
        %v1347 = vsub.f32 %v1345, %v1346
        %v1348 = vand.u32 %v1347, 4294901760
        %1349 = vmatpush1.msra.mxu0 %v1348
        %v1350 = vand.u32 %v763, 4294901760
        %v1351 = vsub.f32 %v763, %v1350
        %v1352 = vand.u32 %v1351, 4294901760
        %v1353 = vsub.f32 %v1351, %v1352
        %v1354 = vand.u32 %v1353, 4294901760
        %1355 = vmatprep.subr.mxu0 %v1354
        %v1356 = vand.u32 %v659, 4294901760
        %v1357 = vsub.f32 %v659, %v1356
        %v1358 = vand.u32 %v1357, 4294901760
        %v1359 = vsub.f32 %v1357, %v1358
        %v1360 = vand.u32 %v1359, 4294901760
        %1361 = vmatpush1.msra.mxu0 %v1360
        %v1362 = vand.u32 %v971, 4294901760
        %v1363 = vsub.f32 %v971, %v1362
        %v1364 = vand.u32 %v1363, 4294901760
        %v1365 = vsub.f32 %v1363, %v1364
        %v1366 = vand.u32 %v1365, 4294901760
        %1367 = vmatprep.subr.mxu0 %v1366
        %v1368 = vand.u32 %v867, 4294901760
        %v1369 = vsub.f32 %v867, %v1368
        %v1370 = vand.u32 %v1369, 4294901760
        %v1371 = vsub.f32 %v1369, %v1370
        %v1372 = vand.u32 %v1371, 4294901760
        %1373 = vmatpush1.msra.mxu0 %v1372
        %v1374 = vand.u32 %v1179, 4294901760
        %v1375 = vsub.f32 %v1179, %v1374
        %v1376 = vand.u32 %v1375, 4294901760
        %v1377 = vsub.f32 %v1375, %v1376
        %v1378 = vand.u32 %v1377, 4294901760
        %1379 = vmatprep.subr.mxu0 %v1378
        %v1380 = vand.u32 %v1075, 4294901760
        %v1381 = vsub.f32 %v1075, %v1380
        %v1382 = vand.u32 %v1381, 4294901760
        %v1383 = vsub.f32 %v1381, %v1382
        %v1384 = vand.u32 %v1383, 4294901760
        %1385 = vmatpush1.msra.mxu0 %v1384
        %1386 = vmatprep.subr.mxu0 0.0
        %1387 = vmatpush1.msra.mxu0 0.0
        %1388 = vmatprep.subr.mxu0 0.0
        %1389 = vmatpush1.msra.mxu0 0.0
        %1390 = vmatprep.subr.mxu0 0.0
        %1391 = vmatpush1.msra.mxu0 0.0
        %1392 = vmatprep.subr.mxu0 0.0
        %1393 = vmatpush1.msra.mxu0 0.0
        %1394 = vmatprep.subr.mxu0 0.0
        %1395 = vmatpush1.msra.mxu0 0.0
        %1396 = vmatprep.subr.mxu0 0.0
        %1397 = vmatpush1.msra.mxu0 0.0
        %1398 = vmatprep.subr.mxu0 0.0
        %1399 = vmatpush1.msra.mxu0 0.0
        %1400 = vmatprep.subr.mxu0 0.0
        %1401 = vmatpush1.msra.mxu0 0.0
        %1402 = vmatprep.subr.mxu0 0.0
        %1403 = vmatpush1.msra.mxu0 0.0
        %1404 = vmatprep.subr.mxu0 0.0
        %1405 = vmatpush1.msra.mxu0 0.0
        %1406 = vmatprep.subr.mxu0 0.0
        %1407 = vmatpush1.msra.mxu0 0.0
        %1408 = vmatprep.subr.mxu0 0.0
        %1409 = vmatpush1.msra.mxu0 0.0
        %1410 = vmatprep.subr.mxu0 0.0
        %1411 = vmatpush1.msra.mxu0 0.0
        %1412 = vmatprep.subr.mxu0 0.0
        %1413 = vmatpush1.msra.mxu0 0.0
        %1414 = vmatprep.subr.mxu0 0.0
        %1415 = vmatpush1.msra.mxu0 0.0
        %1416 = vmatprep.subr.mxu0 0.0
        %1417 = vmatpush1.msra.mxu0 0.0
        %1418 = vmatprep.subr.mxu0 0.0
        %1419 = vmatpush1.msra.mxu0 0.0
        %1420 = vmatprep.subr.mxu0 0.0
        %1421 = vmatpush1.msra.mxu0 0.0
        %1422 = vmatprep.subr.mxu0 0.0
        %1423 = vmatpush1.msra.mxu0 0.0
        %1424 = vmatprep.subr.mxu0 0.0
        %1425 = vmatpush1.msra.mxu0 0.0
        %1426 = vmatprep.subr.mxu0 0.0
        %1427 = vmatpush1.msra.mxu0 0.0
        %1428 = vmatprep.subr.mxu0 0.0
        %1429 = vmatpush1.msra.mxu0 0.0
        %1430 = vmatprep.subr.mxu0 0.0
        %1431 = vmatpush1.msra.mxu0 0.0
        %1432 = vmatprep.subr.mxu0 0.0
        %1433 = vmatpush1.msra.mxu0 0.0
        %1434 = vmatprep.subr.mxu0 0.0
        %1435 = vmatpush1.msra.mxu0 0.0
        %1436 = vmatprep.subr.mxu0 0.0
        %1437 = vmatpush1.msra.mxu0 0.0
        %1438 = vmatprep.subr.mxu0 0.0
        %1439 = vmatpush1.msra.mxu0 0.0
        %1440 = vmatprep.subr.mxu0 0.0
        %1441 = vmatpush1.msra.mxu0 0.0
        %1442 = vmatprep.mubr.f32.mxu0 0.0
        %v1443 = vand.u32 %v1210, 4294901760
        %1444 = vmatmul.mubr.f32.gmra.mrb[0].mxu0 %v1443
        %v1445 = vpop.f32.mrb[0].mxu0
        %v1446 = vadd.f32 %v1301, %v1445
        %v1447 = vpop.f32.mrb[0].mxu0
        %v1448 = vadd.f32 %v1303, %v1447
        %1449 = vmatprep.mubr.f32.mxu0 0.0
        %v1450 = vand.u32 %v1213, 4294901760
        %1451 = vmatmul.mubr.f32.gmra.mrb[0].mxu0 %v1450
        %v1452 = vpop.f32.mrb[0].mxu0
        %v1453 = vadd.f32 %v1312, %v1452
        %v1454 = vpop.f32.mrb[0].mxu0
        %v1455 = vadd.f32 %v1314, %v1454
        %1456 = vmatprep.mubr.f32.mxu0 0.0
        %v1457 = vand.u32 %v1216, 4294901760
        %1458 = vmatmul.mubr.f32.gmra.mrb[0].mxu0 %v1457
        %v1459 = vpop.f32.mrb[0].mxu0
        %v1460 = vadd.f32 %v1323, %v1459
        %v1461 = vpop.f32.mrb[0].mxu0
        %v1462 = vadd.f32 %v1325, %v1461
        %1463 = vmatprep.mubr.f32.mxu0 0.0
        %v1464 = vand.u32 %v1219, 4294901760
        %1465 = vmatmul.mubr.f32.gmra.mrb[0].mxu0 %v1464
        %v1466 = vpop.f32.mrb[0].mxu0
        %v1467 = vadd.f32 %v1334, %v1466
        %v1468 = vpop.f32.mrb[0].mxu0
        %v1469 = vadd.f32 %v1336, %v1468
        %1470 = vdwg.mxu0
        %v1471 = vand.u32 %v555, 4294901760
        %v1472 = vsub.f32 %v555, %v1471
        %1473 = vmatprep.subr.mxu0 %v1472
        %v1474 = vand.u32 %v451, 4294901760
        %v1475 = vsub.f32 %v451, %v1474
        %1476 = vmatpush1.msra.mxu0 %v1475
        %v1477 = vand.u32 %v763, 4294901760
        %v1478 = vsub.f32 %v763, %v1477
        %1479 = vmatprep.subr.mxu0 %v1478
        %v1480 = vand.u32 %v659, 4294901760
        %v1481 = vsub.f32 %v659, %v1480
        %1482 = vmatpush1.msra.mxu0 %v1481
        %v1483 = vand.u32 %v971, 4294901760
        %v1484 = vsub.f32 %v971, %v1483
        %1485 = vmatprep.subr.mxu0 %v1484
        %v1486 = vand.u32 %v867, 4294901760
        %v1487 = vsub.f32 %v867, %v1486
        %1488 = vmatpush1.msra.mxu0 %v1487
        %v1489 = vand.u32 %v1179, 4294901760
        %v1490 = vsub.f32 %v1179, %v1489
        %1491 = vmatprep.subr.mxu0 %v1490
        %v1492 = vand.u32 %v1075, 4294901760
        %v1493 = vsub.f32 %v1075, %v1492
        %1494 = vmatpush1.msra.mxu0 %v1493
        %1495 = vmatprep.subr.mxu0 0.0
        %1496 = vmatpush1.msra.mxu0 0.0
        %1497 = vmatprep.subr.mxu0 0.0
        %1498 = vmatpush1.msra.mxu0 0.0
        %1499 = vmatprep.subr.mxu0 0.0
        %1500 = vmatpush1.msra.mxu0 0.0
        %1501 = vmatprep.subr.mxu0 0.0
        %1502 = vmatpush1.msra.mxu0 0.0
        %1503 = vmatprep.subr.mxu0 0.0
        %1504 = vmatpush1.msra.mxu0 0.0
        %1505 = vmatprep.subr.mxu0 0.0
        %1506 = vmatpush1.msra.mxu0 0.0
        %1507 = vmatprep.subr.mxu0 0.0
        %1508 = vmatpush1.msra.mxu0 0.0
        %1509 = vmatprep.subr.mxu0 0.0
        %1510 = vmatpush1.msra.mxu0 0.0
        %1511 = vmatprep.subr.mxu0 0.0
        %1512 = vmatpush1.msra.mxu0 0.0
        %1513 = vmatprep.subr.mxu0 0.0
        %1514 = vmatpush1.msra.mxu0 0.0
        %1515 = vmatprep.subr.mxu0 0.0
        %1516 = vmatpush1.msra.mxu0 0.0
        %1517 = vmatprep.subr.mxu0 0.0
        %1518 = vmatpush1.msra.mxu0 0.0
        %1519 = vmatprep.subr.mxu0 0.0
        %1520 = vmatpush1.msra.mxu0 0.0
        %1521 = vmatprep.subr.mxu0 0.0
        %1522 = vmatpush1.msra.mxu0 0.0
        %1523 = vmatprep.subr.mxu0 0.0
        %1524 = vmatpush1.msra.mxu0 0.0
        %1525 = vmatprep.subr.mxu0 0.0
        %1526 = vmatpush1.msra.mxu0 0.0
        %1527 = vmatprep.subr.mxu0 0.0
        %1528 = vmatpush1.msra.mxu0 0.0
        %1529 = vmatprep.subr.mxu0 0.0
        %1530 = vmatpush1.msra.mxu0 0.0
        %1531 = vmatprep.subr.mxu0 0.0
        %1532 = vmatpush1.msra.mxu0 0.0
        %1533 = vmatprep.subr.mxu0 0.0
        %1534 = vmatpush1.msra.mxu0 0.0
        %1535 = vmatprep.subr.mxu0 0.0
        %1536 = vmatpush1.msra.mxu0 0.0
        %1537 = vmatprep.subr.mxu0 0.0
        %1538 = vmatpush1.msra.mxu0 0.0
        %1539 = vmatprep.subr.mxu0 0.0
        %1540 = vmatpush1.msra.mxu0 0.0
        %1541 = vmatprep.subr.mxu0 0.0
        %1542 = vmatpush1.msra.mxu0 0.0
        %1543 = vmatprep.subr.mxu0 0.0
        %1544 = vmatpush1.msra.mxu0 0.0
        %1545 = vmatprep.subr.mxu0 0.0
        %1546 = vmatpush1.msra.mxu0 0.0
        %1547 = vmatprep.subr.mxu0 0.0
        %1548 = vmatpush1.msra.mxu0 0.0
        %1549 = vmatprep.subr.mxu0 0.0
        %1550 = vmatpush1.msra.mxu0 0.0
        %1551 = vmatprep.mubr.f32.mxu0 0.0
        %v1552 = vand.u32 %v1210, 4294901760
        %v1553 = vsub.f32 %v1210, %v1552
        %1554 = vmatmul.mubr.f32.gmra.mrb[0].mxu0 %v1553
        %v1555 = vpop.f32.mrb[0].mxu0
        %v1556 = vadd.f32 %v1446, %v1555
        %v1557 = vpop.f32.mrb[0].mxu0
        %v1558 = vadd.f32 %v1448, %v1557
        %1559 = vmatprep.mubr.f32.mxu0 0.0
        %v1560 = vand.u32 %v1213, 4294901760
        %v1561 = vsub.f32 %v1213, %v1560
        %1562 = vmatmul.mubr.f32.gmra.mrb[0].mxu0 %v1561
        %v1563 = vpop.f32.mrb[0].mxu0
        %v1564 = vadd.f32 %v1453, %v1563
        %v1565 = vpop.f32.mrb[0].mxu0
        %v1566 = vadd.f32 %v1455, %v1565
        %1567 = vmatprep.mubr.f32.mxu0 0.0
        %v1568 = vand.u32 %v1216, 4294901760
        %v1569 = vsub.f32 %v1216, %v1568
        %1570 = vmatmul.mubr.f32.gmra.mrb[0].mxu0 %v1569
        %v1571 = vpop.f32.mrb[0].mxu0
        %v1572 = vadd.f32 %v1460, %v1571
        %v1573 = vpop.f32.mrb[0].mxu0
        %v1574 = vadd.f32 %v1462, %v1573
        %1575 = vmatprep.mubr.f32.mxu0 0.0
        %v1576 = vand.u32 %v1219, 4294901760
        %v1577 = vsub.f32 %v1219, %v1576
        %1578 = vmatmul.mubr.f32.gmra.mrb[0].mxu0 %v1577
        %v1579 = vpop.f32.mrb[0].mxu0
        %v1580 = vadd.f32 %v1467, %v1579
        %v1581 = vpop.f32.mrb[0].mxu0
        %v1582 = vadd.f32 %v1469, %v1581
        %1583 = vdwg.mxu0
        %v1584 = vand.u32 %v555, 4294901760
        %1585 = vmatprep.subr.mxu0 %v1584
        %v1586 = vand.u32 %v451, 4294901760
        %1587 = vmatpush1.msra.mxu0 %v1586
        %v1588 = vand.u32 %v763, 4294901760
        %1589 = vmatprep.subr.mxu0 %v1588
        %v1590 = vand.u32 %v659, 4294901760
        %1591 = vmatpush1.msra.mxu0 %v1590
        %v1592 = vand.u32 %v971, 4294901760
        %1593 = vmatprep.subr.mxu0 %v1592
        %v1594 = vand.u32 %v867, 4294901760
        %1595 = vmatpush1.msra.mxu0 %v1594
        %v1596 = vand.u32 %v1179, 4294901760
        %1597 = vmatprep.subr.mxu0 %v1596
        %v1598 = vand.u32 %v1075, 4294901760
        %1599 = vmatpush1.msra.mxu0 %v1598
        %1600 = vmatprep.subr.mxu0 0.0
        %1601 = vmatpush1.msra.mxu0 0.0
        %1602 = vmatprep.subr.mxu0 0.0
        %1603 = vmatpush1.msra.mxu0 0.0
        %1604 = vmatprep.subr.mxu0 0.0
        %1605 = vmatpush1.msra.mxu0 0.0
        %1606 = vmatprep.subr.mxu0 0.0
        %1607 = vmatpush1.msra.mxu0 0.0
        %1608 = vmatprep.subr.mxu0 0.0
        %1609 = vmatpush1.msra.mxu0 0.0
        %1610 = vmatprep.subr.mxu0 0.0
        %1611 = vmatpush1.msra.mxu0 0.0
        %1612 = vmatprep.subr.mxu0 0.0
        %1613 = vmatpush1.msra.mxu0 0.0
        %1614 = vmatprep.subr.mxu0 0.0
        %1615 = vmatpush1.msra.mxu0 0.0
        %1616 = vmatprep.subr.mxu0 0.0
        %1617 = vmatpush1.msra.mxu0 0.0
        %1618 = vmatprep.subr.mxu0 0.0
        %1619 = vmatpush1.msra.mxu0 0.0
        %1620 = vmatprep.subr.mxu0 0.0
        %1621 = vmatpush1.msra.mxu0 0.0
        %1622 = vmatprep.subr.mxu0 0.0
        %1623 = vmatpush1.msra.mxu0 0.0
        %1624 = vmatprep.subr.mxu0 0.0
        %1625 = vmatpush1.msra.mxu0 0.0
        %1626 = vmatprep.subr.mxu0 0.0
        %1627 = vmatpush1.msra.mxu0 0.0
        %1628 = vmatprep.subr.mxu0 0.0
        %1629 = vmatpush1.msra.mxu0 0.0
        %1630 = vmatprep.subr.mxu0 0.0
        %1631 = vmatpush1.msra.mxu0 0.0
        %1632 = vmatprep.subr.mxu0 0.0
        %1633 = vmatpush1.msra.mxu0 0.0
        %1634 = vmatprep.subr.mxu0 0.0
        %1635 = vmatpush1.msra.mxu0 0.0
        %1636 = vmatprep.subr.mxu0 0.0
        %1637 = vmatpush1.msra.mxu0 0.0
        %1638 = vmatprep.subr.mxu0 0.0
        %1639 = vmatpush1.msra.mxu0 0.0
        %1640 = vmatprep.subr.mxu0 0.0
        %1641 = vmatpush1.msra.mxu0 0.0
        %1642 = vmatprep.subr.mxu0 0.0
        %1643 = vmatpush1.msra.mxu0 0.0
        %1644 = vmatprep.subr.mxu0 0.0
        %1645 = vmatpush1.msra.mxu0 0.0
        %1646 = vmatprep.subr.mxu0 0.0
        %1647 = vmatpush1.msra.mxu0 0.0
        %1648 = vmatprep.subr.mxu0 0.0
        %1649 = vmatpush1.msra.mxu0 0.0
        %1650 = vmatprep.subr.mxu0 0.0
        %1651 = vmatpush1.msra.mxu0 0.0
        %1652 = vmatprep.subr.mxu0 0.0
        %1653 = vmatpush1.msra.mxu0 0.0
        %1654 = vmatprep.subr.mxu0 0.0
        %1655 = vmatpush1.msra.mxu0 0.0
        %1656 = vmatprep.mubr.f32.mxu0 0.0
        %v1657 = vand.u32 %v1210, 4294901760
        %v1658 = vsub.f32 %v1210, %v1657
        %v1659 = vand.u32 %v1658, 4294901760
        %1660 = vmatmul.mubr.f32.gmra.mrb[0].mxu0 %v1659
        %v1661 = vpop.f32.mrb[0].mxu0
        %v1662 = vadd.f32 %v1556, %v1661
        %v1663 = vpop.f32.mrb[0].mxu0
        %v1664 = vadd.f32 %v1558, %v1663
        %1665 = vmatprep.mubr.f32.mxu0 0.0
        %v1666 = vand.u32 %v1213, 4294901760
        %v1667 = vsub.f32 %v1213, %v1666
        %v1668 = vand.u32 %v1667, 4294901760
        %1669 = vmatmul.mubr.f32.gmra.mrb[0].mxu0 %v1668
        %v1670 = vpop.f32.mrb[0].mxu0
        %v1671 = vadd.f32 %v1564, %v1670
        %v1672 = vpop.f32.mrb[0].mxu0
        %v1673 = vadd.f32 %v1566, %v1672
        %1674 = vmatprep.mubr.f32.mxu0 0.0
        %v1675 = vand.u32 %v1216, 4294901760
        %v1676 = vsub.f32 %v1216, %v1675
        %v1677 = vand.u32 %v1676, 4294901760
        %1678 = vmatmul.mubr.f32.gmra.mrb[0].mxu0 %v1677
        %v1679 = vpop.f32.mrb[0].mxu0
        %v1680 = vadd.f32 %v1572, %v1679
        %v1681 = vpop.f32.mrb[0].mxu0
        %v1682 = vadd.f32 %v1574, %v1681
        %1683 = vmatprep.mubr.f32.mxu0 0.0
        %v1684 = vand.u32 %v1219, 4294901760
        %v1685 = vsub.f32 %v1219, %v1684
        %v1686 = vand.u32 %v1685, 4294901760
        %1687 = vmatmul.mubr.f32.gmra.mrb[0].mxu0 %v1686
        %v1688 = vpop.f32.mrb[0].mxu0
        %v1689 = vadd.f32 %v1580, %v1688
        %v1690 = vpop.f32.mrb[0].mxu0
        %v1691 = vadd.f32 %v1582, %v1690
        %1692 = vdwg.mxu0
        %v1693 = vand.u32 %v555, 4294901760
        %v1694 = vsub.f32 %v555, %v1693
        %v1695 = vand.u32 %v1694, 4294901760
        %1696 = vmatprep.subr.mxu0 %v1695
        %v1697 = vand.u32 %v451, 4294901760
        %v1698 = vsub.f32 %v451, %v1697
        %v1699 = vand.u32 %v1698, 4294901760
        %1700 = vmatpush1.msra.mxu0 %v1699
        %v1701 = vand.u32 %v763, 4294901760
        %v1702 = vsub.f32 %v763, %v1701
        %v1703 = vand.u32 %v1702, 4294901760
        %1704 = vmatprep.subr.mxu0 %v1703
        %v1705 = vand.u32 %v659, 4294901760
        %v1706 = vsub.f32 %v659, %v1705
        %v1707 = vand.u32 %v1706, 4294901760
        %1708 = vmatpush1.msra.mxu0 %v1707
        %v1709 = vand.u32 %v971, 4294901760
        %v1710 = vsub.f32 %v971, %v1709
        %v1711 = vand.u32 %v1710, 4294901760
        %1712 = vmatprep.subr.mxu0 %v1711
        %v1713 = vand.u32 %v867, 4294901760
        %v1714 = vsub.f32 %v867, %v1713
        %v1715 = vand.u32 %v1714, 4294901760
        %1716 = vmatpush1.msra.mxu0 %v1715
        %v1717 = vand.u32 %v1179, 4294901760
        %v1718 = vsub.f32 %v1179, %v1717
        %v1719 = vand.u32 %v1718, 4294901760
        %1720 = vmatprep.subr.mxu0 %v1719
        %v1721 = vand.u32 %v1075, 4294901760
        %v1722 = vsub.f32 %v1075, %v1721
        %v1723 = vand.u32 %v1722, 4294901760
        %1724 = vmatpush1.msra.mxu0 %v1723
        %1725 = vmatprep.subr.mxu0 0.0
        %1726 = vmatpush1.msra.mxu0 0.0
        %1727 = vmatprep.subr.mxu0 0.0
        %1728 = vmatpush1.msra.mxu0 0.0
        %1729 = vmatprep.subr.mxu0 0.0
        %1730 = vmatpush1.msra.mxu0 0.0
        %1731 = vmatprep.subr.mxu0 0.0
        %1732 = vmatpush1.msra.mxu0 0.0
        %1733 = vmatprep.subr.mxu0 0.0
        %1734 = vmatpush1.msra.mxu0 0.0
        %1735 = vmatprep.subr.mxu0 0.0
        %1736 = vmatpush1.msra.mxu0 0.0
        %1737 = vmatprep.subr.mxu0 0.0
        %1738 = vmatpush1.msra.mxu0 0.0
        %1739 = vmatprep.subr.mxu0 0.0
        %1740 = vmatpush1.msra.mxu0 0.0
        %1741 = vmatprep.subr.mxu0 0.0
        %1742 = vmatpush1.msra.mxu0 0.0
        %1743 = vmatprep.subr.mxu0 0.0
        %1744 = vmatpush1.msra.mxu0 0.0
        %1745 = vmatprep.subr.mxu0 0.0
        %1746 = vmatpush1.msra.mxu0 0.0
        %1747 = vmatprep.subr.mxu0 0.0
        %1748 = vmatpush1.msra.mxu0 0.0
        %1749 = vmatprep.subr.mxu0 0.0
        %1750 = vmatpush1.msra.mxu0 0.0
        %1751 = vmatprep.subr.mxu0 0.0
        %1752 = vmatpush1.msra.mxu0 0.0
        %1753 = vmatprep.subr.mxu0 0.0
        %1754 = vmatpush1.msra.mxu0 0.0
        %1755 = vmatprep.subr.mxu0 0.0
        %1756 = vmatpush1.msra.mxu0 0.0
        %1757 = vmatprep.subr.mxu0 0.0
        %1758 = vmatpush1.msra.mxu0 0.0
        %1759 = vmatprep.subr.mxu0 0.0
        %1760 = vmatpush1.msra.mxu0 0.0
        %1761 = vmatprep.subr.mxu0 0.0
        %1762 = vmatpush1.msra.mxu0 0.0
        %1763 = vmatprep.subr.mxu0 0.0
        %1764 = vmatpush1.msra.mxu0 0.0
        %1765 = vmatprep.subr.mxu0 0.0
        %1766 = vmatpush1.msra.mxu0 0.0
        %1767 = vmatprep.subr.mxu0 0.0
        %1768 = vmatpush1.msra.mxu0 0.0
        %1769 = vmatprep.subr.mxu0 0.0
        %1770 = vmatpush1.msra.mxu0 0.0
        %1771 = vmatprep.subr.mxu0 0.0
        %1772 = vmatpush1.msra.mxu0 0.0
        %1773 = vmatprep.subr.mxu0 0.0
        %1774 = vmatpush1.msra.mxu0 0.0
        %1775 = vmatprep.subr.mxu0 0.0
        %1776 = vmatpush1.msra.mxu0 0.0
        %1777 = vmatprep.subr.mxu0 0.0
        %1778 = vmatpush1.msra.mxu0 0.0
        %1779 = vmatprep.subr.mxu0 0.0
        %1780 = vmatpush1.msra.mxu0 0.0
        %1781 = vmatprep.mubr.f32.mxu0 0.0
        %v1782 = vand.u32 %v1210, 4294901760
        %1783 = vmatmul.mubr.f32.gmra.mrb[0].mxu0 %v1782
        %v1784 = vpop.f32.mrb[0].mxu0
        %v1785 = vadd.f32 %v1662, %v1784
        %v1786 = vpop.f32.mrb[0].mxu0
        %v1787 = vadd.f32 %v1664, %v1786
        %1788 = vmatprep.mubr.f32.mxu0 0.0
        %v1789 = vand.u32 %v1213, 4294901760
        %1790 = vmatmul.mubr.f32.gmra.mrb[0].mxu0 %v1789
        %v1791 = vpop.f32.mrb[0].mxu0
        %v1792 = vadd.f32 %v1671, %v1791
        %v1793 = vpop.f32.mrb[0].mxu0
        %v1794 = vadd.f32 %v1673, %v1793
        %1795 = vmatprep.mubr.f32.mxu0 0.0
        %v1796 = vand.u32 %v1216, 4294901760
        %1797 = vmatmul.mubr.f32.gmra.mrb[0].mxu0 %v1796
        %v1798 = vpop.f32.mrb[0].mxu0
        %v1799 = vadd.f32 %v1680, %v1798
        %v1800 = vpop.f32.mrb[0].mxu0
        %v1801 = vadd.f32 %v1682, %v1800
        %1802 = vmatprep.mubr.f32.mxu0 0.0
        %v1803 = vand.u32 %v1219, 4294901760
        %1804 = vmatmul.mubr.f32.gmra.mrb[0].mxu0 %v1803
        %v1805 = vpop.f32.mrb[0].mxu0
        %v1806 = vadd.f32 %v1689, %v1805
        %v1807 = vpop.f32.mrb[0].mxu0
        %v1808 = vadd.f32 %v1691, %v1807
        %1809 = vdwg.mxu0
        %v1810 = vand.u32 %v555, 4294901760
        %1811 = vmatprep.subr.mxu0 %v1810
        %v1812 = vand.u32 %v451, 4294901760
        %1813 = vmatpush1.msra.mxu0 %v1812
        %v1814 = vand.u32 %v763, 4294901760
        %1815 = vmatprep.subr.mxu0 %v1814
        %v1816 = vand.u32 %v659, 4294901760
        %1817 = vmatpush1.msra.mxu0 %v1816
        %v1818 = vand.u32 %v971, 4294901760
        %1819 = vmatprep.subr.mxu0 %v1818
        %v1820 = vand.u32 %v867, 4294901760
        %1821 = vmatpush1.msra.mxu0 %v1820
        %v1822 = vand.u32 %v1179, 4294901760
        %1823 = vmatprep.subr.mxu0 %v1822
        %v1824 = vand.u32 %v1075, 4294901760
        %1825 = vmatpush1.msra.mxu0 %v1824
        %1826 = vmatprep.subr.mxu0 0.0
        %1827 = vmatpush1.msra.mxu0 0.0
        %1828 = vmatprep.subr.mxu0 0.0
        %1829 = vmatpush1.msra.mxu0 0.0
        %1830 = vmatprep.subr.mxu0 0.0
        %1831 = vmatpush1.msra.mxu0 0.0
        %1832 = vmatprep.subr.mxu0 0.0
        %1833 = vmatpush1.msra.mxu0 0.0
        %1834 = vmatprep.subr.mxu0 0.0
        %1835 = vmatpush1.msra.mxu0 0.0
        %1836 = vmatprep.subr.mxu0 0.0
        %1837 = vmatpush1.msra.mxu0 0.0
        %1838 = vmatprep.subr.mxu0 0.0
        %1839 = vmatpush1.msra.mxu0 0.0
        %1840 = vmatprep.subr.mxu0 0.0
        %1841 = vmatpush1.msra.mxu0 0.0
        %1842 = vmatprep.subr.mxu0 0.0
        %1843 = vmatpush1.msra.mxu0 0.0
        %1844 = vmatprep.subr.mxu0 0.0
        %1845 = vmatpush1.msra.mxu0 0.0
        %1846 = vmatprep.subr.mxu0 0.0
        %1847 = vmatpush1.msra.mxu0 0.0
        %1848 = vmatprep.subr.mxu0 0.0
        %1849 = vmatpush1.msra.mxu0 0.0
        %1850 = vmatprep.subr.mxu0 0.0
        %1851 = vmatpush1.msra.mxu0 0.0
        %1852 = vmatprep.subr.mxu0 0.0
        %1853 = vmatpush1.msra.mxu0 0.0
        %1854 = vmatprep.subr.mxu0 0.0
        %1855 = vmatpush1.msra.mxu0 0.0
        %1856 = vmatprep.subr.mxu0 0.0
        %1857 = vmatpush1.msra.mxu0 0.0
        %1858 = vmatprep.subr.mxu0 0.0
        %1859 = vmatpush1.msra.mxu0 0.0
        %1860 = vmatprep.subr.mxu0 0.0
        %1861 = vmatpush1.msra.mxu0 0.0
        %1862 = vmatprep.subr.mxu0 0.0
        %1863 = vmatpush1.msra.mxu0 0.0
        %1864 = vmatprep.subr.mxu0 0.0
        %1865 = vmatpush1.msra.mxu0 0.0
        %1866 = vmatprep.subr.mxu0 0.0
        %1867 = vmatpush1.msra.mxu0 0.0
        %1868 = vmatprep.subr.mxu0 0.0
        %1869 = vmatpush1.msra.mxu0 0.0
        %1870 = vmatprep.subr.mxu0 0.0
        %1871 = vmatpush1.msra.mxu0 0.0
        %1872 = vmatprep.subr.mxu0 0.0
        %1873 = vmatpush1.msra.mxu0 0.0
        %1874 = vmatprep.subr.mxu0 0.0
        %1875 = vmatpush1.msra.mxu0 0.0
        %1876 = vmatprep.subr.mxu0 0.0
        %1877 = vmatpush1.msra.mxu0 0.0
        %1878 = vmatprep.subr.mxu0 0.0
        %1879 = vmatpush1.msra.mxu0 0.0
        %1880 = vmatprep.subr.mxu0 0.0
        %1881 = vmatpush1.msra.mxu0 0.0
        %1882 = vmatprep.mubr.f32.mxu0 0.0
        %v1883 = vand.u32 %v1210, 4294901760
        %1884 = vmatmul.mubr.f32.gmra.mrb[0].mxu0 %v1883
        %v1885 = vpop.f32.mrb[0].mxu0
        %v1886 = vadd.f32 %v1785, %v1885
        %v1887 = vpop.f32.mrb[0].mxu0
        %v1888 = vadd.f32 %v1787, %v1887
        %1889 = vmatprep.mubr.f32.mxu0 0.0
        %v1890 = vand.u32 %v1213, 4294901760
        %1891 = vmatmul.mubr.f32.gmra.mrb[0].mxu0 %v1890
        %v1892 = vpop.f32.mrb[0].mxu0
        %v1893 = vadd.f32 %v1792, %v1892
        %v1894 = vpop.f32.mrb[0].mxu0
        %v1895 = vadd.f32 %v1794, %v1894
        %1896 = vmatprep.mubr.f32.mxu0 0.0
        %v1897 = vand.u32 %v1216, 4294901760
        %1898 = vmatmul.mubr.f32.gmra.mrb[0].mxu0 %v1897
        %v1899 = vpop.f32.mrb[0].mxu0
        %v1900 = vadd.f32 %v1799, %v1899
        %v1901 = vpop.f32.mrb[0].mxu0
        %v1902 = vadd.f32 %v1801, %v1901
        %1903 = vmatprep.mubr.f32.mxu0 0.0
        %v1904 = vand.u32 %v1219, 4294901760
        %1905 = vmatmul.mubr.f32.gmra.mrb[0].mxu0 %v1904
        %v1906 = vpop.f32.mrb[0].mxu0
        %v1907 = vadd.f32 %v1806, %v1906
        %v1908 = vpop.f32.mrb[0].mxu0
        %v1909 = vadd.f32 %v1808, %v1908
        %1910 = vdwg.mxu0
        %v1911 = vand.u32 2147483647, %v1886
        %vm1912 = vcmp.le.f32.partialorder %v1911, 0.7853982
        %vm1913 = vcmp.lt.s32.totalorder %v1886, 0
        %v1914 = vand.u32 %v1886, 2139095040
        %v1915 = vshrl.u32 %v1914, 23
        %v1916 = vsub.s32 %v1915, 127
        %v1917 = vand.u32 2147483647, %v1886
        %v1918 = vand.u32 %v1917, 8388607
        %v1919 = vor.u32 %v1918, 8388608
        %v1920 = vsub.s32 0, %v1919
        %v1921 = vadd.s32 %v1916, 1
        %vm1922 = vcmp.gt.s32.totalorder %v1921, 0
        %v1923 = vsel %vm1922, %v1921, 0
        %v1924 = vshrl.u32 %v1923, 5
        %v1925 = vand.u32 %v1923, 31
        %v1926 = vsub.s32 32, %v1925
        %v1927 = vshrl.u32 683565275, %v1926
        %v1928 = vshll.u32 683565275, %v1925
        %v1929 = vshrl.u32 2475754826, %v1926
        %v1930 = vor.u32 %v1928, %v1929
        %v1931 = vshll.u32 2475754826, %v1925
        %v1932 = vshrl.u32 2131351028, %v1926
        %v1933 = vor.u32 %v1931, %v1932
        %v1934 = vshll.u32 2131351028, %v1925
        %v1935 = vshrl.u32 2102212464, %v1926
        %v1936 = vor.u32 %v1934, %v1935
        %v1937 = vshll.u32 2102212464, %v1925
        %v1938 = vshrl.u32 920167782, %v1926
        %v1939 = vor.u32 %v1937, %v1938
        %v1940 = vshll.u32 920167782, %v1925
        %v1941 = vshrl.u32 1326507024, %v1926
        %v1942 = vor.u32 %v1940, %v1941
        %vm1943 = vcmp.lt.s32.totalorder %v1924, 1
        %vm1944 = vcmp.lt.s32.totalorder %v1924, 2
        %vm1945 = vcmp.lt.s32.totalorder %v1924, 3
        %vm1946 = vcmp.lt.s32.totalorder %v1924, 4
        %v1947 = vsel %vm1943, %v1927, %v1930
        %v1948 = vsel %vm1946, %v1936, 2102212464
        %v1949 = vsel %vm1945, %v1933, %v1948
        %v1950 = vsel %vm1944, %v1947, %v1949
        %v1951 = vsel %vm1943, %v1930, %v1933
        %v1952 = vsel %vm1946, %v1939, 920167782
        %v1953 = vsel %vm1945, %v1936, %v1952
        %v1954 = vsel %vm1944, %v1951, %v1953
        %v1955 = vsel %vm1943, %v1933, %v1936
        %v1956 = vsel %vm1946, %v1942, 1326507024
        %v1957 = vsel %vm1945, %v1939, %v1956
        %v1958 = vsel %vm1944, %v1955, %v1957
        %v1959 = vshll.u32 %v1919, 8
        %v1960 = vmul.u32.u64.compose %v1959, %v1958
        %v1961 = vextract.low.u32 %v1960
        %v1962 = vextract.high.u32 %v1960
        %v1963 = vmul.u32.u64.compose %v1959, %v1954
        %v1964 = vextract.low.u32 %v1963
        %v1965 = vextract.high.u32 %v1963
        %v1966 = vmul.u32 %v1959, %v1950
        %v1967 = vadd.s32 %v1962, %v1964
        %vm1968 = vc.u32 %v1962, %v1964
        %v1969 = vadd.s32 %v1965, 1
        %v1970 = vsel %vm1968, %v1969, %v1965
        %v1971 = vadd.s32 %v1966, %v1970
        %v1972 = vadd.s32 %v1971, 536870912
        %v1973 = vshrl.u32 %v1972, 30
        %v1974 = vshll.u32 %v1973, 30
        %v1975 = vsub.s32 %v1971, %v1974
        %vm1976 = vcmp.lt.s32.totalorder %v1975, 0
        %v1977 = vsub.s32 0, %v1975
        %v1978 = vsel %vm1976, %v1977, %v1975
        %v1979 = vclz %v1978
        %v1980 = vsub.s32 %v1979, 2
        %vm1981 = vcmp.gt.s32.totalorder 0, %v1980
        %v1982 = vsel %vm1981, 0, %v1980
        %v1983 = vsub.s32 32, %v1982
        %v1984 = vshll.u32 %v1975, %v1982
        %v1985 = vshrl.u32 %v1967, %v1983
        %v1986 = vor.u32 %v1984, %v1985
        %v1987 = vsub.s32 4294967266, %v1982
        %v1988 = vadd.s32 %v1987, 127
        %v1989 = vshll.u32 %v1988, 23
        %v1990 = vor.u32 4788187, %v1989
        %v1991 = vand.u32 2147483647, %v1990
        %v1993 = vcvt.s32.f32 %v1986
        %v1994 = vmul.f32 %v1993, %v1991
        %v1995 = vxor.u32 %v1994, 2147483648
        %v1996 = vsel %vm1913, %v1995, %v1994
        %v1997 = vsub.s32 4, %v1973
        %v1998 = vsel %vm1913, %v1997, %v1973
        %v1999 = vsel %vm1912, %v1886, %v1996
        %v2000 = vsel %vm1912, 0, %v1998
        %v2001 = vcosq.f32.pop %v1999
        %v2002 = vsinq.f32.pop %v1999
        %vm2003 = vweird.f32 %v1886
        %v2004 = vadd.s32 %v2000, 3
        %v2005 = vand.u32 %v2004, 3
        %vm2006 = vcmp.lt.s32.totalorder %v2005, 2
        %vm2007 = vcmp.eq.s32.totalorder %v2005, 0
        %v2008 = vxor.u32 %v2002, 2147483648
        %v2009 = vsel %vm2007, %v2001, %v2008
        %vm2010 = vcmp.eq.s32.totalorder %v2005, 2
        %v2011 = vxor.u32 %v2001, 2147483648
        %v2012 = vsel %vm2010, %v2011, %v2002
        %v2013 = vsel %vm2006, %v2009, %v2012
        %v2014 = vsel %vm2003, nan, %v2013
        %v2015 = vand.u32 2147483647, %v1888
        %vm2016 = vcmp.le.f32.partialorder %v2015, 0.7853982
        %vm2017 = vcmp.lt.s32.totalorder %v1888, 0
        %v2018 = vand.u32 %v1888, 2139095040
        %v2019 = vshrl.u32 %v2018, 23
        %v2020 = vsub.s32 %v2019, 127
        %v2021 = vand.u32 2147483647, %v1888
        %v2022 = vand.u32 %v2021, 8388607
        %v2023 = vor.u32 %v2022, 8388608
        %v2024 = vsub.s32 0, %v2023
        %v2025 = vadd.s32 %v2020, 1
        %vm2026 = vcmp.gt.s32.totalorder %v2025, 0
        %v2027 = vsel %vm2026, %v2025, 0
        %v2028 = vshrl.u32 %v2027, 5
        %v2029 = vand.u32 %v2027, 31
        %v2030 = vsub.s32 32, %v2029
        %v2031 = vshrl.u32 683565275, %v2030
        %v2032 = vshll.u32 683565275, %v2029
        %v2033 = vshrl.u32 2475754826, %v2030
        %v2034 = vor.u32 %v2032, %v2033
        %v2035 = vshll.u32 2475754826, %v2029
        %v2036 = vshrl.u32 2131351028, %v2030
        %v2037 = vor.u32 %v2035, %v2036
        %v2038 = vshll.u32 2131351028, %v2029
        %v2039 = vshrl.u32 2102212464, %v2030
        %v2040 = vor.u32 %v2038, %v2039
        %v2041 = vshll.u32 2102212464, %v2029
        %v2042 = vshrl.u32 920167782, %v2030
        %v2043 = vor.u32 %v2041, %v2042
        %v2044 = vshll.u32 920167782, %v2029
        %v2045 = vshrl.u32 1326507024, %v2030
        %v2046 = vor.u32 %v2044, %v2045
        %vm2047 = vcmp.lt.s32.totalorder %v2028, 1
        %vm2048 = vcmp.lt.s32.totalorder %v2028, 2
        %vm2049 = vcmp.lt.s32.totalorder %v2028, 3
        %vm2050 = vcmp.lt.s32.totalorder %v2028, 4
        %v2051 = vsel %vm2047, %v2031, %v2034
        %v2052 = vsel %vm2050, %v2040, 2102212464
        %v2053 = vsel %vm2049, %v2037, %v2052
        %v2054 = vsel %vm2048, %v2051, %v2053
        %v2055 = vsel %vm2047, %v2034, %v2037
        %v2056 = vsel %vm2050, %v2043, 920167782
        %v2057 = vsel %vm2049, %v2040, %v2056
        %v2058 = vsel %vm2048, %v2055, %v2057
        %v2059 = vsel %vm2047, %v2037, %v2040
        %v2060 = vsel %vm2050, %v2046, 1326507024
        %v2061 = vsel %vm2049, %v2043, %v2060
        %v2062 = vsel %vm2048, %v2059, %v2061
        %v2063 = vshll.u32 %v2023, 8
        %v2064 = vmul.u32.u64.compose %v2063, %v2062
        %v2065 = vextract.low.u32 %v2064
        %v2066 = vextract.high.u32 %v2064
        %v2067 = vmul.u32.u64.compose %v2063, %v2058
        %v2068 = vextract.low.u32 %v2067
        %v2069 = vextract.high.u32 %v2067
        %v2070 = vmul.u32 %v2063, %v2054
        %v2071 = vadd.s32 %v2066, %v2068
        %vm2072 = vc.u32 %v2066, %v2068
        %v2073 = vadd.s32 %v2069, 1
        %v2074 = vsel %vm2072, %v2073, %v2069
        %v2075 = vadd.s32 %v2070, %v2074
        %v2076 = vadd.s32 %v2075, 536870912
        %v2077 = vshrl.u32 %v2076, 30
        %v2078 = vshll.u32 %v2077, 30
        %v2079 = vsub.s32 %v2075, %v2078
        %vm2080 = vcmp.lt.s32.totalorder %v2079, 0
        %v2081 = vsub.s32 0, %v2079
        %v2082 = vsel %vm2080, %v2081, %v2079
        %v2083 = vclz %v2082
        %v2084 = vsub.s32 %v2083, 2
        %vm2085 = vcmp.gt.s32.totalorder 0, %v2084
        %v2086 = vsel %vm2085, 0, %v2084
        %v2087 = vsub.s32 32, %v2086
        %v2088 = vshll.u32 %v2079, %v2086
        %v2089 = vshrl.u32 %v2071, %v2087
        %v2090 = vor.u32 %v2088, %v2089
        %v2091 = vsub.s32 4294967266, %v2086
        %v2092 = vadd.s32 %v2091, 127
        %v2093 = vshll.u32 %v2092, 23
        %v2094 = vor.u32 4788187, %v2093
        %v2095 = vand.u32 2147483647, %v2094
        %v2097 = vcvt.s32.f32 %v2090
        %v2098 = vmul.f32 %v2097, %v2095
        %v2099 = vxor.u32 %v2098, 2147483648
        %v2100 = vsel %vm2017, %v2099, %v2098
        %v2101 = vsub.s32 4, %v2077
        %v2102 = vsel %vm2017, %v2101, %v2077
        %v2103 = vsel %vm2016, %v1888, %v2100
        %v2104 = vsel %vm2016, 0, %v2102
        %v2105 = vcosq.f32.pop %v2103
        %v2106 = vsinq.f32.pop %v2103
        %vm2107 = vweird.f32 %v1888
        %v2108 = vadd.s32 %v2104, 3
        %v2109 = vand.u32 %v2108, 3
        %vm2110 = vcmp.lt.s32.totalorder %v2109, 2
        %vm2111 = vcmp.eq.s32.totalorder %v2109, 0
        %v2112 = vxor.u32 %v2106, 2147483648
        %v2113 = vsel %vm2111, %v2105, %v2112
        %vm2114 = vcmp.eq.s32.totalorder %v2109, 2
        %v2115 = vxor.u32 %v2105, 2147483648
        %v2116 = vsel %vm2114, %v2115, %v2106
        %v2117 = vsel %vm2110, %v2113, %v2116
        %v2118 = vsel %vm2107, nan, %v2117
        %v2119 = vand.u32 2147483647, %v1893
        %vm2120 = vcmp.le.f32.partialorder %v2119, 0.7853982
        %vm2121 = vcmp.lt.s32.totalorder %v1893, 0
        %v2122 = vand.u32 %v1893, 2139095040
        %v2123 = vshrl.u32 %v2122, 23
        %v2124 = vsub.s32 %v2123, 127
        %v2125 = vand.u32 2147483647, %v1893
        %v2126 = vand.u32 %v2125, 8388607
        %v2127 = vor.u32 %v2126, 8388608
        %v2128 = vsub.s32 0, %v2127
        %v2129 = vadd.s32 %v2124, 1
        %vm2130 = vcmp.gt.s32.totalorder %v2129, 0
        %v2131 = vsel %vm2130, %v2129, 0
        %v2132 = vshrl.u32 %v2131, 5
        %v2133 = vand.u32 %v2131, 31
        %v2134 = vsub.s32 32, %v2133
        %v2135 = vshrl.u32 683565275, %v2134
        %v2136 = vshll.u32 683565275, %v2133
        %v2137 = vshrl.u32 2475754826, %v2134
        %v2138 = vor.u32 %v2136, %v2137
        %v2139 = vshll.u32 2475754826, %v2133
        %v2140 = vshrl.u32 2131351028, %v2134
        %v2141 = vor.u32 %v2139, %v2140
        %v2142 = vshll.u32 2131351028, %v2133
        %v2143 = vshrl.u32 2102212464, %v2134
        %v2144 = vor.u32 %v2142, %v2143
        %v2145 = vshll.u32 2102212464, %v2133
        %v2146 = vshrl.u32 920167782, %v2134
        %v2147 = vor.u32 %v2145, %v2146
        %v2148 = vshll.u32 920167782, %v2133
        %v2149 = vshrl.u32 1326507024, %v2134
        %v2150 = vor.u32 %v2148, %v2149
        %vm2151 = vcmp.lt.s32.totalorder %v2132, 1
        %vm2152 = vcmp.lt.s32.totalorder %v2132, 2
        %vm2153 = vcmp.lt.s32.totalorder %v2132, 3
        %vm2154 = vcmp.lt.s32.totalorder %v2132, 4
        %v2155 = vsel %vm2151, %v2135, %v2138
        %v2156 = vsel %vm2154, %v2144, 2102212464
        %v2157 = vsel %vm2153, %v2141, %v2156
        %v2158 = vsel %vm2152, %v2155, %v2157
        %v2159 = vsel %vm2151, %v2138, %v2141
        %v2160 = vsel %vm2154, %v2147, 920167782
        %v2161 = vsel %vm2153, %v2144, %v2160
        %v2162 = vsel %vm2152, %v2159, %v2161
        %v2163 = vsel %vm2151, %v2141, %v2144
        %v2164 = vsel %vm2154, %v2150, 1326507024
        %v2165 = vsel %vm2153, %v2147, %v2164
        %v2166 = vsel %vm2152, %v2163, %v2165
        %v2167 = vshll.u32 %v2127, 8
        %v2168 = vmul.u32.u64.compose %v2167, %v2166
        %v2169 = vextract.low.u32 %v2168
        %v2170 = vextract.high.u32 %v2168
        %v2171 = vmul.u32.u64.compose %v2167, %v2162
        %v2172 = vextract.low.u32 %v2171
        %v2173 = vextract.high.u32 %v2171
        %v2174 = vmul.u32 %v2167, %v2158
        %v2175 = vadd.s32 %v2170, %v2172
        %vm2176 = vc.u32 %v2170, %v2172
        %v2177 = vadd.s32 %v2173, 1
        %v2178 = vsel %vm2176, %v2177, %v2173
        %v2179 = vadd.s32 %v2174, %v2178
        %v2180 = vadd.s32 %v2179, 536870912
        %v2181 = vshrl.u32 %v2180, 30
        %v2182 = vshll.u32 %v2181, 30
        %v2183 = vsub.s32 %v2179, %v2182
        %vm2184 = vcmp.lt.s32.totalorder %v2183, 0
        %v2185 = vsub.s32 0, %v2183
        %v2186 = vsel %vm2184, %v2185, %v2183
        %v2187 = vclz %v2186
        %v2188 = vsub.s32 %v2187, 2
        %vm2189 = vcmp.gt.s32.totalorder 0, %v2188
        %v2190 = vsel %vm2189, 0, %v2188
        %v2191 = vsub.s32 32, %v2190
        %v2192 = vshll.u32 %v2183, %v2190
        %v2193 = vshrl.u32 %v2175, %v2191
        %v2194 = vor.u32 %v2192, %v2193
        %v2195 = vsub.s32 4294967266, %v2190
        %v2196 = vadd.s32 %v2195, 127
        %v2197 = vshll.u32 %v2196, 23
        %v2198 = vor.u32 4788187, %v2197
        %v2199 = vand.u32 2147483647, %v2198
        %v2201 = vcvt.s32.f32 %v2194
        %v2202 = vmul.f32 %v2201, %v2199
        %v2203 = vxor.u32 %v2202, 2147483648
        %v2204 = vsel %vm2121, %v2203, %v2202
        %v2205 = vsub.s32 4, %v2181
        %v2206 = vsel %vm2121, %v2205, %v2181
        %v2207 = vsel %vm2120, %v1893, %v2204
        %v2208 = vsel %vm2120, 0, %v2206
        %v2209 = vcosq.f32.pop %v2207
        %v2210 = vsinq.f32.pop %v2207
        %vm2211 = vweird.f32 %v1893
        %v2212 = vadd.s32 %v2208, 3
        %v2213 = vand.u32 %v2212, 3
        %vm2214 = vcmp.lt.s32.totalorder %v2213, 2
        %vm2215 = vcmp.eq.s32.totalorder %v2213, 0
        %v2216 = vxor.u32 %v2210, 2147483648
        %v2217 = vsel %vm2215, %v2209, %v2216
        %vm2218 = vcmp.eq.s32.totalorder %v2213, 2
        %v2219 = vxor.u32 %v2209, 2147483648
        %v2220 = vsel %vm2218, %v2219, %v2210
        %v2221 = vsel %vm2214, %v2217, %v2220
        %v2222 = vsel %vm2211, nan, %v2221
        %v2223 = vand.u32 2147483647, %v1895
        %vm2224 = vcmp.le.f32.partialorder %v2223, 0.7853982
        %vm2225 = vcmp.lt.s32.totalorder %v1895, 0
        %v2226 = vand.u32 %v1895, 2139095040
        %v2227 = vshrl.u32 %v2226, 23
        %v2228 = vsub.s32 %v2227, 127
        %v2229 = vand.u32 2147483647, %v1895
        %v2230 = vand.u32 %v2229, 8388607
        %v2231 = vor.u32 %v2230, 8388608
        %v2232 = vsub.s32 0, %v2231
        %v2233 = vadd.s32 %v2228, 1
        %vm2234 = vcmp.gt.s32.totalorder %v2233, 0
        %v2235 = vsel %vm2234, %v2233, 0
        %v2236 = vshrl.u32 %v2235, 5
        %v2237 = vand.u32 %v2235, 31
        %v2238 = vsub.s32 32, %v2237
        %v2239 = vshrl.u32 683565275, %v2238
        %v2240 = vshll.u32 683565275, %v2237
        %v2241 = vshrl.u32 2475754826, %v2238
        %v2242 = vor.u32 %v2240, %v2241
        %v2243 = vshll.u32 2475754826, %v2237
        %v2244 = vshrl.u32 2131351028, %v2238
        %v2245 = vor.u32 %v2243, %v2244
        %v2246 = vshll.u32 2131351028, %v2237
        %v2247 = vshrl.u32 2102212464, %v2238
        %v2248 = vor.u32 %v2246, %v2247
        %v2249 = vshll.u32 2102212464, %v2237
        %v2250 = vshrl.u32 920167782, %v2238
        %v2251 = vor.u32 %v2249, %v2250
        %v2252 = vshll.u32 920167782, %v2237
        %v2253 = vshrl.u32 1326507024, %v2238
        %v2254 = vor.u32 %v2252, %v2253
        %vm2255 = vcmp.lt.s32.totalorder %v2236, 1
        %vm2256 = vcmp.lt.s32.totalorder %v2236, 2
        %vm2257 = vcmp.lt.s32.totalorder %v2236, 3
        %vm2258 = vcmp.lt.s32.totalorder %v2236, 4
        %v2259 = vsel %vm2255, %v2239, %v2242
        %v2260 = vsel %vm2258, %v2248, 2102212464
        %v2261 = vsel %vm2257, %v2245, %v2260
        %v2262 = vsel %vm2256, %v2259, %v2261
        %v2263 = vsel %vm2255, %v2242, %v2245
        %v2264 = vsel %vm2258, %v2251, 920167782
        %v2265 = vsel %vm2257, %v2248, %v2264
        %v2266 = vsel %vm2256, %v2263, %v2265
        %v2267 = vsel %vm2255, %v2245, %v2248
        %v2268 = vsel %vm2258, %v2254, 1326507024
        %v2269 = vsel %vm2257, %v2251, %v2268
        %v2270 = vsel %vm2256, %v2267, %v2269
        %v2271 = vshll.u32 %v2231, 8
        %v2272 = vmul.u32.u64.compose %v2271, %v2270
        %v2273 = vextract.low.u32 %v2272
        %v2274 = vextract.high.u32 %v2272
        %v2275 = vmul.u32.u64.compose %v2271, %v2266
        %v2276 = vextract.low.u32 %v2275
        %v2277 = vextract.high.u32 %v2275
        %v2278 = vmul.u32 %v2271, %v2262
        %v2279 = vadd.s32 %v2274, %v2276
        %vm2280 = vc.u32 %v2274, %v2276
        %v2281 = vadd.s32 %v2277, 1
        %v2282 = vsel %vm2280, %v2281, %v2277
        %v2283 = vadd.s32 %v2278, %v2282
        %v2284 = vadd.s32 %v2283, 536870912
        %v2285 = vshrl.u32 %v2284, 30
        %v2286 = vshll.u32 %v2285, 30
        %v2287 = vsub.s32 %v2283, %v2286
        %vm2288 = vcmp.lt.s32.totalorder %v2287, 0
        %v2289 = vsub.s32 0, %v2287
        %v2290 = vsel %vm2288, %v2289, %v2287
        %v2291 = vclz %v2290
        %v2292 = vsub.s32 %v2291, 2
        %vm2293 = vcmp.gt.s32.totalorder 0, %v2292
        %v2294 = vsel %vm2293, 0, %v2292
        %v2295 = vsub.s32 32, %v2294
        %v2296 = vshll.u32 %v2287, %v2294
        %v2297 = vshrl.u32 %v2279, %v2295
        %v2298 = vor.u32 %v2296, %v2297
        %v2299 = vsub.s32 4294967266, %v2294
        %v2300 = vadd.s32 %v2299, 127
        %v2301 = vshll.u32 %v2300, 23
        %v2302 = vor.u32 4788187, %v2301
        %v2303 = vand.u32 2147483647, %v2302
        %v2305 = vcvt.s32.f32 %v2298
        %v2306 = vmul.f32 %v2305, %v2303
        %v2307 = vxor.u32 %v2306, 2147483648
        %v2308 = vsel %vm2225, %v2307, %v2306
        %v2309 = vsub.s32 4, %v2285
        %v2310 = vsel %vm2225, %v2309, %v2285
        %v2311 = vsel %vm2224, %v1895, %v2308
        %v2312 = vsel %vm2224, 0, %v2310
        %v2313 = vcosq.f32.pop %v2311
        %v2314 = vsinq.f32.pop %v2311
        %vm2315 = vweird.f32 %v1895
        %v2316 = vadd.s32 %v2312, 3
        %v2317 = vand.u32 %v2316, 3
        %vm2318 = vcmp.lt.s32.totalorder %v2317, 2
        %vm2319 = vcmp.eq.s32.totalorder %v2317, 0
        %v2320 = vxor.u32 %v2314, 2147483648
        %v2321 = vsel %vm2319, %v2313, %v2320
        %vm2322 = vcmp.eq.s32.totalorder %v2317, 2
        %v2323 = vxor.u32 %v2313, 2147483648
        %v2324 = vsel %vm2322, %v2323, %v2314
        %v2325 = vsel %vm2318, %v2321, %v2324
        %v2326 = vsel %vm2315, nan, %v2325
        %v2327 = vand.u32 2147483647, %v1900
        %vm2328 = vcmp.le.f32.partialorder %v2327, 0.7853982
        %vm2329 = vcmp.lt.s32.totalorder %v1900, 0
        %v2330 = vand.u32 %v1900, 2139095040
        %v2331 = vshrl.u32 %v2330, 23
        %v2332 = vsub.s32 %v2331, 127
        %v2333 = vand.u32 2147483647, %v1900
        %v2334 = vand.u32 %v2333, 8388607
        %v2335 = vor.u32 %v2334, 8388608
        %v2336 = vsub.s32 0, %v2335
        %v2337 = vadd.s32 %v2332, 1
        %vm2338 = vcmp.gt.s32.totalorder %v2337, 0
        %v2339 = vsel %vm2338, %v2337, 0
        %v2340 = vshrl.u32 %v2339, 5
        %v2341 = vand.u32 %v2339, 31
        %v2342 = vsub.s32 32, %v2341
        %v2343 = vshrl.u32 683565275, %v2342
        %v2344 = vshll.u32 683565275, %v2341
        %v2345 = vshrl.u32 2475754826, %v2342
        %v2346 = vor.u32 %v2344, %v2345
        %v2347 = vshll.u32 2475754826, %v2341
        %v2348 = vshrl.u32 2131351028, %v2342
        %v2349 = vor.u32 %v2347, %v2348
        %v2350 = vshll.u32 2131351028, %v2341
        %v2351 = vshrl.u32 2102212464, %v2342
        %v2352 = vor.u32 %v2350, %v2351
        %v2353 = vshll.u32 2102212464, %v2341
        %v2354 = vshrl.u32 920167782, %v2342
        %v2355 = vor.u32 %v2353, %v2354
        %v2356 = vshll.u32 920167782, %v2341
        %v2357 = vshrl.u32 1326507024, %v2342
        %v2358 = vor.u32 %v2356, %v2357
        %vm2359 = vcmp.lt.s32.totalorder %v2340, 1
        %vm2360 = vcmp.lt.s32.totalorder %v2340, 2
        %vm2361 = vcmp.lt.s32.totalorder %v2340, 3
        %vm2362 = vcmp.lt.s32.totalorder %v2340, 4
        %v2363 = vsel %vm2359, %v2343, %v2346
        %v2364 = vsel %vm2362, %v2352, 2102212464
        %v2365 = vsel %vm2361, %v2349, %v2364
        %v2366 = vsel %vm2360, %v2363, %v2365
        %v2367 = vsel %vm2359, %v2346, %v2349
        %v2368 = vsel %vm2362, %v2355, 920167782
        %v2369 = vsel %vm2361, %v2352, %v2368
        %v2370 = vsel %vm2360, %v2367, %v2369
        %v2371 = vsel %vm2359, %v2349, %v2352
        %v2372 = vsel %vm2362, %v2358, 1326507024
        %v2373 = vsel %vm2361, %v2355, %v2372
        %v2374 = vsel %vm2360, %v2371, %v2373
        %v2375 = vshll.u32 %v2335, 8
        %v2376 = vmul.u32.u64.compose %v2375, %v2374
        %v2377 = vextract.low.u32 %v2376
        %v2378 = vextract.high.u32 %v2376
        %v2379 = vmul.u32.u64.compose %v2375, %v2370
        %v2380 = vextract.low.u32 %v2379
        %v2381 = vextract.high.u32 %v2379
        %v2382 = vmul.u32 %v2375, %v2366
        %v2383 = vadd.s32 %v2378, %v2380
        %vm2384 = vc.u32 %v2378, %v2380
        %v2385 = vadd.s32 %v2381, 1
        %v2386 = vsel %vm2384, %v2385, %v2381
        %v2387 = vadd.s32 %v2382, %v2386
        %v2388 = vadd.s32 %v2387, 536870912
        %v2389 = vshrl.u32 %v2388, 30
        %v2390 = vshll.u32 %v2389, 30
        %v2391 = vsub.s32 %v2387, %v2390
        %vm2392 = vcmp.lt.s32.totalorder %v2391, 0
        %v2393 = vsub.s32 0, %v2391
        %v2394 = vsel %vm2392, %v2393, %v2391
        %v2395 = vclz %v2394
        %v2396 = vsub.s32 %v2395, 2
        %vm2397 = vcmp.gt.s32.totalorder 0, %v2396
        %v2398 = vsel %vm2397, 0, %v2396
        %v2399 = vsub.s32 32, %v2398
        %v2400 = vshll.u32 %v2391, %v2398
        %v2401 = vshrl.u32 %v2383, %v2399
        %v2402 = vor.u32 %v2400, %v2401
        %v2403 = vsub.s32 4294967266, %v2398
        %v2404 = vadd.s32 %v2403, 127
        %v2405 = vshll.u32 %v2404, 23
        %v2406 = vor.u32 4788187, %v2405
        %v2407 = vand.u32 2147483647, %v2406
        %v2409 = vcvt.s32.f32 %v2402
        %v2410 = vmul.f32 %v2409, %v2407
        %v2411 = vxor.u32 %v2410, 2147483648
        %v2412 = vsel %vm2329, %v2411, %v2410
        %v2413 = vsub.s32 4, %v2389
        %v2414 = vsel %vm2329, %v2413, %v2389
        %v2415 = vsel %vm2328, %v1900, %v2412
        %v2416 = vsel %vm2328, 0, %v2414
        %v2417 = vcosq.f32.pop %v2415
        %v2418 = vsinq.f32.pop %v2415
        %vm2419 = vweird.f32 %v1900
        %v2420 = vadd.s32 %v2416, 3
        %v2421 = vand.u32 %v2420, 3
        %vm2422 = vcmp.lt.s32.totalorder %v2421, 2
        %vm2423 = vcmp.eq.s32.totalorder %v2421, 0
        %v2424 = vxor.u32 %v2418, 2147483648
        %v2425 = vsel %vm2423, %v2417, %v2424
        %vm2426 = vcmp.eq.s32.totalorder %v2421, 2
        %v2427 = vxor.u32 %v2417, 2147483648
        %v2428 = vsel %vm2426, %v2427, %v2418
        %v2429 = vsel %vm2422, %v2425, %v2428
        %v2430 = vsel %vm2419, nan, %v2429
        %v2431 = vand.u32 2147483647, %v1902
        %vm2432 = vcmp.le.f32.partialorder %v2431, 0.7853982
        %vm2433 = vcmp.lt.s32.totalorder %v1902, 0
        %v2434 = vand.u32 %v1902, 2139095040
        %v2435 = vshrl.u32 %v2434, 23
        %v2436 = vsub.s32 %v2435, 127
        %v2437 = vand.u32 2147483647, %v1902
        %v2438 = vand.u32 %v2437, 8388607
        %v2439 = vor.u32 %v2438, 8388608
        %v2440 = vsub.s32 0, %v2439
        %v2441 = vadd.s32 %v2436, 1
        %vm2442 = vcmp.gt.s32.totalorder %v2441, 0
        %v2443 = vsel %vm2442, %v2441, 0
        %v2444 = vshrl.u32 %v2443, 5
        %v2445 = vand.u32 %v2443, 31
        %v2446 = vsub.s32 32, %v2445
        %v2447 = vshrl.u32 683565275, %v2446
        %v2448 = vshll.u32 683565275, %v2445
        %v2449 = vshrl.u32 2475754826, %v2446
        %v2450 = vor.u32 %v2448, %v2449
        %v2451 = vshll.u32 2475754826, %v2445
        %v2452 = vshrl.u32 2131351028, %v2446
        %v2453 = vor.u32 %v2451, %v2452
        %v2454 = vshll.u32 2131351028, %v2445
        %v2455 = vshrl.u32 2102212464, %v2446
        %v2456 = vor.u32 %v2454, %v2455
        %v2457 = vshll.u32 2102212464, %v2445
        %v2458 = vshrl.u32 920167782, %v2446
        %v2459 = vor.u32 %v2457, %v2458
        %v2460 = vshll.u32 920167782, %v2445
        %v2461 = vshrl.u32 1326507024, %v2446
        %v2462 = vor.u32 %v2460, %v2461
        %vm2463 = vcmp.lt.s32.totalorder %v2444, 1
        %vm2464 = vcmp.lt.s32.totalorder %v2444, 2
        %vm2465 = vcmp.lt.s32.totalorder %v2444, 3
        %vm2466 = vcmp.lt.s32.totalorder %v2444, 4
        %v2467 = vsel %vm2463, %v2447, %v2450
        %v2468 = vsel %vm2466, %v2456, 2102212464
        %v2469 = vsel %vm2465, %v2453, %v2468
        %v2470 = vsel %vm2464, %v2467, %v2469
        %v2471 = vsel %vm2463, %v2450, %v2453
        %v2472 = vsel %vm2466, %v2459, 920167782
        %v2473 = vsel %vm2465, %v2456, %v2472
        %v2474 = vsel %vm2464, %v2471, %v2473
        %v2475 = vsel %vm2463, %v2453, %v2456
        %v2476 = vsel %vm2466, %v2462, 1326507024
        %v2477 = vsel %vm2465, %v2459, %v2476
        %v2478 = vsel %vm2464, %v2475, %v2477
        %v2479 = vshll.u32 %v2439, 8
        %v2480 = vmul.u32.u64.compose %v2479, %v2478
        %v2481 = vextract.low.u32 %v2480
        %v2482 = vextract.high.u32 %v2480
        %v2483 = vmul.u32.u64.compose %v2479, %v2474
        %v2484 = vextract.low.u32 %v2483
        %v2485 = vextract.high.u32 %v2483
        %v2486 = vmul.u32 %v2479, %v2470
        %v2487 = vadd.s32 %v2482, %v2484
        %vm2488 = vc.u32 %v2482, %v2484
        %v2489 = vadd.s32 %v2485, 1
        %v2490 = vsel %vm2488, %v2489, %v2485
        %v2491 = vadd.s32 %v2486, %v2490
        %v2492 = vadd.s32 %v2491, 536870912
        %v2493 = vshrl.u32 %v2492, 30
        %v2494 = vshll.u32 %v2493, 30
        %v2495 = vsub.s32 %v2491, %v2494
        %vm2496 = vcmp.lt.s32.totalorder %v2495, 0
        %v2497 = vsub.s32 0, %v2495
        %v2498 = vsel %vm2496, %v2497, %v2495
        %v2499 = vclz %v2498
        %v2500 = vsub.s32 %v2499, 2
        %vm2501 = vcmp.gt.s32.totalorder 0, %v2500
        %v2502 = vsel %vm2501, 0, %v2500
        %v2503 = vsub.s32 32, %v2502
        %v2504 = vshll.u32 %v2495, %v2502
        %v2505 = vshrl.u32 %v2487, %v2503
        %v2506 = vor.u32 %v2504, %v2505
        %v2507 = vsub.s32 4294967266, %v2502
        %v2508 = vadd.s32 %v2507, 127
        %v2509 = vshll.u32 %v2508, 23
        %v2510 = vor.u32 4788187, %v2509
        %v2511 = vand.u32 2147483647, %v2510
        %v2513 = vcvt.s32.f32 %v2506
        %v2514 = vmul.f32 %v2513, %v2511
        %v2515 = vxor.u32 %v2514, 2147483648
        %v2516 = vsel %vm2433, %v2515, %v2514
        %v2517 = vsub.s32 4, %v2493
        %v2518 = vsel %vm2433, %v2517, %v2493
        %v2519 = vsel %vm2432, %v1902, %v2516
        %v2520 = vsel %vm2432, 0, %v2518
        %v2521 = vcosq.f32.pop %v2519
        %v2522 = vsinq.f32.pop %v2519
        %vm2523 = vweird.f32 %v1902
        %v2524 = vadd.s32 %v2520, 3
        %v2525 = vand.u32 %v2524, 3
        %vm2526 = vcmp.lt.s32.totalorder %v2525, 2
        %vm2527 = vcmp.eq.s32.totalorder %v2525, 0
        %v2528 = vxor.u32 %v2522, 2147483648
        %v2529 = vsel %vm2527, %v2521, %v2528
        %vm2530 = vcmp.eq.s32.totalorder %v2525, 2
        %v2531 = vxor.u32 %v2521, 2147483648
        %v2532 = vsel %vm2530, %v2531, %v2522
        %v2533 = vsel %vm2526, %v2529, %v2532
        %v2534 = vsel %vm2523, nan, %v2533
        %v2535 = vand.u32 2147483647, %v1907
        %vm2536 = vcmp.le.f32.partialorder %v2535, 0.7853982
        %vm2537 = vcmp.lt.s32.totalorder %v1907, 0
        %v2538 = vand.u32 %v1907, 2139095040
        %v2539 = vshrl.u32 %v2538, 23
        %v2540 = vsub.s32 %v2539, 127
        %v2541 = vand.u32 2147483647, %v1907
        %v2542 = vand.u32 %v2541, 8388607
        %v2543 = vor.u32 %v2542, 8388608
        %v2544 = vsub.s32 0, %v2543
        %v2545 = vadd.s32 %v2540, 1
        %vm2546 = vcmp.gt.s32.totalorder %v2545, 0
        %v2547 = vsel %vm2546, %v2545, 0
        %v2548 = vshrl.u32 %v2547, 5
        %v2549 = vand.u32 %v2547, 31
        %v2550 = vsub.s32 32, %v2549
        %v2551 = vshrl.u32 683565275, %v2550
        %v2552 = vshll.u32 683565275, %v2549
        %v2553 = vshrl.u32 2475754826, %v2550
        %v2554 = vor.u32 %v2552, %v2553
        %v2555 = vshll.u32 2475754826, %v2549
        %v2556 = vshrl.u32 2131351028, %v2550
        %v2557 = vor.u32 %v2555, %v2556
        %v2558 = vshll.u32 2131351028, %v2549
        %v2559 = vshrl.u32 2102212464, %v2550
        %v2560 = vor.u32 %v2558, %v2559
        %v2561 = vshll.u32 2102212464, %v2549
        %v2562 = vshrl.u32 920167782, %v2550
        %v2563 = vor.u32 %v2561, %v2562
        %v2564 = vshll.u32 920167782, %v2549
        %v2565 = vshrl.u32 1326507024, %v2550
        %v2566 = vor.u32 %v2564, %v2565
        %vm2567 = vcmp.lt.s32.totalorder %v2548, 1
        %vm2568 = vcmp.lt.s32.totalorder %v2548, 2
        %vm2569 = vcmp.lt.s32.totalorder %v2548, 3
        %vm2570 = vcmp.lt.s32.totalorder %v2548, 4
        %v2571 = vsel %vm2567, %v2551, %v2554
        %v2572 = vsel %vm2570, %v2560, 2102212464
        %v2573 = vsel %vm2569, %v2557, %v2572
        %v2574 = vsel %vm2568, %v2571, %v2573
        %v2575 = vsel %vm2567, %v2554, %v2557
        %v2576 = vsel %vm2570, %v2563, 920167782
        %v2577 = vsel %vm2569, %v2560, %v2576
        %v2578 = vsel %vm2568, %v2575, %v2577
        %v2579 = vsel %vm2567, %v2557, %v2560
        %v2580 = vsel %vm2570, %v2566, 1326507024
        %v2581 = vsel %vm2569, %v2563, %v2580
        %v2582 = vsel %vm2568, %v2579, %v2581
        %v2583 = vshll.u32 %v2543, 8
        %v2584 = vmul.u32.u64.compose %v2583, %v2582
        %v2585 = vextract.low.u32 %v2584
        %v2586 = vextract.high.u32 %v2584
        %v2587 = vmul.u32.u64.compose %v2583, %v2578
        %v2588 = vextract.low.u32 %v2587
        %v2589 = vextract.high.u32 %v2587
        %v2590 = vmul.u32 %v2583, %v2574
        %v2591 = vadd.s32 %v2586, %v2588
        %vm2592 = vc.u32 %v2586, %v2588
        %v2593 = vadd.s32 %v2589, 1
        %v2594 = vsel %vm2592, %v2593, %v2589
        %v2595 = vadd.s32 %v2590, %v2594
        %v2596 = vadd.s32 %v2595, 536870912
        %v2597 = vshrl.u32 %v2596, 30
        %v2598 = vshll.u32 %v2597, 30
        %v2599 = vsub.s32 %v2595, %v2598
        %vm2600 = vcmp.lt.s32.totalorder %v2599, 0
        %v2601 = vsub.s32 0, %v2599
        %v2602 = vsel %vm2600, %v2601, %v2599
        %v2603 = vclz %v2602
        %v2604 = vsub.s32 %v2603, 2
        %vm2605 = vcmp.gt.s32.totalorder 0, %v2604
        %v2606 = vsel %vm2605, 0, %v2604
        %v2607 = vsub.s32 32, %v2606
        %v2608 = vshll.u32 %v2599, %v2606
        %v2609 = vshrl.u32 %v2591, %v2607
        %v2610 = vor.u32 %v2608, %v2609
        %v2611 = vsub.s32 4294967266, %v2606
        %v2612 = vadd.s32 %v2611, 127
        %v2613 = vshll.u32 %v2612, 23
        %v2614 = vor.u32 4788187, %v2613
        %v2615 = vand.u32 2147483647, %v2614
        %v2617 = vcvt.s32.f32 %v2610
        %v2618 = vmul.f32 %v2617, %v2615
        %v2619 = vxor.u32 %v2618, 2147483648
        %v2620 = vsel %vm2537, %v2619, %v2618
        %v2621 = vsub.s32 4, %v2597
        %v2622 = vsel %vm2537, %v2621, %v2597
        %v2623 = vsel %vm2536, %v1907, %v2620
        %v2624 = vsel %vm2536, 0, %v2622
        %v2625 = vcosq.f32.pop %v2623
        %v2626 = vsinq.f32.pop %v2623
        %vm2627 = vweird.f32 %v1907
        %v2628 = vadd.s32 %v2624, 3
        %v2629 = vand.u32 %v2628, 3
        %vm2630 = vcmp.lt.s32.totalorder %v2629, 2
        %vm2631 = vcmp.eq.s32.totalorder %v2629, 0
        %v2632 = vxor.u32 %v2626, 2147483648
        %v2633 = vsel %vm2631, %v2625, %v2632
        %vm2634 = vcmp.eq.s32.totalorder %v2629, 2
        %v2635 = vxor.u32 %v2625, 2147483648
        %v2636 = vsel %vm2634, %v2635, %v2626
        %v2637 = vsel %vm2630, %v2633, %v2636
        %v2638 = vsel %vm2627, nan, %v2637
        %v2639 = vand.u32 2147483647, %v1909
        %vm2640 = vcmp.le.f32.partialorder %v2639, 0.7853982
        %vm2641 = vcmp.lt.s32.totalorder %v1909, 0
        %v2642 = vand.u32 %v1909, 2139095040
        %v2643 = vshrl.u32 %v2642, 23
        %v2644 = vsub.s32 %v2643, 127
        %v2645 = vand.u32 2147483647, %v1909
        %v2646 = vand.u32 %v2645, 8388607
        %v2647 = vor.u32 %v2646, 8388608
        %v2648 = vsub.s32 0, %v2647
        %v2649 = vadd.s32 %v2644, 1
        %vm2650 = vcmp.gt.s32.totalorder %v2649, 0
        %v2651 = vsel %vm2650, %v2649, 0
        %v2652 = vshrl.u32 %v2651, 5
        %v2653 = vand.u32 %v2651, 31
        %v2654 = vsub.s32 32, %v2653
        %v2655 = vshrl.u32 683565275, %v2654
        %v2656 = vshll.u32 683565275, %v2653
        %v2657 = vshrl.u32 2475754826, %v2654
        %v2658 = vor.u32 %v2656, %v2657
        %v2659 = vshll.u32 2475754826, %v2653
        %v2660 = vshrl.u32 2131351028, %v2654
        %v2661 = vor.u32 %v2659, %v2660
        %v2662 = vshll.u32 2131351028, %v2653
        %v2663 = vshrl.u32 2102212464, %v2654
        %v2664 = vor.u32 %v2662, %v2663
        %v2665 = vshll.u32 2102212464, %v2653
        %v2666 = vshrl.u32 920167782, %v2654
        %v2667 = vor.u32 %v2665, %v2666
        %v2668 = vshll.u32 920167782, %v2653
        %v2669 = vshrl.u32 1326507024, %v2654
        %v2670 = vor.u32 %v2668, %v2669
        %vm2671 = vcmp.lt.s32.totalorder %v2652, 1
        %vm2672 = vcmp.lt.s32.totalorder %v2652, 2
        %vm2673 = vcmp.lt.s32.totalorder %v2652, 3
        %vm2674 = vcmp.lt.s32.totalorder %v2652, 4
        %v2675 = vsel %vm2671, %v2655, %v2658
        %v2676 = vsel %vm2674, %v2664, 2102212464
        %v2677 = vsel %vm2673, %v2661, %v2676
        %v2678 = vsel %vm2672, %v2675, %v2677
        %v2679 = vsel %vm2671, %v2658, %v2661
        %v2680 = vsel %vm2674, %v2667, 920167782
        %v2681 = vsel %vm2673, %v2664, %v2680
        %v2682 = vsel %vm2672, %v2679, %v2681
        %v2683 = vsel %vm2671, %v2661, %v2664
        %v2684 = vsel %vm2674, %v2670, 1326507024
        %v2685 = vsel %vm2673, %v2667, %v2684
        %v2686 = vsel %vm2672, %v2683, %v2685
        %v2687 = vshll.u32 %v2647, 8
        %v2688 = vmul.u32.u64.compose %v2687, %v2686
        %v2689 = vextract.low.u32 %v2688
        %v2690 = vextract.high.u32 %v2688
        %v2691 = vmul.u32.u64.compose %v2687, %v2682
        %v2692 = vextract.low.u32 %v2691
        %v2693 = vextract.high.u32 %v2691
        %v2694 = vmul.u32 %v2687, %v2678
        %v2695 = vadd.s32 %v2690, %v2692
        %vm2696 = vc.u32 %v2690, %v2692
        %v2697 = vadd.s32 %v2693, 1
        %v2698 = vsel %vm2696, %v2697, %v2693
        %v2699 = vadd.s32 %v2694, %v2698
        %v2700 = vadd.s32 %v2699, 536870912
        %v2701 = vshrl.u32 %v2700, 30
        %v2702 = vshll.u32 %v2701, 30
        %v2703 = vsub.s32 %v2699, %v2702
        %vm2704 = vcmp.lt.s32.totalorder %v2703, 0
        %v2705 = vsub.s32 0, %v2703
        %v2706 = vsel %vm2704, %v2705, %v2703
        %v2707 = vclz %v2706
        %v2708 = vsub.s32 %v2707, 2
        %vm2709 = vcmp.gt.s32.totalorder 0, %v2708
        %v2710 = vsel %vm2709, 0, %v2708
        %v2711 = vsub.s32 32, %v2710
        %v2712 = vshll.u32 %v2703, %v2710
        %v2713 = vshrl.u32 %v2695, %v2711
        %v2714 = vor.u32 %v2712, %v2713
        %v2715 = vsub.s32 4294967266, %v2710
        %v2716 = vadd.s32 %v2715, 127
        %v2717 = vshll.u32 %v2716, 23
        %v2718 = vor.u32 4788187, %v2717
        %v2719 = vand.u32 2147483647, %v2718
        %v2721 = vcvt.s32.f32 %v2714
        %v2722 = vmul.f32 %v2721, %v2719
        %v2723 = vxor.u32 %v2722, 2147483648
        %v2724 = vsel %vm2641, %v2723, %v2722
        %v2725 = vsub.s32 4, %v2701
        %v2726 = vsel %vm2641, %v2725, %v2701
        %v2727 = vsel %vm2640, %v1909, %v2724
        %v2728 = vsel %vm2640, 0, %v2726
        %v2729 = vcosq.f32.pop %v2727
        %v2730 = vsinq.f32.pop %v2727
        %vm2731 = vweird.f32 %v1909
        %v2732 = vadd.s32 %v2728, 3
        %v2733 = vand.u32 %v2732, 3
        %vm2734 = vcmp.lt.s32.totalorder %v2733, 2
        %vm2735 = vcmp.eq.s32.totalorder %v2733, 0
        %v2736 = vxor.u32 %v2730, 2147483648
        %v2737 = vsel %vm2735, %v2729, %v2736
        %vm2738 = vcmp.eq.s32.totalorder %v2733, 2
        %v2739 = vxor.u32 %v2729, 2147483648
        %v2740 = vsel %vm2738, %v2739, %v2730
        %v2741 = vsel %vm2734, %v2737, %v2740
        %v2742 = vsel %vm2731, nan, %v2741
        %v2743 = vld [vmem:[%s4 + $0x40] sm:$0xff]
        %v2744 = vld [vmem:[%s4 + $0x48] sm:$0xff]
        %v2745 = vld [vmem:[%s4 + $0x50] sm:$0xff]
        %v2746 = vld [vmem:[%s4 + $0x58] sm:$0xff]
        %s2747 = scalar_lea.vmem %s2, 32
        %v2748 = vld [vmem:[%s2747] sm:$0xff]
        %v2749 = vld [vmem:[%s2747 + $0x8] sm:$0xff]
        %v2750 = vld [vmem:[%s2747 + $0x10] sm:$0xff]
        %v2751 = vld [vmem:[%s2747 + $0x18] sm:$0xff]
        %2753 = vset.pattern.permute.xlu0 0
        %2754 = vperm.xlu0 %2753, %v2743
        %v2755 = vpop.permute.xlu0 %2754
        %2758 = vset.pattern.permute.xlu0 0
        %2759 = vperm.xlu0 %2758, %v2744
        %v2760 = vpop.permute.xlu0 %2759
        %2763 = vset.pattern.permute.xlu0 0
        %2764 = vperm.xlu0 %2763, %v2745
        %v2765 = vpop.permute.xlu0 %2764
        %2768 = vset.pattern.permute.xlu0 0
        %2769 = vperm.xlu0 %2768, %v2746
        %v2770 = vpop.permute.xlu0 %2769
        %v2773 = vsel %vm1208, %v2748, 0
        %v2776 = vsel %vm1208, %v2749, 0
        %v2779 = vsel %vm1208, %v2750, 0
        %v2782 = vsel %vm1208, %v2751, 0
        %v2784 = vand.u32 %v2118, 4294901760
        %2785 = vmatprep.subr.mxu0 %v2784
        %v2786 = vand.u32 %v2014, 4294901760
        %2787 = vmatpush1.msra.mxu0 %v2786
        %v2788 = vand.u32 %v2326, 4294901760
        %2789 = vmatprep.subr.mxu0 %v2788
        %v2790 = vand.u32 %v2222, 4294901760
        %2791 = vmatpush1.msra.mxu0 %v2790
        %v2792 = vand.u32 %v2534, 4294901760
        %2793 = vmatprep.subr.mxu0 %v2792
        %v2794 = vand.u32 %v2430, 4294901760
        %2795 = vmatpush1.msra.mxu0 %v2794
        %v2796 = vand.u32 %v2742, 4294901760
        %2797 = vmatprep.subr.mxu0 %v2796
        %v2798 = vand.u32 %v2638, 4294901760
        %2799 = vmatpush1.msra.mxu0 %v2798
        %2800 = vmatprep.subr.mxu0 0.0
        %2801 = vmatpush1.msra.mxu0 0.0
        %2802 = vmatprep.subr.mxu0 0.0
        %2803 = vmatpush1.msra.mxu0 0.0
        %2804 = vmatprep.subr.mxu0 0.0
        %2805 = vmatpush1.msra.mxu0 0.0
        %2806 = vmatprep.subr.mxu0 0.0
        %2807 = vmatpush1.msra.mxu0 0.0
        %2808 = vmatprep.subr.mxu0 0.0
        %2809 = vmatpush1.msra.mxu0 0.0
        %2810 = vmatprep.subr.mxu0 0.0
        %2811 = vmatpush1.msra.mxu0 0.0
        %2812 = vmatprep.subr.mxu0 0.0
        %2813 = vmatpush1.msra.mxu0 0.0
        %2814 = vmatprep.subr.mxu0 0.0
        %2815 = vmatpush1.msra.mxu0 0.0
        %2816 = vmatprep.subr.mxu0 0.0
        %2817 = vmatpush1.msra.mxu0 0.0
        %2818 = vmatprep.subr.mxu0 0.0
        %2819 = vmatpush1.msra.mxu0 0.0
        %2820 = vmatprep.subr.mxu0 0.0
        %2821 = vmatpush1.msra.mxu0 0.0
        %2822 = vmatprep.subr.mxu0 0.0
        %2823 = vmatpush1.msra.mxu0 0.0
        %2824 = vmatprep.subr.mxu0 0.0
        %2825 = vmatpush1.msra.mxu0 0.0
        %2826 = vmatprep.subr.mxu0 0.0
        %2827 = vmatpush1.msra.mxu0 0.0
        %2828 = vmatprep.subr.mxu0 0.0
        %2829 = vmatpush1.msra.mxu0 0.0
        %2830 = vmatprep.subr.mxu0 0.0
        %2831 = vmatpush1.msra.mxu0 0.0
        %2832 = vmatprep.subr.mxu0 0.0
        %2833 = vmatpush1.msra.mxu0 0.0
        %2834 = vmatprep.subr.mxu0 0.0
        %2835 = vmatpush1.msra.mxu0 0.0
        %2836 = vmatprep.subr.mxu0 0.0
        %2837 = vmatpush1.msra.mxu0 0.0
        %2838 = vmatprep.subr.mxu0 0.0
        %2839 = vmatpush1.msra.mxu0 0.0
        %2840 = vmatprep.subr.mxu0 0.0
        %2841 = vmatpush1.msra.mxu0 0.0
        %2842 = vmatprep.subr.mxu0 0.0
        %2843 = vmatpush1.msra.mxu0 0.0
        %2844 = vmatprep.subr.mxu0 0.0
        %2845 = vmatpush1.msra.mxu0 0.0
        %2846 = vmatprep.subr.mxu0 0.0
        %2847 = vmatpush1.msra.mxu0 0.0
        %2848 = vmatprep.subr.mxu0 0.0
        %2849 = vmatpush1.msra.mxu0 0.0
        %2850 = vmatprep.subr.mxu0 0.0
        %2851 = vmatpush1.msra.mxu0 0.0
        %2852 = vmatprep.subr.mxu0 0.0
        %2853 = vmatpush1.msra.mxu0 0.0
        %2854 = vmatprep.subr.mxu0 0.0
        %2855 = vmatpush1.msra.mxu0 0.0
        %2856 = vmatprep.mubr.f32.mxu0 0.0
        %v2857 = vand.u32 %v2773, 4294901760
        %v2858 = vsub.f32 %v2773, %v2857
        %v2859 = vand.u32 %v2858, 4294901760
        %v2860 = vsub.f32 %v2858, %v2859
        %v2861 = vand.u32 %v2860, 4294901760
        %2862 = vmatmul.mubr.f32.gmra.mrb[0].mxu0 %v2861
        %v2863 = vpop.f32.mrb[0].mxu0
        %v2864 = vadd.f32 %v2755, %v2863
        %v2865 = vpop.f32.mrb[0].mxu0
        %v2866 = vadd.f32 %v2755, %v2865
        %2867 = vmatprep.mubr.f32.mxu0 0.0
        %v2868 = vand.u32 %v2776, 4294901760
        %v2869 = vsub.f32 %v2776, %v2868
        %v2870 = vand.u32 %v2869, 4294901760
        %v2871 = vsub.f32 %v2869, %v2870
        %v2872 = vand.u32 %v2871, 4294901760
        %2873 = vmatmul.mubr.f32.gmra.mrb[0].mxu0 %v2872
        %v2874 = vpop.f32.mrb[0].mxu0
        %v2875 = vadd.f32 %v2760, %v2874
        %v2876 = vpop.f32.mrb[0].mxu0
        %v2877 = vadd.f32 %v2760, %v2876
        %2878 = vmatprep.mubr.f32.mxu0 0.0
        %v2879 = vand.u32 %v2779, 4294901760
        %v2880 = vsub.f32 %v2779, %v2879
        %v2881 = vand.u32 %v2880, 4294901760
        %v2882 = vsub.f32 %v2880, %v2881
        %v2883 = vand.u32 %v2882, 4294901760
        %2884 = vmatmul.mubr.f32.gmra.mrb[0].mxu0 %v2883
        %v2885 = vpop.f32.mrb[0].mxu0
        %v2886 = vadd.f32 %v2765, %v2885
        %v2887 = vpop.f32.mrb[0].mxu0
        %v2888 = vadd.f32 %v2765, %v2887
        %2889 = vmatprep.mubr.f32.mxu0 0.0
        %v2890 = vand.u32 %v2782, 4294901760
        %v2891 = vsub.f32 %v2782, %v2890
        %v2892 = vand.u32 %v2891, 4294901760
        %v2893 = vsub.f32 %v2891, %v2892
        %v2894 = vand.u32 %v2893, 4294901760
        %2895 = vmatmul.mubr.f32.gmra.mrb[0].mxu0 %v2894
        %v2896 = vpop.f32.mrb[0].mxu0
        %v2897 = vadd.f32 %v2770, %v2896
        %v2898 = vpop.f32.mrb[0].mxu0
        %v2899 = vadd.f32 %v2770, %v2898
        %2900 = vdwg.mxu0
        %v2901 = vand.u32 %v2118, 4294901760
        %v2902 = vsub.f32 %v2118, %v2901
        %v2903 = vand.u32 %v2902, 4294901760
        %v2904 = vsub.f32 %v2902, %v2903
        %v2905 = vand.u32 %v2904, 4294901760
        %2906 = vmatprep.subr.mxu0 %v2905
        %v2907 = vand.u32 %v2014, 4294901760
        %v2908 = vsub.f32 %v2014, %v2907
        %v2909 = vand.u32 %v2908, 4294901760
        %v2910 = vsub.f32 %v2908, %v2909
        %v2911 = vand.u32 %v2910, 4294901760
        %2912 = vmatpush1.msra.mxu0 %v2911
        %v2913 = vand.u32 %v2326, 4294901760
        %v2914 = vsub.f32 %v2326, %v2913
        %v2915 = vand.u32 %v2914, 4294901760
        %v2916 = vsub.f32 %v2914, %v2915
        %v2917 = vand.u32 %v2916, 4294901760
        %2918 = vmatprep.subr.mxu0 %v2917
        %v2919 = vand.u32 %v2222, 4294901760
        %v2920 = vsub.f32 %v2222, %v2919
        %v2921 = vand.u32 %v2920, 4294901760
        %v2922 = vsub.f32 %v2920, %v2921
        %v2923 = vand.u32 %v2922, 4294901760
        %2924 = vmatpush1.msra.mxu0 %v2923
        %v2925 = vand.u32 %v2534, 4294901760
        %v2926 = vsub.f32 %v2534, %v2925
        %v2927 = vand.u32 %v2926, 4294901760
        %v2928 = vsub.f32 %v2926, %v2927
        %v2929 = vand.u32 %v2928, 4294901760
        %2930 = vmatprep.subr.mxu0 %v2929
        %v2931 = vand.u32 %v2430, 4294901760
        %v2932 = vsub.f32 %v2430, %v2931
        %v2933 = vand.u32 %v2932, 4294901760
        %v2934 = vsub.f32 %v2932, %v2933
        %v2935 = vand.u32 %v2934, 4294901760
        %2936 = vmatpush1.msra.mxu0 %v2935
        %v2937 = vand.u32 %v2742, 4294901760
        %v2938 = vsub.f32 %v2742, %v2937
        %v2939 = vand.u32 %v2938, 4294901760
        %v2940 = vsub.f32 %v2938, %v2939
        %v2941 = vand.u32 %v2940, 4294901760
        %2942 = vmatprep.subr.mxu0 %v2941
        %v2943 = vand.u32 %v2638, 4294901760
        %v2944 = vsub.f32 %v2638, %v2943
        %v2945 = vand.u32 %v2944, 4294901760
        %v2946 = vsub.f32 %v2944, %v2945
        %v2947 = vand.u32 %v2946, 4294901760
        %2948 = vmatpush1.msra.mxu0 %v2947
        %2949 = vmatprep.subr.mxu0 0.0
        %2950 = vmatpush1.msra.mxu0 0.0
        %2951 = vmatprep.subr.mxu0 0.0
        %2952 = vmatpush1.msra.mxu0 0.0
        %2953 = vmatprep.subr.mxu0 0.0
        %2954 = vmatpush1.msra.mxu0 0.0
        %2955 = vmatprep.subr.mxu0 0.0
        %2956 = vmatpush1.msra.mxu0 0.0
        %2957 = vmatprep.subr.mxu0 0.0
        %2958 = vmatpush1.msra.mxu0 0.0
        %2959 = vmatprep.subr.mxu0 0.0
        %2960 = vmatpush1.msra.mxu0 0.0
        %2961 = vmatprep.subr.mxu0 0.0
        %2962 = vmatpush1.msra.mxu0 0.0
        %2963 = vmatprep.subr.mxu0 0.0
        %2964 = vmatpush1.msra.mxu0 0.0
        %2965 = vmatprep.subr.mxu0 0.0
        %2966 = vmatpush1.msra.mxu0 0.0
        %2967 = vmatprep.subr.mxu0 0.0
        %2968 = vmatpush1.msra.mxu0 0.0
        %2969 = vmatprep.subr.mxu0 0.0
        %2970 = vmatpush1.msra.mxu0 0.0
        %2971 = vmatprep.subr.mxu0 0.0
        %2972 = vmatpush1.msra.mxu0 0.0
        %2973 = vmatprep.subr.mxu0 0.0
        %2974 = vmatpush1.msra.mxu0 0.0
        %2975 = vmatprep.subr.mxu0 0.0
        %2976 = vmatpush1.msra.mxu0 0.0
        %2977 = vmatprep.subr.mxu0 0.0
        %2978 = vmatpush1.msra.mxu0 0.0
        %2979 = vmatprep.subr.mxu0 0.0
        %2980 = vmatpush1.msra.mxu0 0.0
        %2981 = vmatprep.subr.mxu0 0.0
        %2982 = vmatpush1.msra.mxu0 0.0
        %2983 = vmatprep.subr.mxu0 0.0
        %2984 = vmatpush1.msra.mxu0 0.0
        %2985 = vmatprep.subr.mxu0 0.0
        %2986 = vmatpush1.msra.mxu0 0.0
        %2987 = vmatprep.subr.mxu0 0.0
        %2988 = vmatpush1.msra.mxu0 0.0
        %2989 = vmatprep.subr.mxu0 0.0
        %2990 = vmatpush1.msra.mxu0 0.0
        %2991 = vmatprep.subr.mxu0 0.0
        %2992 = vmatpush1.msra.mxu0 0.0
        %2993 = vmatprep.subr.mxu0 0.0
        %2994 = vmatpush1.msra.mxu0 0.0
        %2995 = vmatprep.subr.mxu0 0.0
        %2996 = vmatpush1.msra.mxu0 0.0
        %2997 = vmatprep.subr.mxu0 0.0
        %2998 = vmatpush1.msra.mxu0 0.0
        %2999 = vmatprep.subr.mxu0 0.0
        %3000 = vmatpush1.msra.mxu0 0.0
        %3001 = vmatprep.subr.mxu0 0.0
        %3002 = vmatpush1.msra.mxu0 0.0
        %3003 = vmatprep.subr.mxu0 0.0
        %3004 = vmatpush1.msra.mxu0 0.0
        %3005 = vmatprep.mubr.f32.mxu0 0.0
        %v3006 = vand.u32 %v2773, 4294901760
        %3007 = vmatmul.mubr.f32.gmra.mrb[0].mxu0 %v3006
        %v3008 = vpop.f32.mrb[0].mxu0
        %v3009 = vadd.f32 %v2864, %v3008
        %v3010 = vpop.f32.mrb[0].mxu0
        %v3011 = vadd.f32 %v2866, %v3010
        %3012 = vmatprep.mubr.f32.mxu0 0.0
        %v3013 = vand.u32 %v2776, 4294901760
        %3014 = vmatmul.mubr.f32.gmra.mrb[0].mxu0 %v3013
        %v3015 = vpop.f32.mrb[0].mxu0
        %v3016 = vadd.f32 %v2875, %v3015
        %v3017 = vpop.f32.mrb[0].mxu0
        %v3018 = vadd.f32 %v2877, %v3017
        %3019 = vmatprep.mubr.f32.mxu0 0.0
        %v3020 = vand.u32 %v2779, 4294901760
        %3021 = vmatmul.mubr.f32.gmra.mrb[0].mxu0 %v3020
        %v3022 = vpop.f32.mrb[0].mxu0
        %v3023 = vadd.f32 %v2886, %v3022
        %v3024 = vpop.f32.mrb[0].mxu0
        %v3025 = vadd.f32 %v2888, %v3024
        %3026 = vmatprep.mubr.f32.mxu0 0.0
        %v3027 = vand.u32 %v2782, 4294901760
        %3028 = vmatmul.mubr.f32.gmra.mrb[0].mxu0 %v3027
        %v3029 = vpop.f32.mrb[0].mxu0
        %v3030 = vadd.f32 %v2897, %v3029
        %v3031 = vpop.f32.mrb[0].mxu0
        %v3032 = vadd.f32 %v2899, %v3031
        %3033 = vdwg.mxu0
        %v3034 = vand.u32 %v2118, 4294901760
        %v3035 = vsub.f32 %v2118, %v3034
        %3036 = vmatprep.subr.mxu0 %v3035
        %v3037 = vand.u32 %v2014, 4294901760
        %v3038 = vsub.f32 %v2014, %v3037
        %3039 = vmatpush1.msra.mxu0 %v3038
        %v3040 = vand.u32 %v2326, 4294901760
        %v3041 = vsub.f32 %v2326, %v3040
        %3042 = vmatprep.subr.mxu0 %v3041
        %v3043 = vand.u32 %v2222, 4294901760
        %v3044 = vsub.f32 %v2222, %v3043
        %3045 = vmatpush1.msra.mxu0 %v3044
        %v3046 = vand.u32 %v2534, 4294901760
        %v3047 = vsub.f32 %v2534, %v3046
        %3048 = vmatprep.subr.mxu0 %v3047
        %v3049 = vand.u32 %v2430, 4294901760
        %v3050 = vsub.f32 %v2430, %v3049
        %3051 = vmatpush1.msra.mxu0 %v3050
        %v3052 = vand.u32 %v2742, 4294901760
        %v3053 = vsub.f32 %v2742, %v3052
        %3054 = vmatprep.subr.mxu0 %v3053
        %v3055 = vand.u32 %v2638, 4294901760
        %v3056 = vsub.f32 %v2638, %v3055
        %3057 = vmatpush1.msra.mxu0 %v3056
        %3058 = vmatprep.subr.mxu0 0.0
        %3059 = vmatpush1.msra.mxu0 0.0
        %3060 = vmatprep.subr.mxu0 0.0
        %3061 = vmatpush1.msra.mxu0 0.0
        %3062 = vmatprep.subr.mxu0 0.0
        %3063 = vmatpush1.msra.mxu0 0.0
        %3064 = vmatprep.subr.mxu0 0.0
        %3065 = vmatpush1.msra.mxu0 0.0
        %3066 = vmatprep.subr.mxu0 0.0
        %3067 = vmatpush1.msra.mxu0 0.0
        %3068 = vmatprep.subr.mxu0 0.0
        %3069 = vmatpush1.msra.mxu0 0.0
        %3070 = vmatprep.subr.mxu0 0.0
        %3071 = vmatpush1.msra.mxu0 0.0
        %3072 = vmatprep.subr.mxu0 0.0
        %3073 = vmatpush1.msra.mxu0 0.0
        %3074 = vmatprep.subr.mxu0 0.0
        %3075 = vmatpush1.msra.mxu0 0.0
        %3076 = vmatprep.subr.mxu0 0.0
        %3077 = vmatpush1.msra.mxu0 0.0
        %3078 = vmatprep.subr.mxu0 0.0
        %3079 = vmatpush1.msra.mxu0 0.0
        %3080 = vmatprep.subr.mxu0 0.0
        %3081 = vmatpush1.msra.mxu0 0.0
        %3082 = vmatprep.subr.mxu0 0.0
        %3083 = vmatpush1.msra.mxu0 0.0
        %3084 = vmatprep.subr.mxu0 0.0
        %3085 = vmatpush1.msra.mxu0 0.0
        %3086 = vmatprep.subr.mxu0 0.0
        %3087 = vmatpush1.msra.mxu0 0.0
        %3088 = vmatprep.subr.mxu0 0.0
        %3089 = vmatpush1.msra.mxu0 0.0
        %3090 = vmatprep.subr.mxu0 0.0
        %3091 = vmatpush1.msra.mxu0 0.0
        %3092 = vmatprep.subr.mxu0 0.0
        %3093 = vmatpush1.msra.mxu0 0.0
        %3094 = vmatprep.subr.mxu0 0.0
        %3095 = vmatpush1.msra.mxu0 0.0
        %3096 = vmatprep.subr.mxu0 0.0
        %3097 = vmatpush1.msra.mxu0 0.0
        %3098 = vmatprep.subr.mxu0 0.0
        %3099 = vmatpush1.msra.mxu0 0.0
        %3100 = vmatprep.subr.mxu0 0.0
        %3101 = vmatpush1.msra.mxu0 0.0
        %3102 = vmatprep.subr.mxu0 0.0
        %3103 = vmatpush1.msra.mxu0 0.0
        %3104 = vmatprep.subr.mxu0 0.0
        %3105 = vmatpush1.msra.mxu0 0.0
        %3106 = vmatprep.subr.mxu0 0.0
        %3107 = vmatpush1.msra.mxu0 0.0
        %3108 = vmatprep.subr.mxu0 0.0
        %3109 = vmatpush1.msra.mxu0 0.0
        %3110 = vmatprep.subr.mxu0 0.0
        %3111 = vmatpush1.msra.mxu0 0.0
        %3112 = vmatprep.subr.mxu0 0.0
        %3113 = vmatpush1.msra.mxu0 0.0
        %3114 = vmatprep.mubr.f32.mxu0 0.0
        %v3115 = vand.u32 %v2773, 4294901760
        %v3116 = vsub.f32 %v2773, %v3115
        %3117 = vmatmul.mubr.f32.gmra.mrb[0].mxu0 %v3116
        %v3118 = vpop.f32.mrb[0].mxu0
        %v3119 = vadd.f32 %v3009, %v3118
        %v3120 = vpop.f32.mrb[0].mxu0
        %v3121 = vadd.f32 %v3011, %v3120
        %3122 = vmatprep.mubr.f32.mxu0 0.0
        %v3123 = vand.u32 %v2776, 4294901760
        %v3124 = vsub.f32 %v2776, %v3123
        %3125 = vmatmul.mubr.f32.gmra.mrb[0].mxu0 %v3124
        %v3126 = vpop.f32.mrb[0].mxu0
        %v3127 = vadd.f32 %v3016, %v3126
        %v3128 = vpop.f32.mrb[0].mxu0
        %v3129 = vadd.f32 %v3018, %v3128
        %3130 = vmatprep.mubr.f32.mxu0 0.0
        %v3131 = vand.u32 %v2779, 4294901760
        %v3132 = vsub.f32 %v2779, %v3131
        %3133 = vmatmul.mubr.f32.gmra.mrb[0].mxu0 %v3132
        %v3134 = vpop.f32.mrb[0].mxu0
        %v3135 = vadd.f32 %v3023, %v3134
        %v3136 = vpop.f32.mrb[0].mxu0
        %v3137 = vadd.f32 %v3025, %v3136
        %3138 = vmatprep.mubr.f32.mxu0 0.0
        %v3139 = vand.u32 %v2782, 4294901760
        %v3140 = vsub.f32 %v2782, %v3139
        %3141 = vmatmul.mubr.f32.gmra.mrb[0].mxu0 %v3140
        %v3142 = vpop.f32.mrb[0].mxu0
        %v3143 = vadd.f32 %v3030, %v3142
        %v3144 = vpop.f32.mrb[0].mxu0
        %v3145 = vadd.f32 %v3032, %v3144
        %3146 = vdwg.mxu0
        %v3147 = vand.u32 %v2118, 4294901760
        %3148 = vmatprep.subr.mxu0 %v3147
        %v3149 = vand.u32 %v2014, 4294901760
        %3150 = vmatpush1.msra.mxu0 %v3149
        %v3151 = vand.u32 %v2326, 4294901760
        %3152 = vmatprep.subr.mxu0 %v3151
        %v3153 = vand.u32 %v2222, 4294901760
        %3154 = vmatpush1.msra.mxu0 %v3153
        %v3155 = vand.u32 %v2534, 4294901760
        %3156 = vmatprep.subr.mxu0 %v3155
        %v3157 = vand.u32 %v2430, 4294901760
        %3158 = vmatpush1.msra.mxu0 %v3157
        %v3159 = vand.u32 %v2742, 4294901760
        %3160 = vmatprep.subr.mxu0 %v3159
        %v3161 = vand.u32 %v2638, 4294901760
        %3162 = vmatpush1.msra.mxu0 %v3161
        %3163 = vmatprep.subr.mxu0 0.0
        %3164 = vmatpush1.msra.mxu0 0.0
        %3165 = vmatprep.subr.mxu0 0.0
        %3166 = vmatpush1.msra.mxu0 0.0
        %3167 = vmatprep.subr.mxu0 0.0
        %3168 = vmatpush1.msra.mxu0 0.0
        %3169 = vmatprep.subr.mxu0 0.0
        %3170 = vmatpush1.msra.mxu0 0.0
        %3171 = vmatprep.subr.mxu0 0.0
        %3172 = vmatpush1.msra.mxu0 0.0
        %3173 = vmatprep.subr.mxu0 0.0
        %3174 = vmatpush1.msra.mxu0 0.0
        %3175 = vmatprep.subr.mxu0 0.0
        %3176 = vmatpush1.msra.mxu0 0.0
        %3177 = vmatprep.subr.mxu0 0.0
        %3178 = vmatpush1.msra.mxu0 0.0
        %3179 = vmatprep.subr.mxu0 0.0
        %3180 = vmatpush1.msra.mxu0 0.0
        %3181 = vmatprep.subr.mxu0 0.0
        %3182 = vmatpush1.msra.mxu0 0.0
        %3183 = vmatprep.subr.mxu0 0.0
        %3184 = vmatpush1.msra.mxu0 0.0
        %3185 = vmatprep.subr.mxu0 0.0
        %3186 = vmatpush1.msra.mxu0 0.0
        %3187 = vmatprep.subr.mxu0 0.0
        %3188 = vmatpush1.msra.mxu0 0.0
        %3189 = vmatprep.subr.mxu0 0.0
        %3190 = vmatpush1.msra.mxu0 0.0
        %3191 = vmatprep.subr.mxu0 0.0
        %3192 = vmatpush1.msra.mxu0 0.0
        %3193 = vmatprep.subr.mxu0 0.0
        %3194 = vmatpush1.msra.mxu0 0.0
        %3195 = vmatprep.subr.mxu0 0.0
        %3196 = vmatpush1.msra.mxu0 0.0
        %3197 = vmatprep.subr.mxu0 0.0
        %3198 = vmatpush1.msra.mxu0 0.0
        %3199 = vmatprep.subr.mxu0 0.0
        %3200 = vmatpush1.msra.mxu0 0.0
        %3201 = vmatprep.subr.mxu0 0.0
        %3202 = vmatpush1.msra.mxu0 0.0
        %3203 = vmatprep.subr.mxu0 0.0
        %3204 = vmatpush1.msra.mxu0 0.0
        %3205 = vmatprep.subr.mxu0 0.0
        %3206 = vmatpush1.msra.mxu0 0.0
        %3207 = vmatprep.subr.mxu0 0.0
        %3208 = vmatpush1.msra.mxu0 0.0
        %3209 = vmatprep.subr.mxu0 0.0
        %3210 = vmatpush1.msra.mxu0 0.0
        %3211 = vmatprep.subr.mxu0 0.0
        %3212 = vmatpush1.msra.mxu0 0.0
        %3213 = vmatprep.subr.mxu0 0.0
        %3214 = vmatpush1.msra.mxu0 0.0
        %3215 = vmatprep.subr.mxu0 0.0
        %3216 = vmatpush1.msra.mxu0 0.0
        %3217 = vmatprep.subr.mxu0 0.0
        %3218 = vmatpush1.msra.mxu0 0.0
        %3219 = vmatprep.mubr.f32.mxu0 0.0
        %v3220 = vand.u32 %v2773, 4294901760
        %v3221 = vsub.f32 %v2773, %v3220
        %v3222 = vand.u32 %v3221, 4294901760
        %3223 = vmatmul.mubr.f32.gmra.mrb[0].mxu0 %v3222
        %v3224 = vpop.f32.mrb[0].mxu0
        %v3225 = vadd.f32 %v3119, %v3224
        %v3226 = vpop.f32.mrb[0].mxu0
        %v3227 = vadd.f32 %v3121, %v3226
        %3228 = vmatprep.mubr.f32.mxu0 0.0
        %v3229 = vand.u32 %v2776, 4294901760
        %v3230 = vsub.f32 %v2776, %v3229
        %v3231 = vand.u32 %v3230, 4294901760
        %3232 = vmatmul.mubr.f32.gmra.mrb[0].mxu0 %v3231
        %v3233 = vpop.f32.mrb[0].mxu0
        %v3234 = vadd.f32 %v3127, %v3233
        %v3235 = vpop.f32.mrb[0].mxu0
        %v3236 = vadd.f32 %v3129, %v3235
        %3237 = vmatprep.mubr.f32.mxu0 0.0
        %v3238 = vand.u32 %v2779, 4294901760
        %v3239 = vsub.f32 %v2779, %v3238
        %v3240 = vand.u32 %v3239, 4294901760
        %3241 = vmatmul.mubr.f32.gmra.mrb[0].mxu0 %v3240
        %v3242 = vpop.f32.mrb[0].mxu0
        %v3243 = vadd.f32 %v3135, %v3242
        %v3244 = vpop.f32.mrb[0].mxu0
        %v3245 = vadd.f32 %v3137, %v3244
        %3246 = vmatprep.mubr.f32.mxu0 0.0
        %v3247 = vand.u32 %v2782, 4294901760
        %v3248 = vsub.f32 %v2782, %v3247
        %v3249 = vand.u32 %v3248, 4294901760
        %3250 = vmatmul.mubr.f32.gmra.mrb[0].mxu0 %v3249
        %v3251 = vpop.f32.mrb[0].mxu0
        %v3252 = vadd.f32 %v3143, %v3251
        %v3253 = vpop.f32.mrb[0].mxu0
        %v3254 = vadd.f32 %v3145, %v3253
        %3255 = vdwg.mxu0
        %v3256 = vand.u32 %v2118, 4294901760
        %v3257 = vsub.f32 %v2118, %v3256
        %v3258 = vand.u32 %v3257, 4294901760
        %3259 = vmatprep.subr.mxu0 %v3258
        %v3260 = vand.u32 %v2014, 4294901760
        %v3261 = vsub.f32 %v2014, %v3260
        %v3262 = vand.u32 %v3261, 4294901760
        %3263 = vmatpush1.msra.mxu0 %v3262
        %v3264 = vand.u32 %v2326, 4294901760
        %v3265 = vsub.f32 %v2326, %v3264
        %v3266 = vand.u32 %v3265, 4294901760
        %3267 = vmatprep.subr.mxu0 %v3266
        %v3268 = vand.u32 %v2222, 4294901760
        %v3269 = vsub.f32 %v2222, %v3268
        %v3270 = vand.u32 %v3269, 4294901760
        %3271 = vmatpush1.msra.mxu0 %v3270
        %v3272 = vand.u32 %v2534, 4294901760
        %v3273 = vsub.f32 %v2534, %v3272
        %v3274 = vand.u32 %v3273, 4294901760
        %3275 = vmatprep.subr.mxu0 %v3274
        %v3276 = vand.u32 %v2430, 4294901760
        %v3277 = vsub.f32 %v2430, %v3276
        %v3278 = vand.u32 %v3277, 4294901760
        %3279 = vmatpush1.msra.mxu0 %v3278
        %v3280 = vand.u32 %v2742, 4294901760
        %v3281 = vsub.f32 %v2742, %v3280
        %v3282 = vand.u32 %v3281, 4294901760
        %3283 = vmatprep.subr.mxu0 %v3282
        %v3284 = vand.u32 %v2638, 4294901760
        %v3285 = vsub.f32 %v2638, %v3284
        %v3286 = vand.u32 %v3285, 4294901760
        %3287 = vmatpush1.msra.mxu0 %v3286
        %3288 = vmatprep.subr.mxu0 0.0
        %3289 = vmatpush1.msra.mxu0 0.0
        %3290 = vmatprep.subr.mxu0 0.0
        %3291 = vmatpush1.msra.mxu0 0.0
        %3292 = vmatprep.subr.mxu0 0.0
        %3293 = vmatpush1.msra.mxu0 0.0
        %3294 = vmatprep.subr.mxu0 0.0
        %3295 = vmatpush1.msra.mxu0 0.0
        %3296 = vmatprep.subr.mxu0 0.0
        %3297 = vmatpush1.msra.mxu0 0.0
        %3298 = vmatprep.subr.mxu0 0.0
        %3299 = vmatpush1.msra.mxu0 0.0
        %3300 = vmatprep.subr.mxu0 0.0
        %3301 = vmatpush1.msra.mxu0 0.0
        %3302 = vmatprep.subr.mxu0 0.0
        %3303 = vmatpush1.msra.mxu0 0.0
        %3304 = vmatprep.subr.mxu0 0.0
        %3305 = vmatpush1.msra.mxu0 0.0
        %3306 = vmatprep.subr.mxu0 0.0
        %3307 = vmatpush1.msra.mxu0 0.0
        %3308 = vmatprep.subr.mxu0 0.0
        %3309 = vmatpush1.msra.mxu0 0.0
        %3310 = vmatprep.subr.mxu0 0.0
        %3311 = vmatpush1.msra.mxu0 0.0
        %3312 = vmatprep.subr.mxu0 0.0
        %3313 = vmatpush1.msra.mxu0 0.0
        %3314 = vmatprep.subr.mxu0 0.0
        %3315 = vmatpush1.msra.mxu0 0.0
        %3316 = vmatprep.subr.mxu0 0.0
        %3317 = vmatpush1.msra.mxu0 0.0
        %3318 = vmatprep.subr.mxu0 0.0
        %3319 = vmatpush1.msra.mxu0 0.0
        %3320 = vmatprep.subr.mxu0 0.0
        %3321 = vmatpush1.msra.mxu0 0.0
        %3322 = vmatprep.subr.mxu0 0.0
        %3323 = vmatpush1.msra.mxu0 0.0
        %3324 = vmatprep.subr.mxu0 0.0
        %3325 = vmatpush1.msra.mxu0 0.0
        %3326 = vmatprep.subr.mxu0 0.0
        %3327 = vmatpush1.msra.mxu0 0.0
        %3328 = vmatprep.subr.mxu0 0.0
        %3329 = vmatpush1.msra.mxu0 0.0
        %3330 = vmatprep.subr.mxu0 0.0
        %3331 = vmatpush1.msra.mxu0 0.0
        %3332 = vmatprep.subr.mxu0 0.0
        %3333 = vmatpush1.msra.mxu0 0.0
        %3334 = vmatprep.subr.mxu0 0.0
        %3335 = vmatpush1.msra.mxu0 0.0
        %3336 = vmatprep.subr.mxu0 0.0
        %3337 = vmatpush1.msra.mxu0 0.0
        %3338 = vmatprep.subr.mxu0 0.0
        %3339 = vmatpush1.msra.mxu0 0.0
        %3340 = vmatprep.subr.mxu0 0.0
        %3341 = vmatpush1.msra.mxu0 0.0
        %3342 = vmatprep.subr.mxu0 0.0
        %3343 = vmatpush1.msra.mxu0 0.0
        %3344 = vmatprep.mubr.f32.mxu0 0.0
        %v3345 = vand.u32 %v2773, 4294901760
        %3346 = vmatmul.mubr.f32.gmra.mrb[0].mxu0 %v3345
        %v3347 = vpop.f32.mrb[0].mxu0
        %v3348 = vadd.f32 %v3225, %v3347
        %v3349 = vpop.f32.mrb[0].mxu0
        %v3350 = vadd.f32 %v3227, %v3349
        %3351 = vmatprep.mubr.f32.mxu0 0.0
        %v3352 = vand.u32 %v2776, 4294901760
        %3353 = vmatmul.mubr.f32.gmra.mrb[0].mxu0 %v3352
        %v3354 = vpop.f32.mrb[0].mxu0
        %v3355 = vadd.f32 %v3234, %v3354
        %v3356 = vpop.f32.mrb[0].mxu0
        %v3357 = vadd.f32 %v3236, %v3356
        %3358 = vmatprep.mubr.f32.mxu0 0.0
        %v3359 = vand.u32 %v2779, 4294901760
        %3360 = vmatmul.mubr.f32.gmra.mrb[0].mxu0 %v3359
        %v3361 = vpop.f32.mrb[0].mxu0
        %v3362 = vadd.f32 %v3243, %v3361
        %v3363 = vpop.f32.mrb[0].mxu0
        %v3364 = vadd.f32 %v3245, %v3363
        %3365 = vmatprep.mubr.f32.mxu0 0.0
        %v3366 = vand.u32 %v2782, 4294901760
        %3367 = vmatmul.mubr.f32.gmra.mrb[0].mxu0 %v3366
        %v3368 = vpop.f32.mrb[0].mxu0
        %v3369 = vadd.f32 %v3252, %v3368
        %v3370 = vpop.f32.mrb[0].mxu0
        %v3371 = vadd.f32 %v3254, %v3370
        %3372 = vdwg.mxu0
        %v3373 = vand.u32 %v2118, 4294901760
        %3374 = vmatprep.subr.mxu0 %v3373
        %v3375 = vand.u32 %v2014, 4294901760
        %3376 = vmatpush1.msra.mxu0 %v3375
        %v3377 = vand.u32 %v2326, 4294901760
        %3378 = vmatprep.subr.mxu0 %v3377
        %v3379 = vand.u32 %v2222, 4294901760
        %3380 = vmatpush1.msra.mxu0 %v3379
        %v3381 = vand.u32 %v2534, 4294901760
        %3382 = vmatprep.subr.mxu0 %v3381
        %v3383 = vand.u32 %v2430, 4294901760
        %3384 = vmatpush1.msra.mxu0 %v3383
        %v3385 = vand.u32 %v2742, 4294901760
        %3386 = vmatprep.subr.mxu0 %v3385
        %v3387 = vand.u32 %v2638, 4294901760
        %3388 = vmatpush1.msra.mxu0 %v3387
        %3389 = vmatprep.subr.mxu0 0.0
        %3390 = vmatpush1.msra.mxu0 0.0
        %3391 = vmatprep.subr.mxu0 0.0
        %3392 = vmatpush1.msra.mxu0 0.0
        %3393 = vmatprep.subr.mxu0 0.0
        %3394 = vmatpush1.msra.mxu0 0.0
        %3395 = vmatprep.subr.mxu0 0.0
        %3396 = vmatpush1.msra.mxu0 0.0
        %3397 = vmatprep.subr.mxu0 0.0
        %3398 = vmatpush1.msra.mxu0 0.0
        %3399 = vmatprep.subr.mxu0 0.0
        %3400 = vmatpush1.msra.mxu0 0.0
        %3401 = vmatprep.subr.mxu0 0.0
        %3402 = vmatpush1.msra.mxu0 0.0
        %3403 = vmatprep.subr.mxu0 0.0
        %3404 = vmatpush1.msra.mxu0 0.0
        %3405 = vmatprep.subr.mxu0 0.0
        %3406 = vmatpush1.msra.mxu0 0.0
        %3407 = vmatprep.subr.mxu0 0.0
        %3408 = vmatpush1.msra.mxu0 0.0
        %3409 = vmatprep.subr.mxu0 0.0
        %3410 = vmatpush1.msra.mxu0 0.0
        %3411 = vmatprep.subr.mxu0 0.0
        %3412 = vmatpush1.msra.mxu0 0.0
        %3413 = vmatprep.subr.mxu0 0.0
        %3414 = vmatpush1.msra.mxu0 0.0
        %3415 = vmatprep.subr.mxu0 0.0
        %3416 = vmatpush1.msra.mxu0 0.0
        %3417 = vmatprep.subr.mxu0 0.0
        %3418 = vmatpush1.msra.mxu0 0.0
        %3419 = vmatprep.subr.mxu0 0.0
        %3420 = vmatpush1.msra.mxu0 0.0
        %3421 = vmatprep.subr.mxu0 0.0
        %3422 = vmatpush1.msra.mxu0 0.0
        %3423 = vmatprep.subr.mxu0 0.0
        %3424 = vmatpush1.msra.mxu0 0.0
        %3425 = vmatprep.subr.mxu0 0.0
        %3426 = vmatpush1.msra.mxu0 0.0
        %3427 = vmatprep.subr.mxu0 0.0
        %3428 = vmatpush1.msra.mxu0 0.0
        %3429 = vmatprep.subr.mxu0 0.0
        %3430 = vmatpush1.msra.mxu0 0.0
        %3431 = vmatprep.subr.mxu0 0.0
        %3432 = vmatpush1.msra.mxu0 0.0
        %3433 = vmatprep.subr.mxu0 0.0
        %3434 = vmatpush1.msra.mxu0 0.0
        %3435 = vmatprep.subr.mxu0 0.0
        %3436 = vmatpush1.msra.mxu0 0.0
        %3437 = vmatprep.subr.mxu0 0.0
        %3438 = vmatpush1.msra.mxu0 0.0
        %3439 = vmatprep.subr.mxu0 0.0
        %3440 = vmatpush1.msra.mxu0 0.0
        %3441 = vmatprep.subr.mxu0 0.0
        %3442 = vmatpush1.msra.mxu0 0.0
        %3443 = vmatprep.subr.mxu0 0.0
        %3444 = vmatpush1.msra.mxu0 0.0
        %3445 = vmatprep.mubr.f32.mxu0 0.0
        %v3446 = vand.u32 %v2773, 4294901760
        %3447 = vmatmul.mubr.f32.gmra.mrb[0].mxu0 %v3446
        %v3448 = vpop.f32.mrb[0].mxu0
        %v3449 = vadd.f32 %v3348, %v3448
        %v3450 = vpop.f32.mrb[0].mxu0
        %v3451 = vadd.f32 %v3350, %v3450
        %3452 = vmatprep.mubr.f32.mxu0 0.0
        %v3453 = vand.u32 %v2776, 4294901760
        %3454 = vmatmul.mubr.f32.gmra.mrb[0].mxu0 %v3453
        %v3455 = vpop.f32.mrb[0].mxu0
        %v3456 = vadd.f32 %v3355, %v3455
        %v3457 = vpop.f32.mrb[0].mxu0
        %v3458 = vadd.f32 %v3357, %v3457
        %3459 = vmatprep.mubr.f32.mxu0 0.0
        %v3460 = vand.u32 %v2779, 4294901760
        %3461 = vmatmul.mubr.f32.gmra.mrb[0].mxu0 %v3460
        %v3462 = vpop.f32.mrb[0].mxu0
        %v3463 = vadd.f32 %v3362, %v3462
        %v3464 = vpop.f32.mrb[0].mxu0
        %v3465 = vadd.f32 %v3364, %v3464
        %3466 = vmatprep.mubr.f32.mxu0 0.0
        %v3467 = vand.u32 %v2782, 4294901760
        %3468 = vmatmul.mubr.f32.gmra.mrb[0].mxu0 %v3467
        %v3469 = vpop.f32.mrb[0].mxu0
        %v3470 = vadd.f32 %v3369, %v3469
        %v3471 = vpop.f32.mrb[0].mxu0
        %v3472 = vadd.f32 %v3371, %v3471
        %3473 = vdwg.mxu0
        %v3474 = vand.u32 2147483647, %v3449
        %vm3475 = vcmp.le.f32.partialorder %v3474, 0.7853982
        %vm3476 = vcmp.lt.s32.totalorder %v3449, 0
        %v3477 = vand.u32 %v3449, 2139095040
        %v3478 = vshrl.u32 %v3477, 23
        %v3479 = vsub.s32 %v3478, 127
        %v3480 = vand.u32 2147483647, %v3449
        %v3481 = vand.u32 %v3480, 8388607
        %v3482 = vor.u32 %v3481, 8388608
        %v3483 = vsub.s32 0, %v3482
        %v3484 = vadd.s32 %v3479, 1
        %vm3485 = vcmp.gt.s32.totalorder %v3484, 0
        %v3486 = vsel %vm3485, %v3484, 0
        %v3487 = vshrl.u32 %v3486, 5
        %v3488 = vand.u32 %v3486, 31
        %v3489 = vsub.s32 32, %v3488
        %v3490 = vshrl.u32 683565275, %v3489
        %v3491 = vshll.u32 683565275, %v3488
        %v3492 = vshrl.u32 2475754826, %v3489
        %v3493 = vor.u32 %v3491, %v3492
        %v3494 = vshll.u32 2475754826, %v3488
        %v3495 = vshrl.u32 2131351028, %v3489
        %v3496 = vor.u32 %v3494, %v3495
        %v3497 = vshll.u32 2131351028, %v3488
        %v3498 = vshrl.u32 2102212464, %v3489
        %v3499 = vor.u32 %v3497, %v3498
        %v3500 = vshll.u32 2102212464, %v3488
        %v3501 = vshrl.u32 920167782, %v3489
        %v3502 = vor.u32 %v3500, %v3501
        %v3503 = vshll.u32 920167782, %v3488
        %v3504 = vshrl.u32 1326507024, %v3489
        %v3505 = vor.u32 %v3503, %v3504
        %vm3506 = vcmp.lt.s32.totalorder %v3487, 1
        %vm3507 = vcmp.lt.s32.totalorder %v3487, 2
        %vm3508 = vcmp.lt.s32.totalorder %v3487, 3
        %vm3509 = vcmp.lt.s32.totalorder %v3487, 4
        %v3510 = vsel %vm3506, %v3490, %v3493
        %v3511 = vsel %vm3509, %v3499, 2102212464
        %v3512 = vsel %vm3508, %v3496, %v3511
        %v3513 = vsel %vm3507, %v3510, %v3512
        %v3514 = vsel %vm3506, %v3493, %v3496
        %v3515 = vsel %vm3509, %v3502, 920167782
        %v3516 = vsel %vm3508, %v3499, %v3515
        %v3517 = vsel %vm3507, %v3514, %v3516
        %v3518 = vsel %vm3506, %v3496, %v3499
        %v3519 = vsel %vm3509, %v3505, 1326507024
        %v3520 = vsel %vm3508, %v3502, %v3519
        %v3521 = vsel %vm3507, %v3518, %v3520
        %v3522 = vshll.u32 %v3482, 8
        %v3523 = vmul.u32.u64.compose %v3522, %v3521
        %v3524 = vextract.low.u32 %v3523
        %v3525 = vextract.high.u32 %v3523
        %v3526 = vmul.u32.u64.compose %v3522, %v3517
        %v3527 = vextract.low.u32 %v3526
        %v3528 = vextract.high.u32 %v3526
        %v3529 = vmul.u32 %v3522, %v3513
        %v3530 = vadd.s32 %v3525, %v3527
        %vm3531 = vc.u32 %v3525, %v3527
        %v3532 = vadd.s32 %v3528, 1
        %v3533 = vsel %vm3531, %v3532, %v3528
        %v3534 = vadd.s32 %v3529, %v3533
        %v3535 = vadd.s32 %v3534, 536870912
        %v3536 = vshrl.u32 %v3535, 30
        %v3537 = vshll.u32 %v3536, 30
        %v3538 = vsub.s32 %v3534, %v3537
        %vm3539 = vcmp.lt.s32.totalorder %v3538, 0
        %v3540 = vsub.s32 0, %v3538
        %v3541 = vsel %vm3539, %v3540, %v3538
        %v3542 = vclz %v3541
        %v3543 = vsub.s32 %v3542, 2
        %vm3544 = vcmp.gt.s32.totalorder 0, %v3543
        %v3545 = vsel %vm3544, 0, %v3543
        %v3546 = vsub.s32 32, %v3545
        %v3547 = vshll.u32 %v3538, %v3545
        %v3548 = vshrl.u32 %v3530, %v3546
        %v3549 = vor.u32 %v3547, %v3548
        %v3550 = vsub.s32 4294967266, %v3545
        %v3551 = vadd.s32 %v3550, 127
        %v3552 = vshll.u32 %v3551, 23
        %v3553 = vor.u32 4788187, %v3552
        %v3554 = vand.u32 2147483647, %v3553
        %v3556 = vcvt.s32.f32 %v3549
        %v3557 = vmul.f32 %v3556, %v3554
        %v3558 = vxor.u32 %v3557, 2147483648
        %v3559 = vsel %vm3476, %v3558, %v3557
        %v3560 = vsub.s32 4, %v3536
        %v3561 = vsel %vm3476, %v3560, %v3536
        %v3562 = vsel %vm3475, %v3449, %v3559
        %v3563 = vsel %vm3475, 0, %v3561
        %v3564 = vcosq.f32.pop %v3562
        %v3565 = vsinq.f32.pop %v3562
        %vm3566 = vweird.f32 %v3449
        %v3567 = vadd.s32 %v3563, 3
        %v3568 = vand.u32 %v3567, 3
        %vm3569 = vcmp.lt.s32.totalorder %v3568, 2
        %vm3570 = vcmp.eq.s32.totalorder %v3568, 0
        %v3571 = vxor.u32 %v3565, 2147483648
        %v3572 = vsel %vm3570, %v3564, %v3571
        %vm3573 = vcmp.eq.s32.totalorder %v3568, 2
        %v3574 = vxor.u32 %v3564, 2147483648
        %v3575 = vsel %vm3573, %v3574, %v3565
        %v3576 = vsel %vm3569, %v3572, %v3575
        %v3577 = vsel %vm3566, nan, %v3576
        %v3578 = vand.u32 2147483647, %v3451
        %vm3579 = vcmp.le.f32.partialorder %v3578, 0.7853982
        %vm3580 = vcmp.lt.s32.totalorder %v3451, 0
        %v3581 = vand.u32 %v3451, 2139095040
        %v3582 = vshrl.u32 %v3581, 23
        %v3583 = vsub.s32 %v3582, 127
        %v3584 = vand.u32 2147483647, %v3451
        %v3585 = vand.u32 %v3584, 8388607
        %v3586 = vor.u32 %v3585, 8388608
        %v3587 = vsub.s32 0, %v3586
        %v3588 = vadd.s32 %v3583, 1
        %vm3589 = vcmp.gt.s32.totalorder %v3588, 0
        %v3590 = vsel %vm3589, %v3588, 0
        %v3591 = vshrl.u32 %v3590, 5
        %v3592 = vand.u32 %v3590, 31
        %v3593 = vsub.s32 32, %v3592
        %v3594 = vshrl.u32 683565275, %v3593
        %v3595 = vshll.u32 683565275, %v3592
        %v3596 = vshrl.u32 2475754826, %v3593
        %v3597 = vor.u32 %v3595, %v3596
        %v3598 = vshll.u32 2475754826, %v3592
        %v3599 = vshrl.u32 2131351028, %v3593
        %v3600 = vor.u32 %v3598, %v3599
        %v3601 = vshll.u32 2131351028, %v3592
        %v3602 = vshrl.u32 2102212464, %v3593
        %v3603 = vor.u32 %v3601, %v3602
        %v3604 = vshll.u32 2102212464, %v3592
        %v3605 = vshrl.u32 920167782, %v3593
        %v3606 = vor.u32 %v3604, %v3605
        %v3607 = vshll.u32 920167782, %v3592
        %v3608 = vshrl.u32 1326507024, %v3593
        %v3609 = vor.u32 %v3607, %v3608
        %vm3610 = vcmp.lt.s32.totalorder %v3591, 1
        %vm3611 = vcmp.lt.s32.totalorder %v3591, 2
        %vm3612 = vcmp.lt.s32.totalorder %v3591, 3
        %vm3613 = vcmp.lt.s32.totalorder %v3591, 4
        %v3614 = vsel %vm3610, %v3594, %v3597
        %v3615 = vsel %vm3613, %v3603, 2102212464
        %v3616 = vsel %vm3612, %v3600, %v3615
        %v3617 = vsel %vm3611, %v3614, %v3616
        %v3618 = vsel %vm3610, %v3597, %v3600
        %v3619 = vsel %vm3613, %v3606, 920167782
        %v3620 = vsel %vm3612, %v3603, %v3619
        %v3621 = vsel %vm3611, %v3618, %v3620
        %v3622 = vsel %vm3610, %v3600, %v3603
        %v3623 = vsel %vm3613, %v3609, 1326507024
        %v3624 = vsel %vm3612, %v3606, %v3623
        %v3625 = vsel %vm3611, %v3622, %v3624
        %v3626 = vshll.u32 %v3586, 8
        %v3627 = vmul.u32.u64.compose %v3626, %v3625
        %v3628 = vextract.low.u32 %v3627
        %v3629 = vextract.high.u32 %v3627
        %v3630 = vmul.u32.u64.compose %v3626, %v3621
        %v3631 = vextract.low.u32 %v3630
        %v3632 = vextract.high.u32 %v3630
        %v3633 = vmul.u32 %v3626, %v3617
        %v3634 = vadd.s32 %v3629, %v3631
        %vm3635 = vc.u32 %v3629, %v3631
        %v3636 = vadd.s32 %v3632, 1
        %v3637 = vsel %vm3635, %v3636, %v3632
        %v3638 = vadd.s32 %v3633, %v3637
        %v3639 = vadd.s32 %v3638, 536870912
        %v3640 = vshrl.u32 %v3639, 30
        %v3641 = vshll.u32 %v3640, 30
        %v3642 = vsub.s32 %v3638, %v3641
        %vm3643 = vcmp.lt.s32.totalorder %v3642, 0
        %v3644 = vsub.s32 0, %v3642
        %v3645 = vsel %vm3643, %v3644, %v3642
        %v3646 = vclz %v3645
        %v3647 = vsub.s32 %v3646, 2
        %vm3648 = vcmp.gt.s32.totalorder 0, %v3647
        %v3649 = vsel %vm3648, 0, %v3647
        %v3650 = vsub.s32 32, %v3649
        %v3651 = vshll.u32 %v3642, %v3649
        %v3652 = vshrl.u32 %v3634, %v3650
        %v3653 = vor.u32 %v3651, %v3652
        %v3654 = vsub.s32 4294967266, %v3649
        %v3655 = vadd.s32 %v3654, 127
        %v3656 = vshll.u32 %v3655, 23
        %v3657 = vor.u32 4788187, %v3656
        %v3658 = vand.u32 2147483647, %v3657
        %v3660 = vcvt.s32.f32 %v3653
        %v3661 = vmul.f32 %v3660, %v3658
        %v3662 = vxor.u32 %v3661, 2147483648
        %v3663 = vsel %vm3580, %v3662, %v3661
        %v3664 = vsub.s32 4, %v3640
        %v3665 = vsel %vm3580, %v3664, %v3640
        %v3666 = vsel %vm3579, %v3451, %v3663
        %v3667 = vsel %vm3579, 0, %v3665
        %v3668 = vcosq.f32.pop %v3666
        %v3669 = vsinq.f32.pop %v3666
        %vm3670 = vweird.f32 %v3451
        %v3671 = vadd.s32 %v3667, 3
        %v3672 = vand.u32 %v3671, 3
        %vm3673 = vcmp.lt.s32.totalorder %v3672, 2
        %vm3674 = vcmp.eq.s32.totalorder %v3672, 0
        %v3675 = vxor.u32 %v3669, 2147483648
        %v3676 = vsel %vm3674, %v3668, %v3675
        %vm3677 = vcmp.eq.s32.totalorder %v3672, 2
        %v3678 = vxor.u32 %v3668, 2147483648
        %v3679 = vsel %vm3677, %v3678, %v3669
        %v3680 = vsel %vm3673, %v3676, %v3679
        %v3681 = vsel %vm3670, nan, %v3680
        %v3682 = vand.u32 2147483647, %v3456
        %vm3683 = vcmp.le.f32.partialorder %v3682, 0.7853982
        %vm3684 = vcmp.lt.s32.totalorder %v3456, 0
        %v3685 = vand.u32 %v3456, 2139095040
        %v3686 = vshrl.u32 %v3685, 23
        %v3687 = vsub.s32 %v3686, 127
        %v3688 = vand.u32 2147483647, %v3456
        %v3689 = vand.u32 %v3688, 8388607
        %v3690 = vor.u32 %v3689, 8388608
        %v3691 = vsub.s32 0, %v3690
        %v3692 = vadd.s32 %v3687, 1
        %vm3693 = vcmp.gt.s32.totalorder %v3692, 0
        %v3694 = vsel %vm3693, %v3692, 0
        %v3695 = vshrl.u32 %v3694, 5
        %v3696 = vand.u32 %v3694, 31
        %v3697 = vsub.s32 32, %v3696
        %v3698 = vshrl.u32 683565275, %v3697
        %v3699 = vshll.u32 683565275, %v3696
        %v3700 = vshrl.u32 2475754826, %v3697
        %v3701 = vor.u32 %v3699, %v3700
        %v3702 = vshll.u32 2475754826, %v3696
        %v3703 = vshrl.u32 2131351028, %v3697
        %v3704 = vor.u32 %v3702, %v3703
        %v3705 = vshll.u32 2131351028, %v3696
        %v3706 = vshrl.u32 2102212464, %v3697
        %v3707 = vor.u32 %v3705, %v3706
        %v3708 = vshll.u32 2102212464, %v3696
        %v3709 = vshrl.u32 920167782, %v3697
        %v3710 = vor.u32 %v3708, %v3709
        %v3711 = vshll.u32 920167782, %v3696
        %v3712 = vshrl.u32 1326507024, %v3697
        %v3713 = vor.u32 %v3711, %v3712
        %vm3714 = vcmp.lt.s32.totalorder %v3695, 1
        %vm3715 = vcmp.lt.s32.totalorder %v3695, 2
        %vm3716 = vcmp.lt.s32.totalorder %v3695, 3
        %vm3717 = vcmp.lt.s32.totalorder %v3695, 4
        %v3718 = vsel %vm3714, %v3698, %v3701
        %v3719 = vsel %vm3717, %v3707, 2102212464
        %v3720 = vsel %vm3716, %v3704, %v3719
        %v3721 = vsel %vm3715, %v3718, %v3720
        %v3722 = vsel %vm3714, %v3701, %v3704
        %v3723 = vsel %vm3717, %v3710, 920167782
        %v3724 = vsel %vm3716, %v3707, %v3723
        %v3725 = vsel %vm3715, %v3722, %v3724
        %v3726 = vsel %vm3714, %v3704, %v3707
        %v3727 = vsel %vm3717, %v3713, 1326507024
        %v3728 = vsel %vm3716, %v3710, %v3727
        %v3729 = vsel %vm3715, %v3726, %v3728
        %v3730 = vshll.u32 %v3690, 8
        %v3731 = vmul.u32.u64.compose %v3730, %v3729
        %v3732 = vextract.low.u32 %v3731
        %v3733 = vextract.high.u32 %v3731
        %v3734 = vmul.u32.u64.compose %v3730, %v3725
        %v3735 = vextract.low.u32 %v3734
        %v3736 = vextract.high.u32 %v3734
        %v3737 = vmul.u32 %v3730, %v3721
        %v3738 = vadd.s32 %v3733, %v3735
        %vm3739 = vc.u32 %v3733, %v3735
        %v3740 = vadd.s32 %v3736, 1
        %v3741 = vsel %vm3739, %v3740, %v3736
        %v3742 = vadd.s32 %v3737, %v3741
        %v3743 = vadd.s32 %v3742, 536870912
        %v3744 = vshrl.u32 %v3743, 30
        %v3745 = vshll.u32 %v3744, 30
        %v3746 = vsub.s32 %v3742, %v3745
        %vm3747 = vcmp.lt.s32.totalorder %v3746, 0
        %v3748 = vsub.s32 0, %v3746
        %v3749 = vsel %vm3747, %v3748, %v3746
        %v3750 = vclz %v3749
        %v3751 = vsub.s32 %v3750, 2
        %vm3752 = vcmp.gt.s32.totalorder 0, %v3751
        %v3753 = vsel %vm3752, 0, %v3751
        %v3754 = vsub.s32 32, %v3753
        %v3755 = vshll.u32 %v3746, %v3753
        %v3756 = vshrl.u32 %v3738, %v3754
        %v3757 = vor.u32 %v3755, %v3756
        %v3758 = vsub.s32 4294967266, %v3753
        %v3759 = vadd.s32 %v3758, 127
        %v3760 = vshll.u32 %v3759, 23
        %v3761 = vor.u32 4788187, %v3760
        %v3762 = vand.u32 2147483647, %v3761
        %v3764 = vcvt.s32.f32 %v3757
        %v3765 = vmul.f32 %v3764, %v3762
        %v3766 = vxor.u32 %v3765, 2147483648
        %v3767 = vsel %vm3684, %v3766, %v3765
        %v3768 = vsub.s32 4, %v3744
        %v3769 = vsel %vm3684, %v3768, %v3744
        %v3770 = vsel %vm3683, %v3456, %v3767
        %v3771 = vsel %vm3683, 0, %v3769
        %v3772 = vcosq.f32.pop %v3770
        %v3773 = vsinq.f32.pop %v3770
        %vm3774 = vweird.f32 %v3456
        %v3775 = vadd.s32 %v3771, 3
        %v3776 = vand.u32 %v3775, 3
        %vm3777 = vcmp.lt.s32.totalorder %v3776, 2
        %vm3778 = vcmp.eq.s32.totalorder %v3776, 0
        %v3779 = vxor.u32 %v3773, 2147483648
        %v3780 = vsel %vm3778, %v3772, %v3779
        %vm3781 = vcmp.eq.s32.totalorder %v3776, 2
        %v3782 = vxor.u32 %v3772, 2147483648
        %v3783 = vsel %vm3781, %v3782, %v3773
        %v3784 = vsel %vm3777, %v3780, %v3783
        %v3785 = vsel %vm3774, nan, %v3784
        %v3786 = vand.u32 2147483647, %v3458
        %vm3787 = vcmp.le.f32.partialorder %v3786, 0.7853982
        %vm3788 = vcmp.lt.s32.totalorder %v3458, 0
        %v3789 = vand.u32 %v3458, 2139095040
        %v3790 = vshrl.u32 %v3789, 23
        %v3791 = vsub.s32 %v3790, 127
        %v3792 = vand.u32 2147483647, %v3458
        %v3793 = vand.u32 %v3792, 8388607
        %v3794 = vor.u32 %v3793, 8388608
        %v3795 = vsub.s32 0, %v3794
        %v3796 = vadd.s32 %v3791, 1
        %vm3797 = vcmp.gt.s32.totalorder %v3796, 0
        %v3798 = vsel %vm3797, %v3796, 0
        %v3799 = vshrl.u32 %v3798, 5
        %v3800 = vand.u32 %v3798, 31
        %v3801 = vsub.s32 32, %v3800
        %v3802 = vshrl.u32 683565275, %v3801
        %v3803 = vshll.u32 683565275, %v3800
        %v3804 = vshrl.u32 2475754826, %v3801
        %v3805 = vor.u32 %v3803, %v3804
        %v3806 = vshll.u32 2475754826, %v3800
        %v3807 = vshrl.u32 2131351028, %v3801
        %v3808 = vor.u32 %v3806, %v3807
        %v3809 = vshll.u32 2131351028, %v3800
        %v3810 = vshrl.u32 2102212464, %v3801
        %v3811 = vor.u32 %v3809, %v3810
        %v3812 = vshll.u32 2102212464, %v3800
        %v3813 = vshrl.u32 920167782, %v3801
        %v3814 = vor.u32 %v3812, %v3813
        %v3815 = vshll.u32 920167782, %v3800
        %v3816 = vshrl.u32 1326507024, %v3801
        %v3817 = vor.u32 %v3815, %v3816
        %vm3818 = vcmp.lt.s32.totalorder %v3799, 1
        %vm3819 = vcmp.lt.s32.totalorder %v3799, 2
        %vm3820 = vcmp.lt.s32.totalorder %v3799, 3
        %vm3821 = vcmp.lt.s32.totalorder %v3799, 4
        %v3822 = vsel %vm3818, %v3802, %v3805
        %v3823 = vsel %vm3821, %v3811, 2102212464
        %v3824 = vsel %vm3820, %v3808, %v3823
        %v3825 = vsel %vm3819, %v3822, %v3824
        %v3826 = vsel %vm3818, %v3805, %v3808
        %v3827 = vsel %vm3821, %v3814, 920167782
        %v3828 = vsel %vm3820, %v3811, %v3827
        %v3829 = vsel %vm3819, %v3826, %v3828
        %v3830 = vsel %vm3818, %v3808, %v3811
        %v3831 = vsel %vm3821, %v3817, 1326507024
        %v3832 = vsel %vm3820, %v3814, %v3831
        %v3833 = vsel %vm3819, %v3830, %v3832
        %v3834 = vshll.u32 %v3794, 8
        %v3835 = vmul.u32.u64.compose %v3834, %v3833
        %v3836 = vextract.low.u32 %v3835
        %v3837 = vextract.high.u32 %v3835
        %v3838 = vmul.u32.u64.compose %v3834, %v3829
        %v3839 = vextract.low.u32 %v3838
        %v3840 = vextract.high.u32 %v3838
        %v3841 = vmul.u32 %v3834, %v3825
        %v3842 = vadd.s32 %v3837, %v3839
        %vm3843 = vc.u32 %v3837, %v3839
        %v3844 = vadd.s32 %v3840, 1
        %v3845 = vsel %vm3843, %v3844, %v3840
        %v3846 = vadd.s32 %v3841, %v3845
        %v3847 = vadd.s32 %v3846, 536870912
        %v3848 = vshrl.u32 %v3847, 30
        %v3849 = vshll.u32 %v3848, 30
        %v3850 = vsub.s32 %v3846, %v3849
        %vm3851 = vcmp.lt.s32.totalorder %v3850, 0
        %v3852 = vsub.s32 0, %v3850
        %v3853 = vsel %vm3851, %v3852, %v3850
        %v3854 = vclz %v3853
        %v3855 = vsub.s32 %v3854, 2
        %vm3856 = vcmp.gt.s32.totalorder 0, %v3855
        %v3857 = vsel %vm3856, 0, %v3855
        %v3858 = vsub.s32 32, %v3857
        %v3859 = vshll.u32 %v3850, %v3857
        %v3860 = vshrl.u32 %v3842, %v3858
        %v3861 = vor.u32 %v3859, %v3860
        %v3862 = vsub.s32 4294967266, %v3857
        %v3863 = vadd.s32 %v3862, 127
        %v3864 = vshll.u32 %v3863, 23
        %v3865 = vor.u32 4788187, %v3864
        %v3866 = vand.u32 2147483647, %v3865
        %v3868 = vcvt.s32.f32 %v3861
        %v3869 = vmul.f32 %v3868, %v3866
        %v3870 = vxor.u32 %v3869, 2147483648
        %v3871 = vsel %vm3788, %v3870, %v3869
        %v3872 = vsub.s32 4, %v3848
        %v3873 = vsel %vm3788, %v3872, %v3848
        %v3874 = vsel %vm3787, %v3458, %v3871
        %v3875 = vsel %vm3787, 0, %v3873
        %v3876 = vcosq.f32.pop %v3874
        %v3877 = vsinq.f32.pop %v3874
        %vm3878 = vweird.f32 %v3458
        %v3879 = vadd.s32 %v3875, 3
        %v3880 = vand.u32 %v3879, 3
        %vm3881 = vcmp.lt.s32.totalorder %v3880, 2
        %vm3882 = vcmp.eq.s32.totalorder %v3880, 0
        %v3883 = vxor.u32 %v3877, 2147483648
        %v3884 = vsel %vm3882, %v3876, %v3883
        %vm3885 = vcmp.eq.s32.totalorder %v3880, 2
        %v3886 = vxor.u32 %v3876, 2147483648
        %v3887 = vsel %vm3885, %v3886, %v3877
        %v3888 = vsel %vm3881, %v3884, %v3887
        %v3889 = vsel %vm3878, nan, %v3888
        %v3890 = vand.u32 2147483647, %v3463
        %vm3891 = vcmp.le.f32.partialorder %v3890, 0.7853982
        %vm3892 = vcmp.lt.s32.totalorder %v3463, 0
        %v3893 = vand.u32 %v3463, 2139095040
        %v3894 = vshrl.u32 %v3893, 23
        %v3895 = vsub.s32 %v3894, 127
        %v3896 = vand.u32 2147483647, %v3463
        %v3897 = vand.u32 %v3896, 8388607
        %v3898 = vor.u32 %v3897, 8388608
        %v3899 = vsub.s32 0, %v3898
        %v3900 = vadd.s32 %v3895, 1
        %vm3901 = vcmp.gt.s32.totalorder %v3900, 0
        %v3902 = vsel %vm3901, %v3900, 0
        %v3903 = vshrl.u32 %v3902, 5
        %v3904 = vand.u32 %v3902, 31
        %v3905 = vsub.s32 32, %v3904
        %v3906 = vshrl.u32 683565275, %v3905
        %v3907 = vshll.u32 683565275, %v3904
        %v3908 = vshrl.u32 2475754826, %v3905
        %v3909 = vor.u32 %v3907, %v3908
        %v3910 = vshll.u32 2475754826, %v3904
        %v3911 = vshrl.u32 2131351028, %v3905
        %v3912 = vor.u32 %v3910, %v3911
        %v3913 = vshll.u32 2131351028, %v3904
        %v3914 = vshrl.u32 2102212464, %v3905
        %v3915 = vor.u32 %v3913, %v3914
        %v3916 = vshll.u32 2102212464, %v3904
        %v3917 = vshrl.u32 920167782, %v3905
        %v3918 = vor.u32 %v3916, %v3917
        %v3919 = vshll.u32 920167782, %v3904
        %v3920 = vshrl.u32 1326507024, %v3905
        %v3921 = vor.u32 %v3919, %v3920
        %vm3922 = vcmp.lt.s32.totalorder %v3903, 1
        %vm3923 = vcmp.lt.s32.totalorder %v3903, 2
        %vm3924 = vcmp.lt.s32.totalorder %v3903, 3
        %vm3925 = vcmp.lt.s32.totalorder %v3903, 4
        %v3926 = vsel %vm3922, %v3906, %v3909
        %v3927 = vsel %vm3925, %v3915, 2102212464
        %v3928 = vsel %vm3924, %v3912, %v3927
        %v3929 = vsel %vm3923, %v3926, %v3928
        %v3930 = vsel %vm3922, %v3909, %v3912
        %v3931 = vsel %vm3925, %v3918, 920167782
        %v3932 = vsel %vm3924, %v3915, %v3931
        %v3933 = vsel %vm3923, %v3930, %v3932
        %v3934 = vsel %vm3922, %v3912, %v3915
        %v3935 = vsel %vm3925, %v3921, 1326507024
        %v3936 = vsel %vm3924, %v3918, %v3935
        %v3937 = vsel %vm3923, %v3934, %v3936
        %v3938 = vshll.u32 %v3898, 8
        %v3939 = vmul.u32.u64.compose %v3938, %v3937
        %v3940 = vextract.low.u32 %v3939
        %v3941 = vextract.high.u32 %v3939
        %v3942 = vmul.u32.u64.compose %v3938, %v3933
        %v3943 = vextract.low.u32 %v3942
        %v3944 = vextract.high.u32 %v3942
        %v3945 = vmul.u32 %v3938, %v3929
        %v3946 = vadd.s32 %v3941, %v3943
        %vm3947 = vc.u32 %v3941, %v3943
        %v3948 = vadd.s32 %v3944, 1
        %v3949 = vsel %vm3947, %v3948, %v3944
        %v3950 = vadd.s32 %v3945, %v3949
        %v3951 = vadd.s32 %v3950, 536870912
        %v3952 = vshrl.u32 %v3951, 30
        %v3953 = vshll.u32 %v3952, 30
        %v3954 = vsub.s32 %v3950, %v3953
        %vm3955 = vcmp.lt.s32.totalorder %v3954, 0
        %v3956 = vsub.s32 0, %v3954
        %v3957 = vsel %vm3955, %v3956, %v3954
        %v3958 = vclz %v3957
        %v3959 = vsub.s32 %v3958, 2
        %vm3960 = vcmp.gt.s32.totalorder 0, %v3959
        %v3961 = vsel %vm3960, 0, %v3959
        %v3962 = vsub.s32 32, %v3961
        %v3963 = vshll.u32 %v3954, %v3961
        %v3964 = vshrl.u32 %v3946, %v3962
        %v3965 = vor.u32 %v3963, %v3964
        %v3966 = vsub.s32 4294967266, %v3961
        %v3967 = vadd.s32 %v3966, 127
        %v3968 = vshll.u32 %v3967, 23
        %v3969 = vor.u32 4788187, %v3968
        %v3970 = vand.u32 2147483647, %v3969
        %v3972 = vcvt.s32.f32 %v3965
        %v3973 = vmul.f32 %v3972, %v3970
        %v3974 = vxor.u32 %v3973, 2147483648
        %v3975 = vsel %vm3892, %v3974, %v3973
        %v3976 = vsub.s32 4, %v3952
        %v3977 = vsel %vm3892, %v3976, %v3952
        %v3978 = vsel %vm3891, %v3463, %v3975
        %v3979 = vsel %vm3891, 0, %v3977
        %v3980 = vcosq.f32.pop %v3978
        %v3981 = vsinq.f32.pop %v3978
        %vm3982 = vweird.f32 %v3463
        %v3983 = vadd.s32 %v3979, 3
        %v3984 = vand.u32 %v3983, 3
        %vm3985 = vcmp.lt.s32.totalorder %v3984, 2
        %vm3986 = vcmp.eq.s32.totalorder %v3984, 0
        %v3987 = vxor.u32 %v3981, 2147483648
        %v3988 = vsel %vm3986, %v3980, %v3987
        %vm3989 = vcmp.eq.s32.totalorder %v3984, 2
        %v3990 = vxor.u32 %v3980, 2147483648
        %v3991 = vsel %vm3989, %v3990, %v3981
        %v3992 = vsel %vm3985, %v3988, %v3991
        %v3993 = vsel %vm3982, nan, %v3992
        %v3994 = vand.u32 2147483647, %v3465
        %vm3995 = vcmp.le.f32.partialorder %v3994, 0.7853982
        %vm3996 = vcmp.lt.s32.totalorder %v3465, 0
        %v3997 = vand.u32 %v3465, 2139095040
        %v3998 = vshrl.u32 %v3997, 23
        %v3999 = vsub.s32 %v3998, 127
        %v4000 = vand.u32 2147483647, %v3465
        %v4001 = vand.u32 %v4000, 8388607
        %v4002 = vor.u32 %v4001, 8388608
        %v4003 = vsub.s32 0, %v4002
        %v4004 = vadd.s32 %v3999, 1
        %vm4005 = vcmp.gt.s32.totalorder %v4004, 0
        %v4006 = vsel %vm4005, %v4004, 0
        %v4007 = vshrl.u32 %v4006, 5
        %v4008 = vand.u32 %v4006, 31
        %v4009 = vsub.s32 32, %v4008
        %v4010 = vshrl.u32 683565275, %v4009
        %v4011 = vshll.u32 683565275, %v4008
        %v4012 = vshrl.u32 2475754826, %v4009
        %v4013 = vor.u32 %v4011, %v4012
        %v4014 = vshll.u32 2475754826, %v4008
        %v4015 = vshrl.u32 2131351028, %v4009
        %v4016 = vor.u32 %v4014, %v4015
        %v4017 = vshll.u32 2131351028, %v4008
        %v4018 = vshrl.u32 2102212464, %v4009
        %v4019 = vor.u32 %v4017, %v4018
        %v4020 = vshll.u32 2102212464, %v4008
        %v4021 = vshrl.u32 920167782, %v4009
        %v4022 = vor.u32 %v4020, %v4021
        %v4023 = vshll.u32 920167782, %v4008
        %v4024 = vshrl.u32 1326507024, %v4009
        %v4025 = vor.u32 %v4023, %v4024
        %vm4026 = vcmp.lt.s32.totalorder %v4007, 1
        %vm4027 = vcmp.lt.s32.totalorder %v4007, 2
        %vm4028 = vcmp.lt.s32.totalorder %v4007, 3
        %vm4029 = vcmp.lt.s32.totalorder %v4007, 4
        %v4030 = vsel %vm4026, %v4010, %v4013
        %v4031 = vsel %vm4029, %v4019, 2102212464
        %v4032 = vsel %vm4028, %v4016, %v4031
        %v4033 = vsel %vm4027, %v4030, %v4032
        %v4034 = vsel %vm4026, %v4013, %v4016
        %v4035 = vsel %vm4029, %v4022, 920167782
        %v4036 = vsel %vm4028, %v4019, %v4035
        %v4037 = vsel %vm4027, %v4034, %v4036
        %v4038 = vsel %vm4026, %v4016, %v4019
        %v4039 = vsel %vm4029, %v4025, 1326507024
        %v4040 = vsel %vm4028, %v4022, %v4039
        %v4041 = vsel %vm4027, %v4038, %v4040
        %v4042 = vshll.u32 %v4002, 8
        %v4043 = vmul.u32.u64.compose %v4042, %v4041
        %v4044 = vextract.low.u32 %v4043
        %v4045 = vextract.high.u32 %v4043
        %v4046 = vmul.u32.u64.compose %v4042, %v4037
        %v4047 = vextract.low.u32 %v4046
        %v4048 = vextract.high.u32 %v4046
        %v4049 = vmul.u32 %v4042, %v4033
        %v4050 = vadd.s32 %v4045, %v4047
        %vm4051 = vc.u32 %v4045, %v4047
        %v4052 = vadd.s32 %v4048, 1
        %v4053 = vsel %vm4051, %v4052, %v4048
        %v4054 = vadd.s32 %v4049, %v4053
        %v4055 = vadd.s32 %v4054, 536870912
        %v4056 = vshrl.u32 %v4055, 30
        %v4057 = vshll.u32 %v4056, 30
        %v4058 = vsub.s32 %v4054, %v4057
        %vm4059 = vcmp.lt.s32.totalorder %v4058, 0
        %v4060 = vsub.s32 0, %v4058
        %v4061 = vsel %vm4059, %v4060, %v4058
        %v4062 = vclz %v4061
        %v4063 = vsub.s32 %v4062, 2
        %vm4064 = vcmp.gt.s32.totalorder 0, %v4063
        %v4065 = vsel %vm4064, 0, %v4063
        %v4066 = vsub.s32 32, %v4065
        %v4067 = vshll.u32 %v4058, %v4065
        %v4068 = vshrl.u32 %v4050, %v4066
        %v4069 = vor.u32 %v4067, %v4068
        %v4070 = vsub.s32 4294967266, %v4065
        %v4071 = vadd.s32 %v4070, 127
        %v4072 = vshll.u32 %v4071, 23
        %v4073 = vor.u32 4788187, %v4072
        %v4074 = vand.u32 2147483647, %v4073
        %v4076 = vcvt.s32.f32 %v4069
        %v4077 = vmul.f32 %v4076, %v4074
        %v4078 = vxor.u32 %v4077, 2147483648
        %v4079 = vsel %vm3996, %v4078, %v4077
        %v4080 = vsub.s32 4, %v4056
        %v4081 = vsel %vm3996, %v4080, %v4056
        %v4082 = vsel %vm3995, %v3465, %v4079
        %v4083 = vsel %vm3995, 0, %v4081
        %v4084 = vcosq.f32.pop %v4082
        %v4085 = vsinq.f32.pop %v4082
        %vm4086 = vweird.f32 %v3465
        %v4087 = vadd.s32 %v4083, 3
        %v4088 = vand.u32 %v4087, 3
        %vm4089 = vcmp.lt.s32.totalorder %v4088, 2
        %vm4090 = vcmp.eq.s32.totalorder %v4088, 0
        %v4091 = vxor.u32 %v4085, 2147483648
        %v4092 = vsel %vm4090, %v4084, %v4091
        %vm4093 = vcmp.eq.s32.totalorder %v4088, 2
        %v4094 = vxor.u32 %v4084, 2147483648
        %v4095 = vsel %vm4093, %v4094, %v4085
        %v4096 = vsel %vm4089, %v4092, %v4095
        %v4097 = vsel %vm4086, nan, %v4096
        %v4098 = vand.u32 2147483647, %v3470
        %vm4099 = vcmp.le.f32.partialorder %v4098, 0.7853982
        %vm4100 = vcmp.lt.s32.totalorder %v3470, 0
        %v4101 = vand.u32 %v3470, 2139095040
        %v4102 = vshrl.u32 %v4101, 23
        %v4103 = vsub.s32 %v4102, 127
        %v4104 = vand.u32 2147483647, %v3470
        %v4105 = vand.u32 %v4104, 8388607
        %v4106 = vor.u32 %v4105, 8388608
        %v4107 = vsub.s32 0, %v4106
        %v4108 = vadd.s32 %v4103, 1
        %vm4109 = vcmp.gt.s32.totalorder %v4108, 0
        %v4110 = vsel %vm4109, %v4108, 0
        %v4111 = vshrl.u32 %v4110, 5
        %v4112 = vand.u32 %v4110, 31
        %v4113 = vsub.s32 32, %v4112
        %v4114 = vshrl.u32 683565275, %v4113
        %v4115 = vshll.u32 683565275, %v4112
        %v4116 = vshrl.u32 2475754826, %v4113
        %v4117 = vor.u32 %v4115, %v4116
        %v4118 = vshll.u32 2475754826, %v4112
        %v4119 = vshrl.u32 2131351028, %v4113
        %v4120 = vor.u32 %v4118, %v4119
        %v4121 = vshll.u32 2131351028, %v4112
        %v4122 = vshrl.u32 2102212464, %v4113
        %v4123 = vor.u32 %v4121, %v4122
        %v4124 = vshll.u32 2102212464, %v4112
        %v4125 = vshrl.u32 920167782, %v4113
        %v4126 = vor.u32 %v4124, %v4125
        %v4127 = vshll.u32 920167782, %v4112
        %v4128 = vshrl.u32 1326507024, %v4113
        %v4129 = vor.u32 %v4127, %v4128
        %vm4130 = vcmp.lt.s32.totalorder %v4111, 1
        %vm4131 = vcmp.lt.s32.totalorder %v4111, 2
        %vm4132 = vcmp.lt.s32.totalorder %v4111, 3
        %vm4133 = vcmp.lt.s32.totalorder %v4111, 4
        %v4134 = vsel %vm4130, %v4114, %v4117
        %v4135 = vsel %vm4133, %v4123, 2102212464
        %v4136 = vsel %vm4132, %v4120, %v4135
        %v4137 = vsel %vm4131, %v4134, %v4136
        %v4138 = vsel %vm4130, %v4117, %v4120
        %v4139 = vsel %vm4133, %v4126, 920167782
        %v4140 = vsel %vm4132, %v4123, %v4139
        %v4141 = vsel %vm4131, %v4138, %v4140
        %v4142 = vsel %vm4130, %v4120, %v4123
        %v4143 = vsel %vm4133, %v4129, 1326507024
        %v4144 = vsel %vm4132, %v4126, %v4143
        %v4145 = vsel %vm4131, %v4142, %v4144
        %v4146 = vshll.u32 %v4106, 8
        %v4147 = vmul.u32.u64.compose %v4146, %v4145
        %v4148 = vextract.low.u32 %v4147
        %v4149 = vextract.high.u32 %v4147
        %v4150 = vmul.u32.u64.compose %v4146, %v4141
        %v4151 = vextract.low.u32 %v4150
        %v4152 = vextract.high.u32 %v4150
        %v4153 = vmul.u32 %v4146, %v4137
        %v4154 = vadd.s32 %v4149, %v4151
        %vm4155 = vc.u32 %v4149, %v4151
        %v4156 = vadd.s32 %v4152, 1
        %v4157 = vsel %vm4155, %v4156, %v4152
        %v4158 = vadd.s32 %v4153, %v4157
        %v4159 = vadd.s32 %v4158, 536870912
        %v4160 = vshrl.u32 %v4159, 30
        %v4161 = vshll.u32 %v4160, 30
        %v4162 = vsub.s32 %v4158, %v4161
        %vm4163 = vcmp.lt.s32.totalorder %v4162, 0
        %v4164 = vsub.s32 0, %v4162
        %v4165 = vsel %vm4163, %v4164, %v4162
        %v4166 = vclz %v4165
        %v4167 = vsub.s32 %v4166, 2
        %vm4168 = vcmp.gt.s32.totalorder 0, %v4167
        %v4169 = vsel %vm4168, 0, %v4167
        %v4170 = vsub.s32 32, %v4169
        %v4171 = vshll.u32 %v4162, %v4169
        %v4172 = vshrl.u32 %v4154, %v4170
        %v4173 = vor.u32 %v4171, %v4172
        %v4174 = vsub.s32 4294967266, %v4169
        %v4175 = vadd.s32 %v4174, 127
        %v4176 = vshll.u32 %v4175, 23
        %v4177 = vor.u32 4788187, %v4176
        %v4178 = vand.u32 2147483647, %v4177
        %v4180 = vcvt.s32.f32 %v4173
        %v4181 = vmul.f32 %v4180, %v4178
        %v4182 = vxor.u32 %v4181, 2147483648
        %v4183 = vsel %vm4100, %v4182, %v4181
        %v4184 = vsub.s32 4, %v4160
        %v4185 = vsel %vm4100, %v4184, %v4160
        %v4186 = vsel %vm4099, %v3470, %v4183
        %v4187 = vsel %vm4099, 0, %v4185
        %v4188 = vcosq.f32.pop %v4186
        %v4189 = vsinq.f32.pop %v4186
        %vm4190 = vweird.f32 %v3470
        %v4191 = vadd.s32 %v4187, 3
        %v4192 = vand.u32 %v4191, 3
        %vm4193 = vcmp.lt.s32.totalorder %v4192, 2
        %vm4194 = vcmp.eq.s32.totalorder %v4192, 0
        %v4195 = vxor.u32 %v4189, 2147483648
        %v4196 = vsel %vm4194, %v4188, %v4195
        %vm4197 = vcmp.eq.s32.totalorder %v4192, 2
        %v4198 = vxor.u32 %v4188, 2147483648
        %v4199 = vsel %vm4197, %v4198, %v4189
        %v4200 = vsel %vm4193, %v4196, %v4199
        %v4201 = vsel %vm4190, nan, %v4200
        %v4202 = vand.u32 2147483647, %v3472
        %vm4203 = vcmp.le.f32.partialorder %v4202, 0.7853982
        %vm4204 = vcmp.lt.s32.totalorder %v3472, 0
        %v4205 = vand.u32 %v3472, 2139095040
        %v4206 = vshrl.u32 %v4205, 23
        %v4207 = vsub.s32 %v4206, 127
        %v4208 = vand.u32 2147483647, %v3472
        %v4209 = vand.u32 %v4208, 8388607
        %v4210 = vor.u32 %v4209, 8388608
        %v4211 = vsub.s32 0, %v4210
        %v4212 = vadd.s32 %v4207, 1
        %vm4213 = vcmp.gt.s32.totalorder %v4212, 0
        %v4214 = vsel %vm4213, %v4212, 0
        %v4215 = vshrl.u32 %v4214, 5
        %v4216 = vand.u32 %v4214, 31
        %v4217 = vsub.s32 32, %v4216
        %v4218 = vshrl.u32 683565275, %v4217
        %v4219 = vshll.u32 683565275, %v4216
        %v4220 = vshrl.u32 2475754826, %v4217
        %v4221 = vor.u32 %v4219, %v4220
        %v4222 = vshll.u32 2475754826, %v4216
        %v4223 = vshrl.u32 2131351028, %v4217
        %v4224 = vor.u32 %v4222, %v4223
        %v4225 = vshll.u32 2131351028, %v4216
        %v4226 = vshrl.u32 2102212464, %v4217
        %v4227 = vor.u32 %v4225, %v4226
        %v4228 = vshll.u32 2102212464, %v4216
        %v4229 = vshrl.u32 920167782, %v4217
        %v4230 = vor.u32 %v4228, %v4229
        %v4231 = vshll.u32 920167782, %v4216
        %v4232 = vshrl.u32 1326507024, %v4217
        %v4233 = vor.u32 %v4231, %v4232
        %vm4234 = vcmp.lt.s32.totalorder %v4215, 1
        %vm4235 = vcmp.lt.s32.totalorder %v4215, 2
        %vm4236 = vcmp.lt.s32.totalorder %v4215, 3
        %vm4237 = vcmp.lt.s32.totalorder %v4215, 4
        %v4238 = vsel %vm4234, %v4218, %v4221
        %v4239 = vsel %vm4237, %v4227, 2102212464
        %v4240 = vsel %vm4236, %v4224, %v4239
        %v4241 = vsel %vm4235, %v4238, %v4240
        %v4242 = vsel %vm4234, %v4221, %v4224
        %v4243 = vsel %vm4237, %v4230, 920167782
        %v4244 = vsel %vm4236, %v4227, %v4243
        %v4245 = vsel %vm4235, %v4242, %v4244
        %v4246 = vsel %vm4234, %v4224, %v4227
        %v4247 = vsel %vm4237, %v4233, 1326507024
        %v4248 = vsel %vm4236, %v4230, %v4247
        %v4249 = vsel %vm4235, %v4246, %v4248
        %v4250 = vshll.u32 %v4210, 8
        %v4251 = vmul.u32.u64.compose %v4250, %v4249
        %v4252 = vextract.low.u32 %v4251
        %v4253 = vextract.high.u32 %v4251
        %v4254 = vmul.u32.u64.compose %v4250, %v4245
        %v4255 = vextract.low.u32 %v4254
        %v4256 = vextract.high.u32 %v4254
        %v4257 = vmul.u32 %v4250, %v4241
        %v4258 = vadd.s32 %v4253, %v4255
        %vm4259 = vc.u32 %v4253, %v4255
        %v4260 = vadd.s32 %v4256, 1
        %v4261 = vsel %vm4259, %v4260, %v4256
        %v4262 = vadd.s32 %v4257, %v4261
        %v4263 = vadd.s32 %v4262, 536870912
        %v4264 = vshrl.u32 %v4263, 30
        %v4265 = vshll.u32 %v4264, 30
        %v4266 = vsub.s32 %v4262, %v4265
        %vm4267 = vcmp.lt.s32.totalorder %v4266, 0
        %v4268 = vsub.s32 0, %v4266
        %v4269 = vsel %vm4267, %v4268, %v4266
        %v4270 = vclz %v4269
        %v4271 = vsub.s32 %v4270, 2
        %vm4272 = vcmp.gt.s32.totalorder 0, %v4271
        %v4273 = vsel %vm4272, 0, %v4271
        %v4274 = vsub.s32 32, %v4273
        %v4275 = vshll.u32 %v4266, %v4273
        %v4276 = vshrl.u32 %v4258, %v4274
        %v4277 = vor.u32 %v4275, %v4276
        %v4278 = vsub.s32 4294967266, %v4273
        %v4279 = vadd.s32 %v4278, 127
        %v4280 = vshll.u32 %v4279, 23
        %v4281 = vor.u32 4788187, %v4280
        %v4282 = vand.u32 2147483647, %v4281
        %v4284 = vcvt.s32.f32 %v4277
        %v4285 = vmul.f32 %v4284, %v4282
        %v4286 = vxor.u32 %v4285, 2147483648
        %v4287 = vsel %vm4204, %v4286, %v4285
        %v4288 = vsub.s32 4, %v4264
        %v4289 = vsel %vm4204, %v4288, %v4264
        %v4290 = vsel %vm4203, %v3472, %v4287
        %v4291 = vsel %vm4203, 0, %v4289
        %v4292 = vcosq.f32.pop %v4290
        %v4293 = vsinq.f32.pop %v4290
        %vm4294 = vweird.f32 %v3472
        %v4295 = vadd.s32 %v4291, 3
        %v4296 = vand.u32 %v4295, 3
        %vm4297 = vcmp.lt.s32.totalorder %v4296, 2
        %vm4298 = vcmp.eq.s32.totalorder %v4296, 0
        %v4299 = vxor.u32 %v4293, 2147483648
        %v4300 = vsel %vm4298, %v4292, %v4299
        %vm4301 = vcmp.eq.s32.totalorder %v4296, 2
        %v4302 = vxor.u32 %v4292, 2147483648
        %v4303 = vsel %vm4301, %v4302, %v4293
        %v4304 = vsel %vm4297, %v4300, %v4303
        %v4305 = vsel %vm4294, nan, %v4304
        %v4306 = vld [vmem:[%s4 + $0x60] sm:$0x1]
        %4308 = vset.pattern.permute.xlu0 0
        %4309 = vperm.xlu0 %4308, %v4306
        %v4310 = vpop.permute.xlu0 %4309
        %v4313 = vsel %vm1208, %v230, 0
        %v4315 = vand.u32 %v3681, 4294901760
        %4316 = vmatprep.subr.mxu0 %v4315
        %v4317 = vand.u32 %v3577, 4294901760
        %4318 = vmatpush1.msra.mxu0 %v4317
        %v4319 = vand.u32 %v3889, 4294901760
        %4320 = vmatprep.subr.mxu0 %v4319
        %v4321 = vand.u32 %v3785, 4294901760
        %4322 = vmatpush1.msra.mxu0 %v4321
        %v4323 = vand.u32 %v4097, 4294901760
        %4324 = vmatprep.subr.mxu0 %v4323
        %v4325 = vand.u32 %v3993, 4294901760
        %4326 = vmatpush1.msra.mxu0 %v4325
        %v4327 = vand.u32 %v4305, 4294901760
        %4328 = vmatprep.subr.mxu0 %v4327
        %v4329 = vand.u32 %v4201, 4294901760
        %4330 = vmatpush1.msra.mxu0 %v4329
        %4331 = vmatprep.subr.mxu0 0.0
        %4332 = vmatpush1.msra.mxu0 0.0
        %4333 = vmatprep.subr.mxu0 0.0
        %4334 = vmatpush1.msra.mxu0 0.0
        %4335 = vmatprep.subr.mxu0 0.0
        %4336 = vmatpush1.msra.mxu0 0.0
        %4337 = vmatprep.subr.mxu0 0.0
        %4338 = vmatpush1.msra.mxu0 0.0
        %4339 = vmatprep.subr.mxu0 0.0
        %4340 = vmatpush1.msra.mxu0 0.0
        %4341 = vmatprep.subr.mxu0 0.0
        %4342 = vmatpush1.msra.mxu0 0.0
        %4343 = vmatprep.subr.mxu0 0.0
        %4344 = vmatpush1.msra.mxu0 0.0
        %4345 = vmatprep.subr.mxu0 0.0
        %4346 = vmatpush1.msra.mxu0 0.0
        %4347 = vmatprep.subr.mxu0 0.0
        %4348 = vmatpush1.msra.mxu0 0.0
        %4349 = vmatprep.subr.mxu0 0.0
        %4350 = vmatpush1.msra.mxu0 0.0
        %4351 = vmatprep.subr.mxu0 0.0
        %4352 = vmatpush1.msra.mxu0 0.0
        %4353 = vmatprep.subr.mxu0 0.0
        %4354 = vmatpush1.msra.mxu0 0.0
        %4355 = vmatprep.subr.mxu0 0.0
        %4356 = vmatpush1.msra.mxu0 0.0
        %4357 = vmatprep.subr.mxu0 0.0
        %4358 = vmatpush1.msra.mxu0 0.0
        %4359 = vmatprep.subr.mxu0 0.0
        %4360 = vmatpush1.msra.mxu0 0.0
        %4361 = vmatprep.subr.mxu0 0.0
        %4362 = vmatpush1.msra.mxu0 0.0
        %4363 = vmatprep.subr.mxu0 0.0
        %4364 = vmatpush1.msra.mxu0 0.0
        %4365 = vmatprep.subr.mxu0 0.0
        %4366 = vmatpush1.msra.mxu0 0.0
        %4367 = vmatprep.subr.mxu0 0.0
        %4368 = vmatpush1.msra.mxu0 0.0
        %4369 = vmatprep.subr.mxu0 0.0
        %4370 = vmatpush1.msra.mxu0 0.0
        %4371 = vmatprep.subr.mxu0 0.0
        %4372 = vmatpush1.msra.mxu0 0.0
        %4373 = vmatprep.subr.mxu0 0.0
        %4374 = vmatpush1.msra.mxu0 0.0
        %4375 = vmatprep.subr.mxu0 0.0
        %4376 = vmatpush1.msra.mxu0 0.0
        %4377 = vmatprep.subr.mxu0 0.0
        %4378 = vmatpush1.msra.mxu0 0.0
        %4379 = vmatprep.subr.mxu0 0.0
        %4380 = vmatpush1.msra.mxu0 0.0
        %4381 = vmatprep.subr.mxu0 0.0
        %4382 = vmatpush1.msra.mxu0 0.0
        %4383 = vmatprep.subr.mxu0 0.0
        %4384 = vmatpush1.msra.mxu0 0.0
        %4385 = vmatprep.subr.mxu0 0.0
        %4386 = vmatpush1.msra.mxu0 0.0
        %4387 = vmatprep.mubr.f32.mxu0 0.0
        %v4388 = vand.u32 %v4313, 4294901760
        %v4389 = vsub.f32 %v4313, %v4388
        %v4390 = vand.u32 %v4389, 4294901760
        %v4391 = vsub.f32 %v4389, %v4390
        %v4392 = vand.u32 %v4391, 4294901760
        %4393 = vmatmul.mubr.f32.gmra.mrb[0].mxu0 %v4392
        %v4394 = vpop.f32.mrb[0].mxu0
        %v4395 = vadd.f32 %v4310, %v4394
        %v4396 = vpop.f32.mrb[0].mxu0
        %v4397 = vadd.f32 %v4310, %v4396
        %4398 = vdwg.mxu0
        %v4399 = vand.u32 %v3681, 4294901760
        %v4400 = vsub.f32 %v3681, %v4399
        %v4401 = vand.u32 %v4400, 4294901760
        %v4402 = vsub.f32 %v4400, %v4401
        %v4403 = vand.u32 %v4402, 4294901760
        %4404 = vmatprep.subr.mxu0 %v4403
        %v4405 = vand.u32 %v3577, 4294901760
        %v4406 = vsub.f32 %v3577, %v4405
        %v4407 = vand.u32 %v4406, 4294901760
        %v4408 = vsub.f32 %v4406, %v4407
        %v4409 = vand.u32 %v4408, 4294901760
        %4410 = vmatpush1.msra.mxu0 %v4409
        %v4411 = vand.u32 %v3889, 4294901760
        %v4412 = vsub.f32 %v3889, %v4411
        %v4413 = vand.u32 %v4412, 4294901760
        %v4414 = vsub.f32 %v4412, %v4413
        %v4415 = vand.u32 %v4414, 4294901760
        %4416 = vmatprep.subr.mxu0 %v4415
        %v4417 = vand.u32 %v3785, 4294901760
        %v4418 = vsub.f32 %v3785, %v4417
        %v4419 = vand.u32 %v4418, 4294901760
        %v4420 = vsub.f32 %v4418, %v4419
        %v4421 = vand.u32 %v4420, 4294901760
        %4422 = vmatpush1.msra.mxu0 %v4421
        %v4423 = vand.u32 %v4097, 4294901760
        %v4424 = vsub.f32 %v4097, %v4423
        %v4425 = vand.u32 %v4424, 4294901760
        %v4426 = vsub.f32 %v4424, %v4425
        %v4427 = vand.u32 %v4426, 4294901760
        %4428 = vmatprep.subr.mxu0 %v4427
        %v4429 = vand.u32 %v3993, 4294901760
        %v4430 = vsub.f32 %v3993, %v4429
        %v4431 = vand.u32 %v4430, 4294901760
        %v4432 = vsub.f32 %v4430, %v4431
        %v4433 = vand.u32 %v4432, 4294901760
        %4434 = vmatpush1.msra.mxu0 %v4433
        %v4435 = vand.u32 %v4305, 4294901760
        %v4436 = vsub.f32 %v4305, %v4435
        %v4437 = vand.u32 %v4436, 4294901760
        %v4438 = vsub.f32 %v4436, %v4437
        %v4439 = vand.u32 %v4438, 4294901760
        %4440 = vmatprep.subr.mxu0 %v4439
        %v4441 = vand.u32 %v4201, 4294901760
        %v4442 = vsub.f32 %v4201, %v4441
        %v4443 = vand.u32 %v4442, 4294901760
        %v4444 = vsub.f32 %v4442, %v4443
        %v4445 = vand.u32 %v4444, 4294901760
        %4446 = vmatpush1.msra.mxu0 %v4445
        %4447 = vmatprep.subr.mxu0 0.0
        %4448 = vmatpush1.msra.mxu0 0.0
        %4449 = vmatprep.subr.mxu0 0.0
        %4450 = vmatpush1.msra.mxu0 0.0
        %4451 = vmatprep.subr.mxu0 0.0
        %4452 = vmatpush1.msra.mxu0 0.0
        %4453 = vmatprep.subr.mxu0 0.0
        %4454 = vmatpush1.msra.mxu0 0.0
        %4455 = vmatprep.subr.mxu0 0.0
        %4456 = vmatpush1.msra.mxu0 0.0
        %4457 = vmatprep.subr.mxu0 0.0
        %4458 = vmatpush1.msra.mxu0 0.0
        %4459 = vmatprep.subr.mxu0 0.0
        %4460 = vmatpush1.msra.mxu0 0.0
        %4461 = vmatprep.subr.mxu0 0.0
        %4462 = vmatpush1.msra.mxu0 0.0
        %4463 = vmatprep.subr.mxu0 0.0
        %4464 = vmatpush1.msra.mxu0 0.0
        %4465 = vmatprep.subr.mxu0 0.0
        %4466 = vmatpush1.msra.mxu0 0.0
        %4467 = vmatprep.subr.mxu0 0.0
        %4468 = vmatpush1.msra.mxu0 0.0
        %4469 = vmatprep.subr.mxu0 0.0
        %4470 = vmatpush1.msra.mxu0 0.0
        %4471 = vmatprep.subr.mxu0 0.0
        %4472 = vmatpush1.msra.mxu0 0.0
        %4473 = vmatprep.subr.mxu0 0.0
        %4474 = vmatpush1.msra.mxu0 0.0
        %4475 = vmatprep.subr.mxu0 0.0
        %4476 = vmatpush1.msra.mxu0 0.0
        %4477 = vmatprep.subr.mxu0 0.0
        %4478 = vmatpush1.msra.mxu0 0.0
        %4479 = vmatprep.subr.mxu0 0.0
        %4480 = vmatpush1.msra.mxu0 0.0
        %4481 = vmatprep.subr.mxu0 0.0
        %4482 = vmatpush1.msra.mxu0 0.0
        %4483 = vmatprep.subr.mxu0 0.0
        %4484 = vmatpush1.msra.mxu0 0.0
        %4485 = vmatprep.subr.mxu0 0.0
        %4486 = vmatpush1.msra.mxu0 0.0
        %4487 = vmatprep.subr.mxu0 0.0
        %4488 = vmatpush1.msra.mxu0 0.0
        %4489 = vmatprep.subr.mxu0 0.0
        %4490 = vmatpush1.msra.mxu0 0.0
        %4491 = vmatprep.subr.mxu0 0.0
        %4492 = vmatpush1.msra.mxu0 0.0
        %4493 = vmatprep.subr.mxu0 0.0
        %4494 = vmatpush1.msra.mxu0 0.0
        %4495 = vmatprep.subr.mxu0 0.0
        %4496 = vmatpush1.msra.mxu0 0.0
        %4497 = vmatprep.subr.mxu0 0.0
        %4498 = vmatpush1.msra.mxu0 0.0
        %4499 = vmatprep.subr.mxu0 0.0
        %4500 = vmatpush1.msra.mxu0 0.0
        %4501 = vmatprep.subr.mxu0 0.0
        %4502 = vmatpush1.msra.mxu0 0.0
        %4503 = vmatprep.mubr.f32.mxu0 0.0
        %v4504 = vand.u32 %v4313, 4294901760
        %4505 = vmatmul.mubr.f32.gmra.mrb[0].mxu0 %v4504
        %v4506 = vpop.f32.mrb[0].mxu0
        %v4507 = vadd.f32 %v4395, %v4506
        %v4508 = vpop.f32.mrb[0].mxu0
        %v4509 = vadd.f32 %v4397, %v4508
        %4510 = vdwg.mxu0
        %v4511 = vand.u32 %v3681, 4294901760
        %v4512 = vsub.f32 %v3681, %v4511
        %4513 = vmatprep.subr.mxu0 %v4512
        %v4514 = vand.u32 %v3577, 4294901760
        %v4515 = vsub.f32 %v3577, %v4514
        %4516 = vmatpush1.msra.mxu0 %v4515
        %v4517 = vand.u32 %v3889, 4294901760
        %v4518 = vsub.f32 %v3889, %v4517
        %4519 = vmatprep.subr.mxu0 %v4518
        %v4520 = vand.u32 %v3785, 4294901760
        %v4521 = vsub.f32 %v3785, %v4520
        %4522 = vmatpush1.msra.mxu0 %v4521
        %v4523 = vand.u32 %v4097, 4294901760
        %v4524 = vsub.f32 %v4097, %v4523
        %4525 = vmatprep.subr.mxu0 %v4524
        %v4526 = vand.u32 %v3993, 4294901760
        %v4527 = vsub.f32 %v3993, %v4526
        %4528 = vmatpush1.msra.mxu0 %v4527
        %v4529 = vand.u32 %v4305, 4294901760
        %v4530 = vsub.f32 %v4305, %v4529
        %4531 = vmatprep.subr.mxu0 %v4530
        %v4532 = vand.u32 %v4201, 4294901760
        %v4533 = vsub.f32 %v4201, %v4532
        %4534 = vmatpush1.msra.mxu0 %v4533
        %4535 = vmatprep.subr.mxu0 0.0
        %4536 = vmatpush1.msra.mxu0 0.0
        %4537 = vmatprep.subr.mxu0 0.0
        %4538 = vmatpush1.msra.mxu0 0.0
        %4539 = vmatprep.subr.mxu0 0.0
        %4540 = vmatpush1.msra.mxu0 0.0
        %4541 = vmatprep.subr.mxu0 0.0
        %4542 = vmatpush1.msra.mxu0 0.0
        %4543 = vmatprep.subr.mxu0 0.0
        %4544 = vmatpush1.msra.mxu0 0.0
        %4545 = vmatprep.subr.mxu0 0.0
        %4546 = vmatpush1.msra.mxu0 0.0
        %4547 = vmatprep.subr.mxu0 0.0
        %4548 = vmatpush1.msra.mxu0 0.0
        %4549 = vmatprep.subr.mxu0 0.0
        %4550 = vmatpush1.msra.mxu0 0.0
        %4551 = vmatprep.subr.mxu0 0.0
        %4552 = vmatpush1.msra.mxu0 0.0
        %4553 = vmatprep.subr.mxu0 0.0
        %4554 = vmatpush1.msra.mxu0 0.0
        %4555 = vmatprep.subr.mxu0 0.0
        %4556 = vmatpush1.msra.mxu0 0.0
        %4557 = vmatprep.subr.mxu0 0.0
        %4558 = vmatpush1.msra.mxu0 0.0
        %4559 = vmatprep.subr.mxu0 0.0
        %4560 = vmatpush1.msra.mxu0 0.0
        %4561 = vmatprep.subr.mxu0 0.0
        %4562 = vmatpush1.msra.mxu0 0.0
        %4563 = vmatprep.subr.mxu0 0.0
        %4564 = vmatpush1.msra.mxu0 0.0
        %4565 = vmatprep.subr.mxu0 0.0
        %4566 = vmatpush1.msra.mxu0 0.0
        %4567 = vmatprep.subr.mxu0 0.0
        %4568 = vmatpush1.msra.mxu0 0.0
        %4569 = vmatprep.subr.mxu0 0.0
        %4570 = vmatpush1.msra.mxu0 0.0
        %4571 = vmatprep.subr.mxu0 0.0
        %4572 = vmatpush1.msra.mxu0 0.0
        %4573 = vmatprep.subr.mxu0 0.0
        %4574 = vmatpush1.msra.mxu0 0.0
        %4575 = vmatprep.subr.mxu0 0.0
        %4576 = vmatpush1.msra.mxu0 0.0
        %4577 = vmatprep.subr.mxu0 0.0
        %4578 = vmatpush1.msra.mxu0 0.0
        %4579 = vmatprep.subr.mxu0 0.0
        %4580 = vmatpush1.msra.mxu0 0.0
        %4581 = vmatprep.subr.mxu0 0.0
        %4582 = vmatpush1.msra.mxu0 0.0
        %4583 = vmatprep.subr.mxu0 0.0
        %4584 = vmatpush1.msra.mxu0 0.0
        %4585 = vmatprep.subr.mxu0 0.0
        %4586 = vmatpush1.msra.mxu0 0.0
        %4587 = vmatprep.subr.mxu0 0.0
        %4588 = vmatpush1.msra.mxu0 0.0
        %4589 = vmatprep.subr.mxu0 0.0
        %4590 = vmatpush1.msra.mxu0 0.0
        %4591 = vmatprep.mubr.f32.mxu0 0.0
        %v4592 = vand.u32 %v4313, 4294901760
        %v4593 = vsub.f32 %v4313, %v4592
        %4594 = vmatmul.mubr.f32.gmra.mrb[0].mxu0 %v4593
        %v4595 = vpop.f32.mrb[0].mxu0
        %v4596 = vadd.f32 %v4507, %v4595
        %v4597 = vpop.f32.mrb[0].mxu0
        %v4598 = vadd.f32 %v4509, %v4597
        %4599 = vdwg.mxu0
        %v4600 = vand.u32 %v3681, 4294901760
        %4601 = vmatprep.subr.mxu0 %v4600
        %v4602 = vand.u32 %v3577, 4294901760
        %4603 = vmatpush1.msra.mxu0 %v4602
        %v4604 = vand.u32 %v3889, 4294901760
        %4605 = vmatprep.subr.mxu0 %v4604
        %v4606 = vand.u32 %v3785, 4294901760
        %4607 = vmatpush1.msra.mxu0 %v4606
        %v4608 = vand.u32 %v4097, 4294901760
        %4609 = vmatprep.subr.mxu0 %v4608
        %v4610 = vand.u32 %v3993, 4294901760
        %4611 = vmatpush1.msra.mxu0 %v4610
        %v4612 = vand.u32 %v4305, 4294901760
        %4613 = vmatprep.subr.mxu0 %v4612
        %v4614 = vand.u32 %v4201, 4294901760
        %4615 = vmatpush1.msra.mxu0 %v4614
        %4616 = vmatprep.subr.mxu0 0.0
        %4617 = vmatpush1.msra.mxu0 0.0
        %4618 = vmatprep.subr.mxu0 0.0
        %4619 = vmatpush1.msra.mxu0 0.0
        %4620 = vmatprep.subr.mxu0 0.0
        %4621 = vmatpush1.msra.mxu0 0.0
        %4622 = vmatprep.subr.mxu0 0.0
        %4623 = vmatpush1.msra.mxu0 0.0
        %4624 = vmatprep.subr.mxu0 0.0
        %4625 = vmatpush1.msra.mxu0 0.0
        %4626 = vmatprep.subr.mxu0 0.0
        %4627 = vmatpush1.msra.mxu0 0.0
        %4628 = vmatprep.subr.mxu0 0.0
        %4629 = vmatpush1.msra.mxu0 0.0
        %4630 = vmatprep.subr.mxu0 0.0
        %4631 = vmatpush1.msra.mxu0 0.0
        %4632 = vmatprep.subr.mxu0 0.0
        %4633 = vmatpush1.msra.mxu0 0.0
        %4634 = vmatprep.subr.mxu0 0.0
        %4635 = vmatpush1.msra.mxu0 0.0
        %4636 = vmatprep.subr.mxu0 0.0
        %4637 = vmatpush1.msra.mxu0 0.0
        %4638 = vmatprep.subr.mxu0 0.0
        %4639 = vmatpush1.msra.mxu0 0.0
        %4640 = vmatprep.subr.mxu0 0.0
        %4641 = vmatpush1.msra.mxu0 0.0
        %4642 = vmatprep.subr.mxu0 0.0
        %4643 = vmatpush1.msra.mxu0 0.0
        %4644 = vmatprep.subr.mxu0 0.0
        %4645 = vmatpush1.msra.mxu0 0.0
        %4646 = vmatprep.subr.mxu0 0.0
        %4647 = vmatpush1.msra.mxu0 0.0
        %4648 = vmatprep.subr.mxu0 0.0
        %4649 = vmatpush1.msra.mxu0 0.0
        %4650 = vmatprep.subr.mxu0 0.0
        %4651 = vmatpush1.msra.mxu0 0.0
        %4652 = vmatprep.subr.mxu0 0.0
        %4653 = vmatpush1.msra.mxu0 0.0
        %4654 = vmatprep.subr.mxu0 0.0
        %4655 = vmatpush1.msra.mxu0 0.0
        %4656 = vmatprep.subr.mxu0 0.0
        %4657 = vmatpush1.msra.mxu0 0.0
        %4658 = vmatprep.subr.mxu0 0.0
        %4659 = vmatpush1.msra.mxu0 0.0
        %4660 = vmatprep.subr.mxu0 0.0
        %4661 = vmatpush1.msra.mxu0 0.0
        %4662 = vmatprep.subr.mxu0 0.0
        %4663 = vmatpush1.msra.mxu0 0.0
        %4664 = vmatprep.subr.mxu0 0.0
        %4665 = vmatpush1.msra.mxu0 0.0
        %4666 = vmatprep.subr.mxu0 0.0
        %4667 = vmatpush1.msra.mxu0 0.0
        %4668 = vmatprep.subr.mxu0 0.0
        %4669 = vmatpush1.msra.mxu0 0.0
        %4670 = vmatprep.subr.mxu0 0.0
        %4671 = vmatpush1.msra.mxu0 0.0
        %4672 = vmatprep.mubr.f32.mxu0 0.0
        %v4673 = vand.u32 %v4313, 4294901760
        %v4674 = vsub.f32 %v4313, %v4673
        %v4675 = vand.u32 %v4674, 4294901760
        %4676 = vmatmul.mubr.f32.gmra.mrb[0].mxu0 %v4675
        %v4677 = vpop.f32.mrb[0].mxu0
        %v4678 = vadd.f32 %v4596, %v4677
        %v4679 = vpop.f32.mrb[0].mxu0
        %v4680 = vadd.f32 %v4598, %v4679
        %4681 = vdwg.mxu0
        %v4682 = vand.u32 %v3681, 4294901760
        %v4683 = vsub.f32 %v3681, %v4682
        %v4684 = vand.u32 %v4683, 4294901760
        %4685 = vmatprep.subr.mxu0 %v4684
        %v4686 = vand.u32 %v3577, 4294901760
        %v4687 = vsub.f32 %v3577, %v4686
        %v4688 = vand.u32 %v4687, 4294901760
        %4689 = vmatpush1.msra.mxu0 %v4688
        %v4690 = vand.u32 %v3889, 4294901760
        %v4691 = vsub.f32 %v3889, %v4690
        %v4692 = vand.u32 %v4691, 4294901760
        %4693 = vmatprep.subr.mxu0 %v4692
        %v4694 = vand.u32 %v3785, 4294901760
        %v4695 = vsub.f32 %v3785, %v4694
        %v4696 = vand.u32 %v4695, 4294901760
        %4697 = vmatpush1.msra.mxu0 %v4696
        %v4698 = vand.u32 %v4097, 4294901760
        %v4699 = vsub.f32 %v4097, %v4698
        %v4700 = vand.u32 %v4699, 4294901760
        %4701 = vmatprep.subr.mxu0 %v4700
        %v4702 = vand.u32 %v3993, 4294901760
        %v4703 = vsub.f32 %v3993, %v4702
        %v4704 = vand.u32 %v4703, 4294901760
        %4705 = vmatpush1.msra.mxu0 %v4704
        %v4706 = vand.u32 %v4305, 4294901760
        %v4707 = vsub.f32 %v4305, %v4706
        %v4708 = vand.u32 %v4707, 4294901760
        %4709 = vmatprep.subr.mxu0 %v4708
        %v4710 = vand.u32 %v4201, 4294901760
        %v4711 = vsub.f32 %v4201, %v4710
        %v4712 = vand.u32 %v4711, 4294901760
        %4713 = vmatpush1.msra.mxu0 %v4712
        %4714 = vmatprep.subr.mxu0 0.0
        %4715 = vmatpush1.msra.mxu0 0.0
        %4716 = vmatprep.subr.mxu0 0.0
        %4717 = vmatpush1.msra.mxu0 0.0
        %4718 = vmatprep.subr.mxu0 0.0
        %4719 = vmatpush1.msra.mxu0 0.0
        %4720 = vmatprep.subr.mxu0 0.0
        %4721 = vmatpush1.msra.mxu0 0.0
        %4722 = vmatprep.subr.mxu0 0.0
        %4723 = vmatpush1.msra.mxu0 0.0
        %4724 = vmatprep.subr.mxu0 0.0
        %4725 = vmatpush1.msra.mxu0 0.0
        %4726 = vmatprep.subr.mxu0 0.0
        %4727 = vmatpush1.msra.mxu0 0.0
        %4728 = vmatprep.subr.mxu0 0.0
        %4729 = vmatpush1.msra.mxu0 0.0
        %4730 = vmatprep.subr.mxu0 0.0
        %4731 = vmatpush1.msra.mxu0 0.0
        %4732 = vmatprep.subr.mxu0 0.0
        %4733 = vmatpush1.msra.mxu0 0.0
        %4734 = vmatprep.subr.mxu0 0.0
        %4735 = vmatpush1.msra.mxu0 0.0
        %4736 = vmatprep.subr.mxu0 0.0
        %4737 = vmatpush1.msra.mxu0 0.0
        %4738 = vmatprep.subr.mxu0 0.0
        %4739 = vmatpush1.msra.mxu0 0.0
        %4740 = vmatprep.subr.mxu0 0.0
        %4741 = vmatpush1.msra.mxu0 0.0
        %4742 = vmatprep.subr.mxu0 0.0
        %4743 = vmatpush1.msra.mxu0 0.0
        %4744 = vmatprep.subr.mxu0 0.0
        %4745 = vmatpush1.msra.mxu0 0.0
        %4746 = vmatprep.subr.mxu0 0.0
        %4747 = vmatpush1.msra.mxu0 0.0
        %4748 = vmatprep.subr.mxu0 0.0
        %4749 = vmatpush1.msra.mxu0 0.0
        %4750 = vmatprep.subr.mxu0 0.0
        %4751 = vmatpush1.msra.mxu0 0.0
        %4752 = vmatprep.subr.mxu0 0.0
        %4753 = vmatpush1.msra.mxu0 0.0
        %4754 = vmatprep.subr.mxu0 0.0
        %4755 = vmatpush1.msra.mxu0 0.0
        %4756 = vmatprep.subr.mxu0 0.0
        %4757 = vmatpush1.msra.mxu0 0.0
        %4758 = vmatprep.subr.mxu0 0.0
        %4759 = vmatpush1.msra.mxu0 0.0
        %4760 = vmatprep.subr.mxu0 0.0
        %4761 = vmatpush1.msra.mxu0 0.0
        %4762 = vmatprep.subr.mxu0 0.0
        %4763 = vmatpush1.msra.mxu0 0.0
        %4764 = vmatprep.subr.mxu0 0.0
        %4765 = vmatpush1.msra.mxu0 0.0
        %4766 = vmatprep.subr.mxu0 0.0
        %4767 = vmatpush1.msra.mxu0 0.0
        %4768 = vmatprep.subr.mxu0 0.0
        %4769 = vmatpush1.msra.mxu0 0.0
        %4770 = vmatprep.mubr.f32.mxu0 0.0
        %v4771 = vand.u32 %v4313, 4294901760
        %4772 = vmatmul.mubr.f32.gmra.mrb[0].mxu0 %v4771
        %v4773 = vpop.f32.mrb[0].mxu0
        %v4774 = vadd.f32 %v4678, %v4773
        %v4775 = vpop.f32.mrb[0].mxu0
        %v4776 = vadd.f32 %v4680, %v4775
        %4777 = vdwg.mxu0
        %v4778 = vand.u32 %v3681, 4294901760
        %4779 = vmatprep.subr.mxu0 %v4778
        %v4780 = vand.u32 %v3577, 4294901760
        %4781 = vmatpush1.msra.mxu0 %v4780
        %v4782 = vand.u32 %v3889, 4294901760
        %4783 = vmatprep.subr.mxu0 %v4782
        %v4784 = vand.u32 %v3785, 4294901760
        %4785 = vmatpush1.msra.mxu0 %v4784
        %v4786 = vand.u32 %v4097, 4294901760
        %4787 = vmatprep.subr.mxu0 %v4786
        %v4788 = vand.u32 %v3993, 4294901760
        %4789 = vmatpush1.msra.mxu0 %v4788
        %v4790 = vand.u32 %v4305, 4294901760
        %4791 = vmatprep.subr.mxu0 %v4790
        %v4792 = vand.u32 %v4201, 4294901760
        %4793 = vmatpush1.msra.mxu0 %v4792
        %4794 = vmatprep.subr.mxu0 0.0
        %4795 = vmatpush1.msra.mxu0 0.0
        %4796 = vmatprep.subr.mxu0 0.0
        %4797 = vmatpush1.msra.mxu0 0.0
        %4798 = vmatprep.subr.mxu0 0.0
        %4799 = vmatpush1.msra.mxu0 0.0
        %4800 = vmatprep.subr.mxu0 0.0
        %4801 = vmatpush1.msra.mxu0 0.0
        %4802 = vmatprep.subr.mxu0 0.0
        %4803 = vmatpush1.msra.mxu0 0.0
        %4804 = vmatprep.subr.mxu0 0.0
        %4805 = vmatpush1.msra.mxu0 0.0
        %4806 = vmatprep.subr.mxu0 0.0
        %4807 = vmatpush1.msra.mxu0 0.0
        %4808 = vmatprep.subr.mxu0 0.0
        %4809 = vmatpush1.msra.mxu0 0.0
        %4810 = vmatprep.subr.mxu0 0.0
        %4811 = vmatpush1.msra.mxu0 0.0
        %4812 = vmatprep.subr.mxu0 0.0
        %4813 = vmatpush1.msra.mxu0 0.0
        %4814 = vmatprep.subr.mxu0 0.0
        %4815 = vmatpush1.msra.mxu0 0.0
        %4816 = vmatprep.subr.mxu0 0.0
        %4817 = vmatpush1.msra.mxu0 0.0
        %4818 = vmatprep.subr.mxu0 0.0
        %4819 = vmatpush1.msra.mxu0 0.0
        %4820 = vmatprep.subr.mxu0 0.0
        %4821 = vmatpush1.msra.mxu0 0.0
        %4822 = vmatprep.subr.mxu0 0.0
        %4823 = vmatpush1.msra.mxu0 0.0
        %4824 = vmatprep.subr.mxu0 0.0
        %4825 = vmatpush1.msra.mxu0 0.0
        %4826 = vmatprep.subr.mxu0 0.0
        %4827 = vmatpush1.msra.mxu0 0.0
        %4828 = vmatprep.subr.mxu0 0.0
        %4829 = vmatpush1.msra.mxu0 0.0
        %4830 = vmatprep.subr.mxu0 0.0
        %4831 = vmatpush1.msra.mxu0 0.0
        %4832 = vmatprep.subr.mxu0 0.0
        %4833 = vmatpush1.msra.mxu0 0.0
        %4834 = vmatprep.subr.mxu0 0.0
        %4835 = vmatpush1.msra.mxu0 0.0
        %4836 = vmatprep.subr.mxu0 0.0
        %4837 = vmatpush1.msra.mxu0 0.0
        %4838 = vmatprep.subr.mxu0 0.0
        %4839 = vmatpush1.msra.mxu0 0.0
        %4840 = vmatprep.subr.mxu0 0.0
        %4841 = vmatpush1.msra.mxu0 0.0
        %4842 = vmatprep.subr.mxu0 0.0
        %4843 = vmatpush1.msra.mxu0 0.0
        %4844 = vmatprep.subr.mxu0 0.0
        %4845 = vmatpush1.msra.mxu0 0.0
        %4846 = vmatprep.subr.mxu0 0.0
        %4847 = vmatpush1.msra.mxu0 0.0
        %4848 = vmatprep.subr.mxu0 0.0
        %4849 = vmatpush1.msra.mxu0 0.0
        %4850 = vmatprep.mubr.f32.mxu0 0.0
        %v4851 = vand.u32 %v4313, 4294901760
        %4852 = vmatmul.mubr.f32.gmra.mrb[0].mxu0 %v4851
        %v4853 = vpop.f32.mrb[0].mxu0
        %v4854 = vadd.f32 %v4774, %v4853
        %v4855 = vpop.f32.mrb[0].mxu0
        %v4856 = vadd.f32 %v4776, %v4855
        %4857 = vdwg.mxu0
        %v4860 = vcombine.low %v4854, %v4856
        %v4862 = vunpack.c.l.s4 1966171168
        %v4863 = vunpack.c.0.s8 %v4862
        %v4864 = vlaneseq
        %v4865 = vshrl.u32 %v4864, 7
        %v4866 = vsub.s32 %v4863, %v4865
        %v4867 = vrot.slane %v4860, %v4866
        %v4869 = vunpack.c.l.s4 1966171168
        %v4870 = vunpack.c.0.s8 %v4869
        %v4871 = vlaneseq
        %v4872 = vshrl.u32 %v4871, 7
        %v4873 = vsub.s32 %v4870, %v4872
        %v4874 = vrot.slane %v4867, %v4873
        %v4876 = vlaneseq
        %vm4877 = vcmp.ge.s32.totalorder %v4876, 0
        %vm4878 = vcmp.lt.s32.totalorder %v4876, 256
        %vm4879 = vmand %vm4877, %vm4878
        %4880 = vst.msk [vmem:[%s218] sm:$0x3] %vm4879, %v4874
        %s4881 = sand.u32 %s137, 1
        %s4882 = scalar_lea.sflag [#allocation3], %s4881
        %s4883 = sand.u32 %s137, 1
        %s4884 = smul.addr %s4883, 2
        %s4885 = scalar_lea.vmem [#allocation2], %s4884
        // Predicated region
        $region41: #{tpu_custom_call.1} parent=39 // pred_check
          %p4886 = pneg %p147
        $region42: #{tpu_custom_call.1} parent=39 // pred_check_branch
          %4888 = sbr.rel (%p4886) target = $region44
        $region43: #{tpu_custom_call.1} parent=39 // pred_region
          %s4889 = smul.u32 2, %s19
          %s4891 = ssub.s32 32, 32
          %4892 = vsyncadd %s4882, %s4891
          %s4893 = smul.addr %s4889, 16
          %s4894 = scalar_lea.hbm %s5, %s4893
          %s4896 = sshll.u32 %s4885, 4
          %s4897 = int_to_ptr.vmem [resolvable:$true] %s4896
          %4899 = dma.vmem_to_hbm [thread:$0]  %s4897, 32, %s4894, %s4882
        $region44: #{tpu_custom_call.1} parent=39 // pred_fallthru
          _
      $region40: #{tpu_custom_call.1} parent=5 // pred_fallthru
        _
      %p4900 = scmp.le.s32.totalorder 2, %s14
      // Predicated region
      $region45: #{tpu_custom_call.1} parent=5 // pred_check
        %p4901 = pneg %p4900
      $region46: #{tpu_custom_call.1} parent=5 // pred_check_branch
        %4903 = sbr.rel (%p4901) target = $region48
      $region47: #{tpu_custom_call.1} parent=5 // pred_region
        %s4904 = ssub.s32 %s14, 2
        // Predicated region
        $region49: #{tpu_custom_call.1} parent=47 // pred_check
          %p4905 = pneg %p153
        $region50: #{tpu_custom_call.1} parent=47 // pred_check_branch
          %4907 = sbr.rel (%p4905) target = $region52
        $region51: #{tpu_custom_call.1} parent=47 // pred_region
          %s4908 = sand.u32 %s138, 1
          %s4909 = scalar_lea.sflag [#allocation3], %s4908
          %s4910 = sand.u32 %s138, 1
          %s4911 = smul.addr %s4910, 2
          %s4912 = scalar_lea.vmem [#allocation2], %s4911
          %4913 = dma.done %s4909, 32
        $region52: #{tpu_custom_call.1} parent=47 // pred_fallthru
          _
      $region48: #{tpu_custom_call.1} parent=5 // pred_fallthru
        _
    $region6: #{tpu_custom_call.1} parent=1 // loop_footer
      %s18 = sadd.s32 1, %s14
    $region7: #{tpu_custom_call.1} parent=1 // loop_footer_branch
      %13 = sbr.rel target = $region3
    $region8: #{tpu_custom_call.1} parent=1 // loop_exit
      _
    %4914 = vsyncpa [#allocation3], 1
    %s4915 = scalar_lea.sflag [#allocation3], 1
    %4916 = vsyncpa %s4915, 1

</llo_original>
